<compile_context>
chip_gen: v7x
topology: tpu7x:2x2x1
jax: 0.10.0
libtpu: 0.0.40
codegen_flags: <defaults>
</compile_context>

<pallas_src>
import jax
import jax.numpy as jnp
from jax.experimental import pallas as pl
from jax.experimental.pallas import tpu as pltpu

K = 5  # conv kernel size of both convs (stride 1, VALID padding)


def _fused_conv_kernel(xc_ref, w1_ref, b1_ref, w2_ref, b2_ref, o_ref, h1_ref, cols_ref):
    # Single invocation, whole batch:
    #   xc_ref  : (N*H1*W1, K*K)     f32  im2col of the input (Cin = 1)
    #   w1_ref  : (K*K, C1)          f32
    #   b1_ref  : (1, C1)            f32
    #   w2_ref  : (K*K*C1, C2)       f32  rows ordered (kh, kw, c)
    #   b2_ref  : (1, C2)            f32
    #   o_ref   : (N*H2*W2, C2)      f32
    #   h1_ref  : (N, H1, W1, C1)    f32  VMEM scratch: relu(conv1) activations
    #   cols_ref: (N*H2*W2, K*K*C1)  f32  VMEM scratch: conv2 im2col slab
    N, H1, W1, C1 = h1_ref.shape
    M2, C2 = o_ref.shape
    H2, W2 = H1 - K + 1, W1 - K + 1

    # ---- conv1 + ReLU: one MXU GEMM over the K*K tap contraction ----
    h1 = jnp.dot(xc_ref[...], w1_ref[...], preferred_element_type=jnp.float32)
    h1 = jnp.maximum(h1 + b1_ref[...], 0.0)             # (N*H1*W1, C1)
    h1_ref[...] = h1.reshape(N, H1, W1, C1)             # leading-dim split only

    # ---- conv2 im2col: 25 window copies into the (M2, K*K*C1) slab ----
    for kh in range(K):
        for kw in range(K):
            tap = kh * K + kw
            patch = h1_ref[:, kh:kh + H2, kw:kw + W2, :]            # (N, H2, W2, C1)
            cols_ref[:, tap * C1:(tap + 1) * C1] = patch.reshape(M2, C1)

    # ---- conv2 + ReLU: one long-contraction MXU GEMM ----
    out = jnp.dot(cols_ref[...], w2_ref[...], preferred_element_type=jnp.float32)
    o_ref[...] = jnp.maximum(out + b2_ref[...], 0.0)


@jax.jit
def model_forward(x_nchw, w1, b1, w2, b2):
    """x_nchw: (N,1,H,W); w1: (C1,1,K,K); b1: (C1,); w2: (C2,C1,K,K); b2: (C2,).
    Returns (N, C2, H2, W2) float32, matching the PyTorch module."""
    N, cin, H, W = x_nchw.shape
    assert cin == 1
    C1, C2 = w1.shape[0], w2.shape[0]
    H1, W1 = H - K + 1, W - K + 1
    H2, W2 = H1 - K + 1, W1 - K + 1
    M1, M2 = N * H1 * W1, N * H2 * W2

    x = x_nchw[:, 0, :, :].astype(jnp.float32)                     # (N, H, W)

    # Input im2col (tiny) and weight flattening done once by XLA inside this jit.
    taps = [x[:, kh:kh + H1, kw:kw + W1] for kh in range(K) for kw in range(K)]
    x_cols = jnp.stack(taps, axis=-1).reshape(M1, K * K)           # (M1, 25)

    w1_flat = jnp.transpose(w1.reshape(C1, K * K), (1, 0)).astype(jnp.float32)      # (25, C1)
    w2_flat = jnp.transpose(w2, (2, 3, 1, 0)).reshape(K * K * C1, C2).astype(jnp.float32)
    b1_2d = b1.reshape(1, C1).astype(jnp.float32)
    b2_2d = b2.reshape(1, C2).astype(jnp.float32)

    out_mc = pl.pallas_call(
        _fused_conv_kernel,
        out_shape=jax.ShapeDtypeStruct((M2, C2), jnp.float32),
        grid_spec=pltpu.PrefetchScalarGridSpec(
            num_scalar_prefetch=0,
            grid=(1,),
            in_specs=[
                pl.BlockSpec((M1, K * K), lambda i: (0, 0)),
                pl.BlockSpec((K * K, C1), lambda i: (0, 0)),
                pl.BlockSpec((1, C1), lambda i: (0, 0)),
                pl.BlockSpec((K * K * C1, C2), lambda i: (0, 0)),
                pl.BlockSpec((1, C2), lambda i: (0, 0)),
            ],
            out_specs=pl.BlockSpec((M2, C2), lambda i: (0, 0)),
            scratch_shapes=[
                pltpu.VMEM((N, H1, W1, C1), jnp.float32),
                pltpu.VMEM((M2, K * K * C1), jnp.float32),
            ],
        ),
        compiler_params=pltpu.CompilerParams(
            dimension_semantics=("arbitrary",)),
    )(x_cols, w1_flat, b1_2d, w2_flat, b2_2d)

    # (N*H2*W2, C2) -> (N, C2, H2, W2); tiny (<=10 KiB) permute handled by XLA.
    return jnp.transpose(out_mc.reshape(N, H2, W2, C2), (0, 3, 1, 2))


def _reference(x_nchw, w1, b1, w2, b2):
    """Pure-JAX reference of the PyTorch forward (silent correctness check)."""
    dn = ('NCHW', 'OIHW', 'NCHW')
    y = jax.lax.conv_general_dilated(x_nchw, w1, (1, 1), 'VALID', dimension_numbers=dn)
    y = jnp.maximum(y + b1[None, :, None, None], 0.0)
    y = jax.lax.conv_general_dilated(y, w2, (1, 1), 'VALID', dimension_numbers=dn)
    return jnp.maximum(y + b2[None, :, None, None], 0.0)


if __name__ == "__main__":
    key = jax.random.PRNGKey(0)
    k1, k2, k3, k4, k5 = jax.random.split(key, 5)

    N, H, W = 2, 16, 16
    C1, C2 = 20, 20

    x = jax.random.normal(k1, (N, 1, H, W), dtype=jnp.float32)

    # Deterministic params, torch Conv2d-style init: U(-1/sqrt(fan_in), 1/sqrt(fan_in)).
    bound1 = 1.0 / float((1 * K * K) ** 0.5)
    w1 = jax.random.uniform(k2, (C1, 1, K, K), jnp.float32, -bound1, bound1)
    b1 = jax.random.uniform(k3, (C1,), jnp.float32, -bound1, bound1)
    bound2 = 1.0 / float((C1 * K * K) ** 0.5)
    w2 = jax.random.uniform(k4, (C2, C1, K, K), jnp.float32, -bound2, bound2)
    b2 = jax.random.uniform(k5, (C2,), jnp.float32, -bound2, bound2)

    out = model_forward(x, w1, b1, w2, b2)
    out = jax.block_until_ready(out)

    assert out.shape == (N, C2, H - 2 * (K - 1), W - 2 * (K - 1))  # (2, 20, 8, 8)
    ref = _reference(x, w1, b1, w2, b2)
    assert jnp.allclose(out, ref, atol=1e-4, rtol=1e-4)

    print("KERNEL_OK")
</pallas_src>

<mosaic_0001>
module attributes {stable_mosaic.version = 11 : i64} {
  func.func @_fused_conv_kernel(%arg0: i32, %arg1: memref<288x25xf32, #tpu.memory_space<vmem>>, %arg2: memref<25x20xf32, #tpu.memory_space<vmem>>, %arg3: memref<1x20xf32, #tpu.memory_space<vmem>>, %arg4: memref<500x20xf32, #tpu.memory_space<vmem>>, %arg5: memref<1x20xf32, #tpu.memory_space<vmem>>, %arg6: memref<128x20xf32, #tpu.memory_space<vmem>>, %arg7: memref<2x12x12x20xf32, #tpu.memory_space<vmem>>, %arg8: memref<128x500xf32, #tpu.memory_space<vmem>>) attributes {dimension_semantics = [#tpu.dimension_semantics<arbitrary>], iteration_bounds = array<i64: 1>, scalar_prefetch = 0 : i64, scratch_operands = 2 : i64, tpu.core_type = #tpu.core_type<tc>, window_params = [{pipeline_mode = #tpu.pipeline_mode<synchronous>, transform_indices = @transform_0, window_bounds = array<i64: 288, 25>}, {pipeline_mode = #tpu.pipeline_mode<synchronous>, transform_indices = @transform_1, window_bounds = array<i64: 25, 20>}, {pipeline_mode = #tpu.pipeline_mode<synchronous>, transform_indices = @transform_2, window_bounds = array<i64: 1, 20>}, {pipeline_mode = #tpu.pipeline_mode<synchronous>, transform_indices = @transform_3, window_bounds = array<i64: 500, 20>}, {pipeline_mode = #tpu.pipeline_mode<synchronous>, transform_indices = @transform_4, window_bounds = array<i64: 1, 20>}, {pipeline_mode = #tpu.pipeline_mode<synchronous>, transform_indices = @transform_5, window_bounds = array<i64: 128, 20>}]} {
    %c0 = arith.constant 0 : index
    %c0_0 = arith.constant 0 : index
    %0 = vector.load %arg1[%c0, %c0_0] : memref<288x25xf32, #tpu.memory_space<vmem>>, vector<288x25xf32>
    %c0_1 = arith.constant 0 : index
    %c0_2 = arith.constant 0 : index
    %1 = vector.load %arg2[%c0_1, %c0_2] : memref<25x20xf32, #tpu.memory_space<vmem>>, vector<25x20xf32>
    %cst = arith.constant dense<0.000000e+00> : vector<288x20xf32>
    %2 = tpu.matmul %0, %1, %cst {dimension_numbers = #tpu.dot_dimension_numbers<[1], [0], [0], [1], [0, 0, 1, 1], [], []>} : vector<288x25xf32>, vector<25x20xf32>, vector<288x20xf32> -> vector<288x20xf32>
    %c0_3 = arith.constant 0 : index
    %c0_4 = arith.constant 0 : index
    %3 = vector.load %arg3[%c0_3, %c0_4] : memref<1x20xf32, #tpu.memory_space<vmem>>, vector<1x20xf32>
    %4 = vector.broadcast %3 : vector<1x20xf32> to vector<288x20xf32>
    %5 = arith.addf %2, %4 : vector<288x20xf32>
    %cst_5 = arith.constant 0.000000e+00 : f32
    %6 = vector.broadcast %cst_5 : f32 to vector<288x20xf32>
    %7 = arith.maximumf %5, %6 : vector<288x20xf32>
    %8 = vector.shape_cast %7 : vector<288x20xf32> to vector<2x12x12x20xf32>
    %c0_6 = arith.constant 0 : index
    %c0_7 = arith.constant 0 : index
    %c0_8 = arith.constant 0 : index
    %c0_9 = arith.constant 0 : index
    %9 = vector.load %arg7[%c0_6, %c0_7, %c0_8, %c0_9] : memref<2x12x12x20xf32, #tpu.memory_space<vmem>>, vector<2x12x12x20xf32>
    tpu.vector_store %arg7[%c0_6, %c0_7, %c0_8, %c0_9], %8 {strides = array<i32>} : memref<2x12x12x20xf32, #tpu.memory_space<vmem>>, vector<2x12x12x20xf32>,
    %c0_10 = arith.constant 0 : index
    %c0_11 = arith.constant 0 : index
    %c0_12 = arith.constant 0 : index
    %c0_13 = arith.constant 0 : index
    %10 = vector.load %arg7[%c0_10, %c0_11, %c0_12, %c0_13] : memref<2x12x12x20xf32, #tpu.memory_space<vmem>>, vector<2x8x8x20xf32>
    %11 = vector.shape_cast %10 : vector<2x8x8x20xf32> to vector<128x20xf32>
    %c0_14 = arith.constant 0 : index
    %c0_15 = arith.constant 0 : index
    %12 = vector.load %arg8[%c0_14, %c0_15] : memref<128x500xf32, #tpu.memory_space<vmem>>, vector<128x20xf32>
    tpu.vector_store %arg8[%c0_14, %c0_15], %11 {strides = array<i32>} : memref<128x500xf32, #tpu.memory_space<vmem>>, vector<128x20xf32>,
    %c0_16 = arith.constant 0 : index
    %c0_17 = arith.constant 0 : index
    %c1 = arith.constant 1 : index
    %c0_18 = arith.constant 0 : index
    %13 = vector.load %arg7[%c0_16, %c0_17, %c1, %c0_18] : memref<2x12x12x20xf32, #tpu.memory_space<vmem>>, vector<2x8x8x20xf32>
    %14 = vector.shape_cast %13 : vector<2x8x8x20xf32> to vector<128x20xf32>
    %c0_19 = arith.constant 0 : index
    %c20 = arith.constant 20 : index
    %15 = vector.load %arg8[%c0_19, %c20] : memref<128x500xf32, #tpu.memory_space<vmem>>, vector<128x20xf32>
    tpu.vector_store %arg8[%c0_19, %c20], %14 {strides = array<i32>} : memref<128x500xf32, #tpu.memory_space<vmem>>, vector<128x20xf32>,
    %c0_20 = arith.constant 0 : index
    %c0_21 = arith.constant 0 : index
    %c2 = arith.constant 2 : index
    %c0_22 = arith.constant 0 : index
    %16 = vector.load %arg7[%c0_20, %c0_21, %c2, %c0_22] : memref<2x12x12x20xf32, #tpu.memory_space<vmem>>, vector<2x8x8x20xf32>
    %17 = vector.shape_cast %16 : vector<2x8x8x20xf32> to vector<128x20xf32>
    %c0_23 = arith.constant 0 : index
    %c40 = arith.constant 40 : index
    %18 = vector.load %arg8[%c0_23, %c40] : memref<128x500xf32, #tpu.memory_space<vmem>>, vector<128x20xf32>
    tpu.vector_store %arg8[%c0_23, %c40], %17 {strides = array<i32>} : memref<128x500xf32, #tpu.memory_space<vmem>>, vector<128x20xf32>,
    %c0_24 = arith.constant 0 : index
    %c0_25 = arith.constant 0 : index
    %c3 = arith.constant 3 : index
    %c0_26 = arith.constant 0 : index
    %19 = vector.load %arg7[%c0_24, %c0_25, %c3, %c0_26] : memref<2x12x12x20xf32, #tpu.memory_space<vmem>>, vector<2x8x8x20xf32>
    %20 = vector.shape_cast %19 : vector<2x8x8x20xf32> to vector<128x20xf32>
    %c0_27 = arith.constant 0 : index
    %c60 = arith.constant 60 : index
    %21 = vector.load %arg8[%c0_27, %c60] : memref<128x500xf32, #tpu.memory_space<vmem>>, vector<128x20xf32>
    tpu.vector_store %arg8[%c0_27, %c60], %20 {strides = array<i32>} : memref<128x500xf32, #tpu.memory_space<vmem>>, vector<128x20xf32>,
    %c0_28 = arith.constant 0 : index
    %c0_29 = arith.constant 0 : index
    %c4 = arith.constant 4 : index
    %c0_30 = arith.constant 0 : index
    %22 = vector.load %arg7[%c0_28, %c0_29, %c4, %c0_30] : memref<2x12x12x20xf32, #tpu.memory_space<vmem>>, vector<2x8x8x20xf32>
    %23 = vector.shape_cast %22 : vector<2x8x8x20xf32> to vector<128x20xf32>
    %c0_31 = arith.constant 0 : index
    %c80 = arith.constant 80 : index
    %24 = vector.load %arg8[%c0_31, %c80] : memref<128x500xf32, #tpu.memory_space<vmem>>, vector<128x20xf32>
    tpu.vector_store %arg8[%c0_31, %c80], %23 {strides = array<i32>} : memref<128x500xf32, #tpu.memory_space<vmem>>, vector<128x20xf32>,
    %c0_32 = arith.constant 0 : index
    %c1_33 = arith.constant 1 : index
    %c0_34 = arith.constant 0 : index
    %c0_35 = arith.constant 0 : index
    %25 = vector.load %arg7[%c0_32, %c1_33, %c0_34, %c0_35] : memref<2x12x12x20xf32, #tpu.memory_space<vmem>>, vector<2x8x8x20xf32>
    %26 = vector.shape_cast %25 : vector<2x8x8x20xf32> to vector<128x20xf32>
    %c0_36 = arith.constant 0 : index
    %c100 = arith.constant 100 : index
    %27 = vector.load %arg8[%c0_36, %c100] : memref<128x500xf32, #tpu.memory_space<vmem>>, vector<128x20xf32>
    tpu.vector_store %arg8[%c0_36, %c100], %26 {strides = array<i32>} : memref<128x500xf32, #tpu.memory_space<vmem>>, vector<128x20xf32>,
    %c0_37 = arith.constant 0 : index
    %c1_38 = arith.constant 1 : index
    %c1_39 = arith.constant 1 : index
    %c0_40 = arith.constant 0 : index
    %28 = vector.load %arg7[%c0_37, %c1_38, %c1_39, %c0_40] : memref<2x12x12x20xf32, #tpu.memory_space<vmem>>, vector<2x8x8x20xf32>
    %29 = vector.shape_cast %28 : vector<2x8x8x20xf32> to vector<128x20xf32>
    %c0_41 = arith.constant 0 : index
    %c120 = arith.constant 120 : index
    %30 = vector.load %arg8[%c0_41, %c120] : memref<128x500xf32, #tpu.memory_space<vmem>>, vector<128x20xf32>
    tpu.vector_store %arg8[%c0_41, %c120], %29 {strides = array<i32>} : memref<128x500xf32, #tpu.memory_space<vmem>>, vector<128x20xf32>,
    %c0_42 = arith.constant 0 : index
    %c1_43 = arith.constant 1 : index
    %c2_44 = arith.constant 2 : index
    %c0_45 = arith.constant 0 : index
    %31 = vector.load %arg7[%c0_42, %c1_43, %c2_44, %c0_45] : memref<2x12x12x20xf32, #tpu.memory_space<vmem>>, vector<2x8x8x20xf32>
    %32 = vector.shape_cast %31 : vector<2x8x8x20xf32> to vector<128x20xf32>
    %c0_46 = arith.constant 0 : index
    %c140 = arith.constant 140 : index
    %33 = vector.load %arg8[%c0_46, %c140] : memref<128x500xf32, #tpu.memory_space<vmem>>, vector<128x20xf32>
    tpu.vector_store %arg8[%c0_46, %c140], %32 {strides = array<i32>} : memref<128x500xf32, #tpu.memory_space<vmem>>, vector<128x20xf32>,
    %c0_47 = arith.constant 0 : index
    %c1_48 = arith.constant 1 : index
    %c3_49 = arith.constant 3 : index
    %c0_50 = arith.constant 0 : index
    %34 = vector.load %arg7[%c0_47, %c1_48, %c3_49, %c0_50] : memref<2x12x12x20xf32, #tpu.memory_space<vmem>>, vector<2x8x8x20xf32>
    %35 = vector.shape_cast %34 : vector<2x8x8x20xf32> to vector<128x20xf32>
    %c0_51 = arith.constant 0 : index
    %c160 = arith.constant 160 : index
    %36 = vector.load %arg8[%c0_51, %c160] : memref<128x500xf32, #tpu.memory_space<vmem>>, vector<128x20xf32>
    tpu.vector_store %arg8[%c0_51, %c160], %35 {strides = array<i32>} : memref<128x500xf32, #tpu.memory_space<vmem>>, vector<128x20xf32>,
    %c0_52 = arith.constant 0 : index
    %c1_53 = arith.constant 1 : index
    %c4_54 = arith.constant 4 : index
    %c0_55 = arith.constant 0 : index
    %37 = vector.load %arg7[%c0_52, %c1_53, %c4_54, %c0_55] : memref<2x12x12x20xf32, #tpu.memory_space<vmem>>, vector<2x8x8x20xf32>
    %38 = vector.shape_cast %37 : vector<2x8x8x20xf32> to vector<128x20xf32>
    %c0_56 = arith.constant 0 : index
    %c180 = arith.constant 180 : index
    %39 = vector.load %arg8[%c0_56, %c180] : memref<128x500xf32, #tpu.memory_space<vmem>>, vector<128x20xf32>
    tpu.vector_store %arg8[%c0_56, %c180], %38 {strides = array<i32>} : memref<128x500xf32, #tpu.memory_space<vmem>>, vector<128x20xf32>,
    %c0_57 = arith.constant 0 : index
    %c2_58 = arith.constant 2 : index
    %c0_59 = arith.constant 0 : index
    %c0_60 = arith.constant 0 : index
    %40 = vector.load %arg7[%c0_57, %c2_58, %c0_59, %c0_60] : memref<2x12x12x20xf32, #tpu.memory_space<vmem>>, vector<2x8x8x20xf32>
    %41 = vector.shape_cast %40 : vector<2x8x8x20xf32> to vector<128x20xf32>
    %c0_61 = arith.constant 0 : index
    %c200 = arith.constant 200 : index
    %42 = vector.load %arg8[%c0_61, %c200] : memref<128x500xf32, #tpu.memory_space<vmem>>, vector<128x20xf32>
    tpu.vector_store %arg8[%c0_61, %c200], %41 {strides = array<i32>} : memref<128x500xf32, #tpu.memory_space<vmem>>, vector<128x20xf32>,
    %c0_62 = arith.constant 0 : index
    %c2_63 = arith.constant 2 : index
    %c1_64 = arith.constant 1 : index
    %c0_65 = arith.constant 0 : index
    %43 = vector.load %arg7[%c0_62, %c2_63, %c1_64, %c0_65] : memref<2x12x12x20xf32, #tpu.memory_space<vmem>>, vector<2x8x8x20xf32>
    %44 = vector.shape_cast %43 : vector<2x8x8x20xf32> to vector<128x20xf32>
    %c0_66 = arith.constant 0 : index
    %c220 = arith.constant 220 : index
    %45 = vector.load %arg8[%c0_66, %c220] : memref<128x500xf32, #tpu.memory_space<vmem>>, vector<128x20xf32>
    tpu.vector_store %arg8[%c0_66, %c220], %44 {strides = array<i32>} : memref<128x500xf32, #tpu.memory_space<vmem>>, vector<128x20xf32>,
    %c0_67 = arith.constant 0 : index
    %c2_68 = arith.constant 2 : index
    %c2_69 = arith.constant 2 : index
    %c0_70 = arith.constant 0 : index
    %46 = vector.load %arg7[%c0_67, %c2_68, %c2_69, %c0_70] : memref<2x12x12x20xf32, #tpu.memory_space<vmem>>, vector<2x8x8x20xf32>
    %47 = vector.shape_cast %46 : vector<2x8x8x20xf32> to vector<128x20xf32>
    %c0_71 = arith.constant 0 : index
    %c240 = arith.constant 240 : index
    %48 = vector.load %arg8[%c0_71, %c240] : memref<128x500xf32, #tpu.memory_space<vmem>>, vector<128x20xf32>
    tpu.vector_store %arg8[%c0_71, %c240], %47 {strides = array<i32>} : memref<128x500xf32, #tpu.memory_space<vmem>>, vector<128x20xf32>,
    %c0_72 = arith.constant 0 : index
    %c2_73 = arith.constant 2 : index
    %c3_74 = arith.constant 3 : index
    %c0_75 = arith.constant 0 : index
    %49 = vector.load %arg7[%c0_72, %c2_73, %c3_74, %c0_75] : memref<2x12x12x20xf32, #tpu.memory_space<vmem>>, vector<2x8x8x20xf32>
    %50 = vector.shape_cast %49 : vector<2x8x8x20xf32> to vector<128x20xf32>
    %c0_76 = arith.constant 0 : index
    %c260 = arith.constant 260 : index
    %51 = vector.load %arg8[%c0_76, %c260] : memref<128x500xf32, #tpu.memory_space<vmem>>, vector<128x20xf32>
    tpu.vector_store %arg8[%c0_76, %c260], %50 {strides = array<i32>} : memref<128x500xf32, #tpu.memory_space<vmem>>, vector<128x20xf32>,
    %c0_77 = arith.constant 0 : index
    %c2_78 = arith.constant 2 : index
    %c4_79 = arith.constant 4 : index
    %c0_80 = arith.constant 0 : index
    %52 = vector.load %arg7[%c0_77, %c2_78, %c4_79, %c0_80] : memref<2x12x12x20xf32, #tpu.memory_space<vmem>>, vector<2x8x8x20xf32>
    %53 = vector.shape_cast %52 : vector<2x8x8x20xf32> to vector<128x20xf32>
    %c0_81 = arith.constant 0 : index
    %c280 = arith.constant 280 : index
    %54 = vector.load %arg8[%c0_81, %c280] : memref<128x500xf32, #tpu.memory_space<vmem>>, vector<128x20xf32>
    tpu.vector_store %arg8[%c0_81, %c280], %53 {strides = array<i32>} : memref<128x500xf32, #tpu.memory_space<vmem>>, vector<128x20xf32>,
    %c0_82 = arith.constant 0 : index
    %c3_83 = arith.constant 3 : index
    %c0_84 = arith.constant 0 : index
    %c0_85 = arith.constant 0 : index
    %55 = vector.load %arg7[%c0_82, %c3_83, %c0_84, %c0_85] : memref<2x12x12x20xf32, #tpu.memory_space<vmem>>, vector<2x8x8x20xf32>
    %56 = vector.shape_cast %55 : vector<2x8x8x20xf32> to vector<128x20xf32>
    %c0_86 = arith.constant 0 : index
    %c300 = arith.constant 300 : index
    %57 = vector.load %arg8[%c0_86, %c300] : memref<128x500xf32, #tpu.memory_space<vmem>>, vector<128x20xf32>
    tpu.vector_store %arg8[%c0_86, %c300], %56 {strides = array<i32>} : memref<128x500xf32, #tpu.memory_space<vmem>>, vector<128x20xf32>,
    %c0_87 = arith.constant 0 : index
    %c3_88 = arith.constant 3 : index
    %c1_89 = arith.constant 1 : index
    %c0_90 = arith.constant 0 : index
    %58 = vector.load %arg7[%c0_87, %c3_88, %c1_89, %c0_90] : memref<2x12x12x20xf32, #tpu.memory_space<vmem>>, vector<2x8x8x20xf32>
    %59 = vector.shape_cast %58 : vector<2x8x8x20xf32> to vector<128x20xf32>
    %c0_91 = arith.constant 0 : index
    %c320 = arith.constant 320 : index
    %60 = vector.load %arg8[%c0_91, %c320] : memref<128x500xf32, #tpu.memory_space<vmem>>, vector<128x20xf32>
    tpu.vector_store %arg8[%c0_91, %c320], %59 {strides = array<i32>} : memref<128x500xf32, #tpu.memory_space<vmem>>, vector<128x20xf32>,
    %c0_92 = arith.constant 0 : index
    %c3_93 = arith.constant 3 : index
    %c2_94 = arith.constant 2 : index
    %c0_95 = arith.constant 0 : index
    %61 = vector.load %arg7[%c0_92, %c3_93, %c2_94, %c0_95] : memref<2x12x12x20xf32, #tpu.memory_space<vmem>>, vector<2x8x8x20xf32>
    %62 = vector.shape_cast %61 : vector<2x8x8x20xf32> to vector<128x20xf32>
    %c0_96 = arith.constant 0 : index
    %c340 = arith.constant 340 : index
    %63 = vector.load %arg8[%c0_96, %c340] : memref<128x500xf32, #tpu.memory_space<vmem>>, vector<128x20xf32>
    tpu.vector_store %arg8[%c0_96, %c340], %62 {strides = array<i32>} : memref<128x500xf32, #tpu.memory_space<vmem>>, vector<128x20xf32>,
    %c0_97 = arith.constant 0 : index
    %c3_98 = arith.constant 3 : index
    %c3_99 = arith.constant 3 : index
    %c0_100 = arith.constant 0 : index
    %64 = vector.load %arg7[%c0_97, %c3_98, %c3_99, %c0_100] : memref<2x12x12x20xf32, #tpu.memory_space<vmem>>, vector<2x8x8x20xf32>
    %65 = vector.shape_cast %64 : vector<2x8x8x20xf32> to vector<128x20xf32>
    %c0_101 = arith.constant 0 : index
    %c360 = arith.constant 360 : index
    %66 = vector.load %arg8[%c0_101, %c360] : memref<128x500xf32, #tpu.memory_space<vmem>>, vector<128x20xf32>
    tpu.vector_store %arg8[%c0_101, %c360], %65 {strides = array<i32>} : memref<128x500xf32, #tpu.memory_space<vmem>>, vector<128x20xf32>,
    %c0_102 = arith.constant 0 : index
    %c3_103 = arith.constant 3 : index
    %c4_104 = arith.constant 4 : index
    %c0_105 = arith.constant 0 : index
    %67 = vector.load %arg7[%c0_102, %c3_103, %c4_104, %c0_105] : memref<2x12x12x20xf32, #tpu.memory_space<vmem>>, vector<2x8x8x20xf32>
    %68 = vector.shape_cast %67 : vector<2x8x8x20xf32> to vector<128x20xf32>
    %c0_106 = arith.constant 0 : index
    %c380 = arith.constant 380 : index
    %69 = vector.load %arg8[%c0_106, %c380] : memref<128x500xf32, #tpu.memory_space<vmem>>, vector<128x20xf32>
    tpu.vector_store %arg8[%c0_106, %c380], %68 {strides = array<i32>} : memref<128x500xf32, #tpu.memory_space<vmem>>, vector<128x20xf32>,
    %c0_107 = arith.constant 0 : index
    %c4_108 = arith.constant 4 : index
    %c0_109 = arith.constant 0 : index
    %c0_110 = arith.constant 0 : index
    %70 = vector.load %arg7[%c0_107, %c4_108, %c0_109, %c0_110] : memref<2x12x12x20xf32, #tpu.memory_space<vmem>>, vector<2x8x8x20xf32>
    %71 = vector.shape_cast %70 : vector<2x8x8x20xf32> to vector<128x20xf32>
    %c0_111 = arith.constant 0 : index
    %c400 = arith.constant 400 : index
    %72 = vector.load %arg8[%c0_111, %c400] : memref<128x500xf32, #tpu.memory_space<vmem>>, vector<128x20xf32>
    tpu.vector_store %arg8[%c0_111, %c400], %71 {strides = array<i32>} : memref<128x500xf32, #tpu.memory_space<vmem>>, vector<128x20xf32>,
    %c0_112 = arith.constant 0 : index
    %c4_113 = arith.constant 4 : index
    %c1_114 = arith.constant 1 : index
    %c0_115 = arith.constant 0 : index
    %73 = vector.load %arg7[%c0_112, %c4_113, %c1_114, %c0_115] : memref<2x12x12x20xf32, #tpu.memory_space<vmem>>, vector<2x8x8x20xf32>
    %74 = vector.shape_cast %73 : vector<2x8x8x20xf32> to vector<128x20xf32>
    %c0_116 = arith.constant 0 : index
    %c420 = arith.constant 420 : index
    %75 = vector.load %arg8[%c0_116, %c420] : memref<128x500xf32, #tpu.memory_space<vmem>>, vector<128x20xf32>
    tpu.vector_store %arg8[%c0_116, %c420], %74 {strides = array<i32>} : memref<128x500xf32, #tpu.memory_space<vmem>>, vector<128x20xf32>,
    %c0_117 = arith.constant 0 : index
    %c4_118 = arith.constant 4 : index
    %c2_119 = arith.constant 2 : index
    %c0_120 = arith.constant 0 : index
    %76 = vector.load %arg7[%c0_117, %c4_118, %c2_119, %c0_120] : memref<2x12x12x20xf32, #tpu.memory_space<vmem>>, vector<2x8x8x20xf32>
    %77 = vector.shape_cast %76 : vector<2x8x8x20xf32> to vector<128x20xf32>
    %c0_121 = arith.constant 0 : index
    %c440 = arith.constant 440 : index
    %78 = vector.load %arg8[%c0_121, %c440] : memref<128x500xf32, #tpu.memory_space<vmem>>, vector<128x20xf32>
    tpu.vector_store %arg8[%c0_121, %c440], %77 {strides = array<i32>} : memref<128x500xf32, #tpu.memory_space<vmem>>, vector<128x20xf32>,
    %c0_122 = arith.constant 0 : index
    %c4_123 = arith.constant 4 : index
    %c3_124 = arith.constant 3 : index
    %c0_125 = arith.constant 0 : index
    %79 = vector.load %arg7[%c0_122, %c4_123, %c3_124, %c0_125] : memref<2x12x12x20xf32, #tpu.memory_space<vmem>>, vector<2x8x8x20xf32>
    %80 = vector.shape_cast %79 : vector<2x8x8x20xf32> to vector<128x20xf32>
    %c0_126 = arith.constant 0 : index
    %c460 = arith.constant 460 : index
    %81 = vector.load %arg8[%c0_126, %c460] : memref<128x500xf32, #tpu.memory_space<vmem>>, vector<128x20xf32>
    tpu.vector_store %arg8[%c0_126, %c460], %80 {strides = array<i32>} : memref<128x500xf32, #tpu.memory_space<vmem>>, vector<128x20xf32>,
    %c0_127 = arith.constant 0 : index
    %c4_128 = arith.constant 4 : index
    %c4_129 = arith.constant 4 : index
    %c0_130 = arith.constant 0 : index
    %82 = vector.load %arg7[%c0_127, %c4_128, %c4_129, %c0_130] : memref<2x12x12x20xf32, #tpu.memory_space<vmem>>, vector<2x8x8x20xf32>
    %83 = vector.shape_cast %82 : vector<2x8x8x20xf32> to vector<128x20xf32>
    %c0_131 = arith.constant 0 : index
    %c480 = arith.constant 480 : index
    %84 = vector.load %arg8[%c0_131, %c480] : memref<128x500xf32, #tpu.memory_space<vmem>>, vector<128x20xf32>
    tpu.vector_store %arg8[%c0_131, %c480], %83 {strides = array<i32>} : memref<128x500xf32, #tpu.memory_space<vmem>>, vector<128x20xf32>,
    %c0_132 = arith.constant 0 : index
    %c0_133 = arith.constant 0 : index
    %85 = vector.load %arg8[%c0_132, %c0_133] : memref<128x500xf32, #tpu.memory_space<vmem>>, vector<128x500xf32>
    %c0_134 = arith.constant 0 : index
    %c0_135 = arith.constant 0 : index
    %86 = vector.load %arg4[%c0_134, %c0_135] : memref<500x20xf32, #tpu.memory_space<vmem>>, vector<500x20xf32>
    %cst_136 = arith.constant dense<0.000000e+00> : vector<128x20xf32>
    %87 = tpu.matmul %85, %86, %cst_136 {dimension_numbers = #tpu.dot_dimension_numbers<[1], [0], [0], [1], [0, 0, 1, 1], [], []>} : vector<128x500xf32>, vector<500x20xf32>, vector<128x20xf32> -> vector<128x20xf32>
    %c0_137 = arith.constant 0 : index
    %c0_138 = arith.constant 0 : index
    %88 = vector.load %arg5[%c0_137, %c0_138] : memref<1x20xf32, #tpu.memory_space<vmem>>, vector<1x20xf32>
    %89 = vector.broadcast %88 : vector<1x20xf32> to vector<128x20xf32>
    %90 = arith.addf %87, %89 : vector<128x20xf32>
    %cst_139 = arith.constant 0.000000e+00 : f32
    %91 = vector.broadcast %cst_139 : f32 to vector<128x20xf32>
    %92 = arith.maximumf %90, %91 : vector<128x20xf32>
    %c0_140 = arith.constant 0 : index
    %c0_141 = arith.constant 0 : index
    %93 = vector.load %arg6[%c0_140, %c0_141] : memref<128x20xf32, #tpu.memory_space<vmem>>, vector<128x20xf32>
    tpu.vector_store %arg6[%c0_140, %c0_141], %92 {strides = array<i32>} : memref<128x20xf32, #tpu.memory_space<vmem>>, vector<128x20xf32>,
    return
  }
  func.func @transform_0(%arg0: i32) -> (i32, i32) {
    %c0_i32 = arith.constant 0 : i32
    %c0_i32_0 = arith.constant 0 : i32
    %c0_i32_1 = arith.constant 0 : i32
    return %c0_i32, %c0_i32_0 : i32, i32
  }
  func.func @transform_1(%arg0: i32) -> (i32, i32) {
    %c0_i32 = arith.constant 0 : i32
    %c0_i32_0 = arith.constant 0 : i32
    %c0_i32_1 = arith.constant 0 : i32
    return %c0_i32, %c0_i32_0 : i32, i32
  }
  func.func @transform_2(%arg0: i32) -> (i32, i32) {
    %c0_i32 = arith.constant 0 : i32
    %c0_i32_0 = arith.constant 0 : i32
    %c0_i32_1 = arith.constant 0 : i32
    return %c0_i32, %c0_i32_0 : i32, i32
  }
  func.func @transform_3(%arg0: i32) -> (i32, i32) {
    %c0_i32 = arith.constant 0 : i32
    %c0_i32_0 = arith.constant 0 : i32
    %c0_i32_1 = arith.constant 0 : i32
    return %c0_i32, %c0_i32_0 : i32, i32
  }
  func.func @transform_4(%arg0: i32) -> (i32, i32) {
    %c0_i32 = arith.constant 0 : i32
    %c0_i32_0 = arith.constant 0 : i32
    %c0_i32_1 = arith.constant 0 : i32
    return %c0_i32, %c0_i32_0 : i32, i32
  }
  func.func @transform_5(%arg0: i32) -> (i32, i32) {
    %c0_i32 = arith.constant 0 : i32
    %c0_i32_0 = arith.constant 0 : i32
    %c0_i32_1 = arith.constant 0 : i32
    return %c0_i32, %c0_i32_0 : i32, i32
  }
}

</mosaic_0001>

<llo_original>
// kernel: model_forward.1
$region0: #{model_forward.1}
  #allocation0 [shape = 'u32[]', space=smem, size = 0x4, offset = 0x4, fixed_abs, tag = 'smem constant byte address 0x4 - core index']
  #allocation1 [shape = 'u32[144,128]{1,0:T(1,128)}', space=vmem, size = 0x12000, scoped, tag = 'internal scratch']
  #allocation2 [shape = 'f32[2,12,12,20]{3,2,1,0:T(8,128)}', space=vmem, size = 0x30000, scoped, tag = 'scratch operand']
  #allocation3 [shape = 'f32[128,500]{1,0:T(8,128)}', space=vmem, size = 0x40000, scoped, tag = 'scratch operand']
  %s0 = inlined_call_operand.vmem [shape: f32[288,25], index: 0, kind: input, shape index: {}]
  %s1 = inlined_call_operand.vmem [shape: f32[25,20], index: 1, kind: input, shape index: {}]
  %s2 = inlined_call_operand.vmem [shape: f32[1,20], index: 2, kind: input, shape index: {}]
  %s3 = inlined_call_operand.vmem [shape: f32[500,20], index: 3, kind: input, shape index: {}]
  %s4 = inlined_call_operand.vmem [shape: f32[1,20], index: 4, kind: input, shape index: {}]
  %s5 = inlined_call_operand.hbm [shape: f32[128,20], index: 5, kind: output, shape index: {}]
  %s6 = sld [smem:[#allocation0]]
  $region30: #{model_forward.1} parent=0
    _
  %s8 = ssub.s32 1, %s6
  %s9 = scalar_select 0, %s8, %s6
  $region1: #{model_forward.1} parent=0
    #allocation4 [shape = 'u8[65536]{0}', space=vmem, size = 0x10000, scoped, tag = 'output window, operand 0, single buffered']
    #allocation5 [shape = 's32[1]{0}', space=sflag, size = 0x4, scoped, tag = 'scoped memory for model_forward.1']
    %10 = vsyncpa [#allocation5], 0
    // Predicated region
    $region2: #{model_forward.1} parent=1 // pred_check
      _
    $region3: #{model_forward.1} parent=1 // pred_check_branch
      %12 = sbr.rel (0) target = $region5
    $region4: #{model_forward.1} parent=1 // pred_region
      _
    $region5: #{model_forward.1} parent=1 // pred_fallthru
      _
    // Predicated region
    $region6: #{model_forward.1} parent=1 // pred_check
      _
    $region7: #{model_forward.1} parent=1 // pred_check_branch
      %14 = sbr.rel (0) target = $region9
    $region8: #{model_forward.1} parent=1 // pred_region
      _
    $region9: #{model_forward.1} parent=1 // pred_fallthru
      _
    // Predicated region
    $region10: #{model_forward.1} parent=1 // pred_check
      _
    $region11: #{model_forward.1} parent=1 // pred_check_branch
      %16 = sbr.rel (0) target = $region13
    $region12: #{model_forward.1} parent=1 // pred_region
      _
    $region13: #{model_forward.1} parent=1 // pred_fallthru
      _
    // Predicated region
    $region14: #{model_forward.1} parent=1 // pred_check
      _
    $region15: #{model_forward.1} parent=1 // pred_check_branch
      %18 = sbr.rel (0) target = $region17
    $region16: #{model_forward.1} parent=1 // pred_region
      _
    $region17: #{model_forward.1} parent=1 // pred_fallthru
      _
    // Predicated region
    $region18: #{model_forward.1} parent=1 // pred_check
      _
    $region19: #{model_forward.1} parent=1 // pred_check_branch
      %20 = sbr.rel (0) target = $region21
    $region20: #{model_forward.1} parent=1 // pred_region
      _
    $region21: #{model_forward.1} parent=1 // pred_fallthru
      _
    %v21 = vld [vmem:[%s0] sm:$0xff]
    %v22 = vld [vmem:[%s0 + $0x8] sm:$0xff]
    %v23 = vld [vmem:[%s0 + $0x10] sm:$0xff]
    %v24 = vld [vmem:[%s0 + $0x18] sm:$0xff]
    %v25 = vld [vmem:[%s0 + $0x20] sm:$0xff]
    %v26 = vld [vmem:[%s0 + $0x28] sm:$0xff]
    %v27 = vld [vmem:[%s0 + $0x30] sm:$0xff]
    %v28 = vld [vmem:[%s0 + $0x38] sm:$0xff]
    %v29 = vld [vmem:[%s0 + $0x40] sm:$0xff]
    %v30 = vld [vmem:[%s0 + $0x48] sm:$0xff]
    %v31 = vld [vmem:[%s0 + $0x50] sm:$0xff]
    %v32 = vld [vmem:[%s0 + $0x58] sm:$0xff]
    %v33 = vld [vmem:[%s0 + $0x60] sm:$0xff]
    %v34 = vld [vmem:[%s0 + $0x68] sm:$0xff]
    %v35 = vld [vmem:[%s0 + $0x70] sm:$0xff]
    %v36 = vld [vmem:[%s0 + $0x78] sm:$0xff]
    %v37 = vld [vmem:[%s0 + $0x80] sm:$0xff]
    %v38 = vld [vmem:[%s0 + $0x88] sm:$0xff]
    %v39 = vld [vmem:[%s0 + $0x90] sm:$0xff]
    %v40 = vld [vmem:[%s0 + $0x98] sm:$0xff]
    %v41 = vld [vmem:[%s0 + $0xa0] sm:$0xff]
    %v42 = vld [vmem:[%s0 + $0xa8] sm:$0xff]
    %v43 = vld [vmem:[%s0 + $0xb0] sm:$0xff]
    %v44 = vld [vmem:[%s0 + $0xb8] sm:$0xff]
    %v45 = vld [vmem:[%s0 + $0xc0] sm:$0xff]
    %v46 = vld [vmem:[%s0 + $0xc8] sm:$0xff]
    %v47 = vld [vmem:[%s0 + $0xd0] sm:$0xff]
    %v48 = vld [vmem:[%s0 + $0xd8] sm:$0xff]
    %v49 = vld [vmem:[%s0 + $0xe0] sm:$0xff]
    %v50 = vld [vmem:[%s0 + $0xe8] sm:$0xff]
    %v51 = vld [vmem:[%s0 + $0xf0] sm:$0xff]
    %v52 = vld [vmem:[%s0 + $0xf8] sm:$0xff]
    %v53 = vld [vmem:[%s0 + $0x100] sm:$0xff]
    %v54 = vld [vmem:[%s0 + $0x108] sm:$0xff]
    %v55 = vld [vmem:[%s0 + $0x110] sm:$0xff]
    %v56 = vld [vmem:[%s0 + $0x118] sm:$0xff]
    %v57 = vld [vmem:[%s1] sm:$0xff]
    %v58 = vld [vmem:[%s1 + $0x8] sm:$0xff]
    %v59 = vld [vmem:[%s1 + $0x10] sm:$0xff]
    %v60 = vld [vmem:[%s1 + $0x18] sm:$0x1]
    %v61 = vld [vmem:[%s2] sm:$0x1]
    %v63 = vlaneseq
    %v64 = vshrl.u32 %v63, 7
    %v65 = vsub.s32 0, %v64
    %v66 = vrot.slane %v61, %v65
    %vm68 = vcmask 203776
    %v70 = vsel %vm68, %v21, 0
    %v73 = vsel %vm68, %v22, 0
    %v76 = vsel %vm68, %v23, 0
    %v79 = vsel %vm68, %v24, 0
    %v82 = vsel %vm68, %v25, 0
    %v85 = vsel %vm68, %v26, 0
    %v88 = vsel %vm68, %v27, 0
    %v91 = vsel %vm68, %v28, 0
    %v94 = vsel %vm68, %v29, 0
    %v97 = vsel %vm68, %v30, 0
    %v100 = vsel %vm68, %v31, 0
    %v103 = vsel %vm68, %v32, 0
    %v106 = vsel %vm68, %v33, 0
    %v109 = vsel %vm68, %v34, 0
    %v112 = vsel %vm68, %v35, 0
    %v115 = vsel %vm68, %v36, 0
    %v118 = vsel %vm68, %v37, 0
    %v121 = vsel %vm68, %v38, 0
    %v124 = vsel %vm68, %v39, 0
    %v127 = vsel %vm68, %v40, 0
    %v130 = vsel %vm68, %v41, 0
    %v133 = vsel %vm68, %v42, 0
    %v136 = vsel %vm68, %v43, 0
    %v139 = vsel %vm68, %v44, 0
    %v142 = vsel %vm68, %v45, 0
    %v145 = vsel %vm68, %v46, 0
    %v148 = vsel %vm68, %v47, 0
    %v151 = vsel %vm68, %v48, 0
    %v154 = vsel %vm68, %v49, 0
    %v157 = vsel %vm68, %v50, 0
    %v160 = vsel %vm68, %v51, 0
    %v163 = vsel %vm68, %v52, 0
    %v166 = vsel %vm68, %v53, 0
    %v169 = vsel %vm68, %v54, 0
    %v172 = vsel %vm68, %v55, 0
    %v175 = vsel %vm68, %v56, 0
    %vm177 = vcmask 1040384
    %v179 = vsel %vm177, %v60, 0
    %181 = vmatprep.subr.mxu0 0.0
    %182 = vmatpush1.msra.mxu0 %v57
    %183 = vmatprep.subr.mxu0 0.0
    %184 = vmatpush1.msra.mxu0 %v58
    %185 = vmatprep.subr.mxu0 0.0
    %186 = vmatpush1.msra.mxu0 %v59
    %187 = vmatprep.subr.mxu0 0.0
    %188 = vmatpush1.msra.mxu0 %v179
    %189 = vmatprep.subr.mxu0 0.0
    %190 = vmatpush1.msra.mxu0 0.0
    %191 = vmatprep.subr.mxu0 0.0
    %192 = vmatpush1.msra.mxu0 0.0
    %193 = vmatprep.subr.mxu0 0.0
    %194 = vmatpush1.msra.mxu0 0.0
    %195 = vmatprep.subr.mxu0 0.0
    %196 = vmatpush1.msra.mxu0 0.0
    %197 = vmatprep.subr.mxu0 0.0
    %198 = vmatpush1.msra.mxu0 0.0
    %199 = vmatprep.subr.mxu0 0.0
    %200 = vmatpush1.msra.mxu0 0.0
    %201 = vmatprep.subr.mxu0 0.0
    %202 = vmatpush1.msra.mxu0 0.0
    %203 = vmatprep.subr.mxu0 0.0
    %204 = vmatpush1.msra.mxu0 0.0
    %205 = vmatprep.subr.mxu0 0.0
    %206 = vmatpush1.msra.mxu0 0.0
    %207 = vmatprep.subr.mxu0 0.0
    %208 = vmatpush1.msra.mxu0 0.0
    %209 = vmatprep.subr.mxu0 0.0
    %210 = vmatpush1.msra.mxu0 0.0
    %211 = vmatprep.subr.mxu0 0.0
    %212 = vmatpush1.msra.mxu0 0.0
    %213 = vmatprep.subr.mxu0 0.0
    %214 = vmatpush1.msra.mxu0 0.0
    %215 = vmatprep.subr.mxu0 0.0
    %216 = vmatpush1.msra.mxu0 0.0
    %217 = vmatprep.subr.mxu0 0.0
    %218 = vmatpush1.msra.mxu0 0.0
    %219 = vmatprep.subr.mxu0 0.0
    %220 = vmatpush1.msra.mxu0 0.0
    %221 = vmatprep.subr.mxu0 0.0
    %222 = vmatpush1.msra.mxu0 0.0
    %223 = vmatprep.subr.mxu0 0.0
    %224 = vmatpush1.msra.mxu0 0.0
    %225 = vmatprep.subr.mxu0 0.0
    %226 = vmatpush1.msra.mxu0 0.0
    %227 = vmatprep.subr.mxu0 0.0
    %228 = vmatpush1.msra.mxu0 0.0
    %229 = vmatprep.subr.mxu0 0.0
    %230 = vmatpush1.msra.mxu0 0.0
    %231 = vmatprep.subr.mxu0 0.0
    %232 = vmatpush1.msra.mxu0 0.0
    %233 = vmatprep.subr.mxu0 0.0
    %234 = vmatpush1.msra.mxu0 0.0
    %235 = vmatprep.subr.mxu0 0.0
    %236 = vmatpush1.msra.mxu0 0.0
    %237 = vmatprep.subr.mxu0 0.0
    %238 = vmatpush1.msra.mxu0 0.0
    %239 = vmatprep.subr.mxu0 0.0
    %240 = vmatpush1.msra.mxu0 0.0
    %241 = vmatprep.subr.mxu0 0.0
    %242 = vmatpush1.msra.mxu0 0.0
    %243 = vmatprep.subr.mxu0 0.0
    %244 = vmatpush1.msra.mxu0 0.0
    %245 = vmatprep.mubr.f32.mxu0 0.0
    %246 = vmatmul.mubr.f32.gmra.mrb[0].mxu0 %v70
    %v247 = vpop.f32.mrb[0].mxu0
    %v248 = vadd.f32 %v66, %v247
    %v249 = vpop.f32.mrb[0].mxu0
    %250 = vmatprep.mubr.f32.mxu0 0.0
    %251 = vmatmul.mubr.f32.gmra.mrb[0].mxu0 %v73
    %v252 = vpop.f32.mrb[0].mxu0
    %v253 = vadd.f32 %v66, %v252
    %v254 = vpop.f32.mrb[0].mxu0
    %255 = vmatprep.mubr.f32.mxu0 0.0
    %256 = vmatmul.mubr.f32.gmra.mrb[0].mxu0 %v76
    %v257 = vpop.f32.mrb[0].mxu0
    %v258 = vadd.f32 %v66, %v257
    %v259 = vpop.f32.mrb[0].mxu0
    %260 = vmatprep.mubr.f32.mxu0 0.0
    %261 = vmatmul.mubr.f32.gmra.mrb[0].mxu0 %v79
    %v262 = vpop.f32.mrb[0].mxu0
    %v263 = vadd.f32 %v66, %v262
    %v264 = vpop.f32.mrb[0].mxu0
    %265 = vmatprep.mubr.f32.mxu0 0.0
    %266 = vmatmul.mubr.f32.gmra.mrb[0].mxu0 %v82
    %v267 = vpop.f32.mrb[0].mxu0
    %v268 = vadd.f32 %v66, %v267
    %v269 = vpop.f32.mrb[0].mxu0
    %270 = vmatprep.mubr.f32.mxu0 0.0
    %271 = vmatmul.mubr.f32.gmra.mrb[0].mxu0 %v85
    %v272 = vpop.f32.mrb[0].mxu0
    %v273 = vadd.f32 %v66, %v272
    %v274 = vpop.f32.mrb[0].mxu0
    %275 = vmatprep.mubr.f32.mxu0 0.0
    %276 = vmatmul.mubr.f32.gmra.mrb[0].mxu0 %v88
    %v277 = vpop.f32.mrb[0].mxu0
    %v278 = vadd.f32 %v66, %v277
    %v279 = vpop.f32.mrb[0].mxu0
    %280 = vmatprep.mubr.f32.mxu0 0.0
    %281 = vmatmul.mubr.f32.gmra.mrb[0].mxu0 %v91
    %v282 = vpop.f32.mrb[0].mxu0
    %v283 = vadd.f32 %v66, %v282
    %v284 = vpop.f32.mrb[0].mxu0
    %285 = vmatprep.mubr.f32.mxu0 0.0
    %286 = vmatmul.mubr.f32.gmra.mrb[0].mxu0 %v94
    %v287 = vpop.f32.mrb[0].mxu0
    %v288 = vadd.f32 %v66, %v287
    %v289 = vpop.f32.mrb[0].mxu0
    %290 = vmatprep.mubr.f32.mxu0 0.0
    %291 = vmatmul.mubr.f32.gmra.mrb[0].mxu0 %v97
    %v292 = vpop.f32.mrb[0].mxu0
    %v293 = vadd.f32 %v66, %v292
    %v294 = vpop.f32.mrb[0].mxu0
    %295 = vmatprep.mubr.f32.mxu0 0.0
    %296 = vmatmul.mubr.f32.gmra.mrb[0].mxu0 %v100
    %v297 = vpop.f32.mrb[0].mxu0
    %v298 = vadd.f32 %v66, %v297
    %v299 = vpop.f32.mrb[0].mxu0
    %300 = vmatprep.mubr.f32.mxu0 0.0
    %301 = vmatmul.mubr.f32.gmra.mrb[0].mxu0 %v103
    %v302 = vpop.f32.mrb[0].mxu0
    %v303 = vadd.f32 %v66, %v302
    %v304 = vpop.f32.mrb[0].mxu0
    %305 = vmatprep.mubr.f32.mxu0 0.0
    %306 = vmatmul.mubr.f32.gmra.mrb[0].mxu0 %v106
    %v307 = vpop.f32.mrb[0].mxu0
    %v308 = vadd.f32 %v66, %v307
    %v309 = vpop.f32.mrb[0].mxu0
    %310 = vmatprep.mubr.f32.mxu0 0.0
    %311 = vmatmul.mubr.f32.gmra.mrb[0].mxu0 %v109
    %v312 = vpop.f32.mrb[0].mxu0
    %v313 = vadd.f32 %v66, %v312
    %v314 = vpop.f32.mrb[0].mxu0
    %315 = vmatprep.mubr.f32.mxu0 0.0
    %316 = vmatmul.mubr.f32.gmra.mrb[0].mxu0 %v112
    %v317 = vpop.f32.mrb[0].mxu0
    %v318 = vadd.f32 %v66, %v317
    %v319 = vpop.f32.mrb[0].mxu0
    %320 = vmatprep.mubr.f32.mxu0 0.0
    %321 = vmatmul.mubr.f32.gmra.mrb[0].mxu0 %v115
    %v322 = vpop.f32.mrb[0].mxu0
    %v323 = vadd.f32 %v66, %v322
    %v324 = vpop.f32.mrb[0].mxu0
    %325 = vmatprep.mubr.f32.mxu0 0.0
    %326 = vmatmul.mubr.f32.gmra.mrb[0].mxu0 %v118
    %v327 = vpop.f32.mrb[0].mxu0
    %v328 = vadd.f32 %v66, %v327
    %v329 = vpop.f32.mrb[0].mxu0
    %330 = vmatprep.mubr.f32.mxu0 0.0
    %331 = vmatmul.mubr.f32.gmra.mrb[0].mxu0 %v121
    %v332 = vpop.f32.mrb[0].mxu0
    %v333 = vadd.f32 %v66, %v332
    %v334 = vpop.f32.mrb[0].mxu0
    %335 = vmatprep.mubr.f32.mxu0 0.0
    %336 = vmatmul.mubr.f32.gmra.mrb[0].mxu0 %v124
    %v337 = vpop.f32.mrb[0].mxu0
    %v338 = vadd.f32 %v66, %v337
    %v339 = vpop.f32.mrb[0].mxu0
    %340 = vmatprep.mubr.f32.mxu0 0.0
    %341 = vmatmul.mubr.f32.gmra.mrb[0].mxu0 %v127
    %v342 = vpop.f32.mrb[0].mxu0
    %v343 = vadd.f32 %v66, %v342
    %v344 = vpop.f32.mrb[0].mxu0
    %345 = vmatprep.mubr.f32.mxu0 0.0
    %346 = vmatmul.mubr.f32.gmra.mrb[0].mxu0 %v130
    %v347 = vpop.f32.mrb[0].mxu0
    %v348 = vadd.f32 %v66, %v347
    %v349 = vpop.f32.mrb[0].mxu0
    %350 = vmatprep.mubr.f32.mxu0 0.0
    %351 = vmatmul.mubr.f32.gmra.mrb[0].mxu0 %v133
    %v352 = vpop.f32.mrb[0].mxu0
    %v353 = vadd.f32 %v66, %v352
    %v354 = vpop.f32.mrb[0].mxu0
    %355 = vmatprep.mubr.f32.mxu0 0.0
    %356 = vmatmul.mubr.f32.gmra.mrb[0].mxu0 %v136
    %v357 = vpop.f32.mrb[0].mxu0
    %v358 = vadd.f32 %v66, %v357
    %v359 = vpop.f32.mrb[0].mxu0
    %360 = vmatprep.mubr.f32.mxu0 0.0
    %361 = vmatmul.mubr.f32.gmra.mrb[0].mxu0 %v139
    %v362 = vpop.f32.mrb[0].mxu0
    %v363 = vadd.f32 %v66, %v362
    %v364 = vpop.f32.mrb[0].mxu0
    %365 = vmatprep.mubr.f32.mxu0 0.0
    %366 = vmatmul.mubr.f32.gmra.mrb[0].mxu0 %v142
    %v367 = vpop.f32.mrb[0].mxu0
    %v368 = vadd.f32 %v66, %v367
    %v369 = vpop.f32.mrb[0].mxu0
    %370 = vmatprep.mubr.f32.mxu0 0.0
    %371 = vmatmul.mubr.f32.gmra.mrb[0].mxu0 %v145
    %v372 = vpop.f32.mrb[0].mxu0
    %v373 = vadd.f32 %v66, %v372
    %v374 = vpop.f32.mrb[0].mxu0
    %375 = vmatprep.mubr.f32.mxu0 0.0
    %376 = vmatmul.mubr.f32.gmra.mrb[0].mxu0 %v148
    %v377 = vpop.f32.mrb[0].mxu0
    %v378 = vadd.f32 %v66, %v377
    %v379 = vpop.f32.mrb[0].mxu0
    %380 = vmatprep.mubr.f32.mxu0 0.0
    %381 = vmatmul.mubr.f32.gmra.mrb[0].mxu0 %v151
    %v382 = vpop.f32.mrb[0].mxu0
    %v383 = vadd.f32 %v66, %v382
    %v384 = vpop.f32.mrb[0].mxu0
    %385 = vmatprep.mubr.f32.mxu0 0.0
    %386 = vmatmul.mubr.f32.gmra.mrb[0].mxu0 %v154
    %v387 = vpop.f32.mrb[0].mxu0
    %v388 = vadd.f32 %v66, %v387
    %v389 = vpop.f32.mrb[0].mxu0
    %390 = vmatprep.mubr.f32.mxu0 0.0
    %391 = vmatmul.mubr.f32.gmra.mrb[0].mxu0 %v157
    %v392 = vpop.f32.mrb[0].mxu0
    %v393 = vadd.f32 %v66, %v392
    %v394 = vpop.f32.mrb[0].mxu0
    %395 = vmatprep.mubr.f32.mxu0 0.0
    %396 = vmatmul.mubr.f32.gmra.mrb[0].mxu0 %v160
    %v397 = vpop.f32.mrb[0].mxu0
    %v398 = vadd.f32 %v66, %v397
    %v399 = vpop.f32.mrb[0].mxu0
    %400 = vmatprep.mubr.f32.mxu0 0.0
    %401 = vmatmul.mubr.f32.gmra.mrb[0].mxu0 %v163
    %v402 = vpop.f32.mrb[0].mxu0
    %v403 = vadd.f32 %v66, %v402
    %v404 = vpop.f32.mrb[0].mxu0
    %405 = vmatprep.mubr.f32.mxu0 0.0
    %406 = vmatmul.mubr.f32.gmra.mrb[0].mxu0 %v166
    %v407 = vpop.f32.mrb[0].mxu0
    %v408 = vadd.f32 %v66, %v407
    %v409 = vpop.f32.mrb[0].mxu0
    %410 = vmatprep.mubr.f32.mxu0 0.0
    %411 = vmatmul.mubr.f32.gmra.mrb[0].mxu0 %v169
    %v412 = vpop.f32.mrb[0].mxu0
    %v413 = vadd.f32 %v66, %v412
    %v414 = vpop.f32.mrb[0].mxu0
    %415 = vmatprep.mubr.f32.mxu0 0.0
    %416 = vmatmul.mubr.f32.gmra.mrb[0].mxu0 %v172
    %v417 = vpop.f32.mrb[0].mxu0
    %v418 = vadd.f32 %v66, %v417
    %v419 = vpop.f32.mrb[0].mxu0
    %420 = vmatprep.mubr.f32.mxu0 0.0
    %421 = vmatmul.mubr.f32.gmra.mrb[0].mxu0 %v175
    %v422 = vpop.f32.mrb[0].mxu0
    %v423 = vadd.f32 %v66, %v422
    %v424 = vpop.f32.mrb[0].mxu0
    %425 = vdwg.mxu0
    %v426 = vmax.f32 %v248, 0.0
    %v427 = vmax.f32 %v253, 0.0
    %v428 = vmax.f32 %v258, 0.0
    %v429 = vmax.f32 %v263, 0.0
    %v430 = vmax.f32 %v268, 0.0
    %v431 = vmax.f32 %v273, 0.0
    %v432 = vmax.f32 %v278, 0.0
    %v433 = vmax.f32 %v283, 0.0
    %v434 = vmax.f32 %v288, 0.0
    %v435 = vmax.f32 %v293, 0.0
    %v436 = vmax.f32 %v298, 0.0
    %v437 = vmax.f32 %v303, 0.0
    %v438 = vmax.f32 %v308, 0.0
    %v439 = vmax.f32 %v313, 0.0
    %v440 = vmax.f32 %v318, 0.0
    %v441 = vmax.f32 %v323, 0.0
    %v442 = vmax.f32 %v328, 0.0
    %v443 = vmax.f32 %v333, 0.0
    %v444 = vmax.f32 %v338, 0.0
    %v445 = vmax.f32 %v343, 0.0
    %v446 = vmax.f32 %v348, 0.0
    %v447 = vmax.f32 %v353, 0.0
    %v448 = vmax.f32 %v358, 0.0
    %v449 = vmax.f32 %v363, 0.0
    %v450 = vmax.f32 %v368, 0.0
    %v451 = vmax.f32 %v373, 0.0
    %v452 = vmax.f32 %v378, 0.0
    %v453 = vmax.f32 %v383, 0.0
    %v454 = vmax.f32 %v388, 0.0
    %v455 = vmax.f32 %v393, 0.0
    %v456 = vmax.f32 %v398, 0.0
    %v457 = vmax.f32 %v403, 0.0
    %v458 = vmax.f32 %v408, 0.0
    %v459 = vmax.f32 %v413, 0.0
    %v460 = vmax.f32 %v418, 0.0
    %v461 = vmax.f32 %v423, 0.0
    %v498 = vcombine.high %v426, %v426
    %v499 = vcombine.high %v427, %v427
    %v500 = vcombine.high %v428, %v428
    %v501 = vcombine.high %v429, %v429
    %v502 = vcombine.high %v430, %v430
    %v503 = vcombine.high %v431, %v431
    %v504 = vcombine.high %v432, %v432
    %v505 = vcombine.high %v433, %v433
    %v506 = vcombine.high %v434, %v434
    %v507 = vcombine.high %v435, %v435
    %v508 = vcombine.high %v436, %v436
    %v509 = vcombine.high %v437, %v437
    %v510 = vcombine.high %v438, %v438
    %v511 = vcombine.high %v439, %v439
    %v512 = vcombine.high %v440, %v440
    %v513 = vcombine.high %v441, %v441
    %v514 = vcombine.high %v442, %v442
    %v515 = vcombine.high %v443, %v443
    %v516 = vcombine.high %v444, %v444
    %v517 = vcombine.high %v445, %v445
    %v518 = vcombine.high %v446, %v446
    %v519 = vcombine.high %v447, %v447
    %v520 = vcombine.high %v448, %v448
    %v521 = vcombine.high %v449, %v449
    %v522 = vcombine.high %v450, %v450
    %v523 = vcombine.high %v451, %v451
    %v524 = vcombine.high %v452, %v452
    %v525 = vcombine.high %v453, %v453
    %v526 = vcombine.high %v454, %v454
    %v527 = vcombine.high %v455, %v455
    %v528 = vcombine.high %v456, %v456
    %v529 = vcombine.high %v457, %v457
    %v530 = vcombine.high %v458, %v458
    %v531 = vcombine.high %v459, %v459
    %v532 = vcombine.high %v460, %v460
    %v533 = vcombine.high %v461, %v461
    %v546 = vcombine.low %v426, %v498
    %v547 = vcombine.low %v499, %v428
    %v548 = vcombine.low %v429, %v501
    %v549 = vcombine.low %v502, %v431
    %v550 = vcombine.low %v432, %v504
    %v551 = vcombine.low %v505, %v434
    %v552 = vcombine.low %v435, %v507
    %v553 = vcombine.low %v508, %v437
    %v554 = vcombine.low %v438, %v510
    %v555 = vcombine.low %v511, %v440
    %v556 = vcombine.low %v441, %v513
    %v557 = vcombine.low %v514, %v443
    %v558 = vcombine.low %v444, %v516
    %v559 = vcombine.low %v517, %v446
    %v560 = vcombine.low %v447, %v519
    %v561 = vcombine.low %v520, %v449
    %v562 = vcombine.low %v450, %v522
    %v563 = vcombine.low %v523, %v452
    %v564 = vcombine.low %v453, %v525
    %v565 = vcombine.low %v526, %v455
    %v566 = vcombine.low %v456, %v528
    %v567 = vcombine.low %v529, %v458
    %v568 = vcombine.low %v459, %v531
    %v569 = vcombine.low %v532, %v461
    %vm594 = vcmask 162816
    %595 = vst.msk [vmem:[#allocation2] sm:$0xff] %vm594, %v546
    %vm596 = vcmask 158720
    %597 = vst.msk [vmem:[#allocation2 + $0x8] sm:$0xf] %vm596, %v427
    %598 = vst.msk [vmem:[#allocation2 + $0x10] sm:$0xff] %vm594, %v547
    %599 = vst.msk [vmem:[#allocation2 + $0x18] sm:$0xf] %vm596, %v500
    %600 = vst.msk [vmem:[#allocation2 + $0x20] sm:$0xff] %vm594, %v548
    %601 = vst.msk [vmem:[#allocation2 + $0x28] sm:$0xf] %vm596, %v430
    %602 = vst.msk [vmem:[#allocation2 + $0x30] sm:$0xff] %vm594, %v549
    %603 = vst.msk [vmem:[#allocation2 + $0x38] sm:$0xf] %vm596, %v503
    %604 = vst.msk [vmem:[#allocation2 + $0x40] sm:$0xff] %vm594, %v550
    %605 = vst.msk [vmem:[#allocation2 + $0x48] sm:$0xf] %vm596, %v433
    %606 = vst.msk [vmem:[#allocation2 + $0x50] sm:$0xff] %vm594, %v551
    %607 = vst.msk [vmem:[#allocation2 + $0x58] sm:$0xf] %vm596, %v506
    %608 = vst.msk [vmem:[#allocation2 + $0x60] sm:$0xff] %vm594, %v552
    %609 = vst.msk [vmem:[#allocation2 + $0x68] sm:$0xf] %vm596, %v436
    %610 = vst.msk [vmem:[#allocation2 + $0x70] sm:$0xff] %vm594, %v553
    %611 = vst.msk [vmem:[#allocation2 + $0x78] sm:$0xf] %vm596, %v509
    %612 = vst.msk [vmem:[#allocation2 + $0x80] sm:$0xff] %vm594, %v554
    %613 = vst.msk [vmem:[#allocation2 + $0x88] sm:$0xf] %vm596, %v439
    %614 = vst.msk [vmem:[#allocation2 + $0x90] sm:$0xff] %vm594, %v555
    %615 = vst.msk [vmem:[#allocation2 + $0x98] sm:$0xf] %vm596, %v512
    %616 = vst.msk [vmem:[#allocation2 + $0xa0] sm:$0xff] %vm594, %v556
    %617 = vst.msk [vmem:[#allocation2 + $0xa8] sm:$0xf] %vm596, %v442
    %618 = vst.msk [vmem:[#allocation2 + $0xb0] sm:$0xff] %vm594, %v557
    %619 = vst.msk [vmem:[#allocation2 + $0xb8] sm:$0xf] %vm596, %v515
    %620 = vst.msk [vmem:[#allocation2 + $0xc0] sm:$0xff] %vm594, %v558
    %621 = vst.msk [vmem:[#allocation2 + $0xc8] sm:$0xf] %vm596, %v445
    %622 = vst.msk [vmem:[#allocation2 + $0xd0] sm:$0xff] %vm594, %v559
    %623 = vst.msk [vmem:[#allocation2 + $0xd8] sm:$0xf] %vm596, %v518
    %624 = vst.msk [vmem:[#allocation2 + $0xe0] sm:$0xff] %vm594, %v560
    %625 = vst.msk [vmem:[#allocation2 + $0xe8] sm:$0xf] %vm596, %v448
    %626 = vst.msk [vmem:[#allocation2 + $0xf0] sm:$0xff] %vm594, %v561
    %627 = vst.msk [vmem:[#allocation2 + $0xf8] sm:$0xf] %vm596, %v521
    %628 = vst.msk [vmem:[#allocation2 + $0x100] sm:$0xff] %vm594, %v562
    %629 = vst.msk [vmem:[#allocation2 + $0x108] sm:$0xf] %vm596, %v451
    %630 = vst.msk [vmem:[#allocation2 + $0x110] sm:$0xff] %vm594, %v563
    %631 = vst.msk [vmem:[#allocation2 + $0x118] sm:$0xf] %vm596, %v524
    %632 = vst.msk [vmem:[#allocation2 + $0x120] sm:$0xff] %vm594, %v564
    %633 = vst.msk [vmem:[#allocation2 + $0x128] sm:$0xf] %vm596, %v454
    %634 = vst.msk [vmem:[#allocation2 + $0x130] sm:$0xff] %vm594, %v565
    %635 = vst.msk [vmem:[#allocation2 + $0x138] sm:$0xf] %vm596, %v527
    %636 = vst.msk [vmem:[#allocation2 + $0x140] sm:$0xff] %vm594, %v566
    %637 = vst.msk [vmem:[#allocation2 + $0x148] sm:$0xf] %vm596, %v457
    %638 = vst.msk [vmem:[#allocation2 + $0x150] sm:$0xff] %vm594, %v567
    %639 = vst.msk [vmem:[#allocation2 + $0x158] sm:$0xf] %vm596, %v530
    %640 = vst.msk [vmem:[#allocation2 + $0x160] sm:$0xff] %vm594, %v568
    %641 = vst.msk [vmem:[#allocation2 + $0x168] sm:$0xf] %vm596, %v460
    %642 = vst.msk [vmem:[#allocation2 + $0x170] sm:$0xff] %vm594, %v569
    %643 = vst.msk [vmem:[#allocation2 + $0x178] sm:$0xf] %vm596, %v533
    %v644 = vld [vmem:[#allocation2] sm:$0xff]
    %v645 = vld [vmem:[#allocation2 + $0x10] sm:$0xff]
    %v646 = vld [vmem:[#allocation2 + $0x20] sm:$0xff]
    %v647 = vld [vmem:[#allocation2 + $0x30] sm:$0xff]
    %v648 = vld [vmem:[#allocation2 + $0x40] sm:$0xff]
    %v649 = vld [vmem:[#allocation2 + $0x50] sm:$0xff]
    %v650 = vld [vmem:[#allocation2 + $0x60] sm:$0xff]
    %v651 = vld [vmem:[#allocation2 + $0x70] sm:$0xff]
    %v652 = vld [vmem:[#allocation2 + $0xc0] sm:$0xff]
    %v653 = vld [vmem:[#allocation2 + $0xd0] sm:$0xff]
    %v654 = vld [vmem:[#allocation2 + $0xe0] sm:$0xff]
    %v655 = vld [vmem:[#allocation2 + $0xf0] sm:$0xff]
    %v656 = vld [vmem:[#allocation2 + $0x100] sm:$0xff]
    %v657 = vld [vmem:[#allocation2 + $0x110] sm:$0xff]
    %v658 = vld [vmem:[#allocation2 + $0x120] sm:$0xff]
    %v659 = vld [vmem:[#allocation2 + $0x130] sm:$0xff]
    %660 = vst.msk [vmem:[#allocation3] sm:$0xff] %vm594, %v644
    %661 = vst.msk [vmem:[#allocation3 + $0x20] sm:$0xff] %vm594, %v645
    %662 = vst.msk [vmem:[#allocation3 + $0x40] sm:$0xff] %vm594, %v646
    %663 = vst.msk [vmem:[#allocation3 + $0x60] sm:$0xff] %vm594, %v647
    %664 = vst.msk [vmem:[#allocation3 + $0x80] sm:$0xff] %vm594, %v648
    %665 = vst.msk [vmem:[#allocation3 + $0xa0] sm:$0xff] %vm594, %v649
    %666 = vst.msk [vmem:[#allocation3 + $0xc0] sm:$0xff] %vm594, %v650
    %667 = vst.msk [vmem:[#allocation3 + $0xe0] sm:$0xff] %vm594, %v651
    %668 = vst.msk [vmem:[#allocation3 + $0x100] sm:$0xff] %vm594, %v652
    %669 = vst.msk [vmem:[#allocation3 + $0x120] sm:$0xff] %vm594, %v653
    %670 = vst.msk [vmem:[#allocation3 + $0x140] sm:$0xff] %vm594, %v654
    %671 = vst.msk [vmem:[#allocation3 + $0x160] sm:$0xff] %vm594, %v655
    %672 = vst.msk [vmem:[#allocation3 + $0x180] sm:$0xff] %vm594, %v656
    %673 = vst.msk [vmem:[#allocation3 + $0x1a0] sm:$0xff] %vm594, %v657
    %674 = vst.msk [vmem:[#allocation3 + $0x1c0] sm:$0xff] %vm594, %v658
    %675 = vst.msk [vmem:[#allocation3 + $0x1e0] sm:$0xff] %vm594, %v659
    %v676 = vld [vmem:[#allocation2 + $0x1] sm:$0xff]
    %v677 = vld [vmem:[#allocation2 + $0x11] sm:$0xff]
    %v678 = vld [vmem:[#allocation2 + $0x21] sm:$0xff]
    %v679 = vld [vmem:[#allocation2 + $0x31] sm:$0xff]
    %v680 = vld [vmem:[#allocation2 + $0x41] sm:$0xff]
    %v681 = vld [vmem:[#allocation2 + $0x51] sm:$0xff]
    %v682 = vld [vmem:[#allocation2 + $0x61] sm:$0xff]
    %v683 = vld [vmem:[#allocation2 + $0x71] sm:$0xff]
    %v684 = vld [vmem:[#allocation2 + $0xc1] sm:$0xff]
    %v685 = vld [vmem:[#allocation2 + $0xd1] sm:$0xff]
    %v686 = vld [vmem:[#allocation2 + $0xe1] sm:$0xff]
    %v687 = vld [vmem:[#allocation2 + $0xf1] sm:$0xff]
    %v688 = vld [vmem:[#allocation2 + $0x101] sm:$0xff]
    %v689 = vld [vmem:[#allocation2 + $0x111] sm:$0xff]
    %v690 = vld [vmem:[#allocation2 + $0x121] sm:$0xff]
    %v691 = vld [vmem:[#allocation2 + $0x131] sm:$0xff]
    %708 = vrot.lane.b32.xlu0 %v676, 20
    %v709 = vpop.permute.xlu0 %708
    %710 = vrot.lane.b32.xlu0 %v677, 20
    %v711 = vpop.permute.xlu0 %710
    %712 = vrot.lane.b32.xlu0 %v678, 20
    %v713 = vpop.permute.xlu0 %712
    %714 = vrot.lane.b32.xlu0 %v679, 20
    %v715 = vpop.permute.xlu0 %714
    %716 = vrot.lane.b32.xlu0 %v680, 20
    %v717 = vpop.permute.xlu0 %716
    %718 = vrot.lane.b32.xlu0 %v681, 20
    %v719 = vpop.permute.xlu0 %718
    %720 = vrot.lane.b32.xlu0 %v682, 20
    %v721 = vpop.permute.xlu0 %720
    %722 = vrot.lane.b32.xlu0 %v683, 20
    %v723 = vpop.permute.xlu0 %722
    %724 = vrot.lane.b32.xlu0 %v684, 20
    %v725 = vpop.permute.xlu0 %724
    %726 = vrot.lane.b32.xlu0 %v685, 20
    %v727 = vpop.permute.xlu0 %726
    %728 = vrot.lane.b32.xlu0 %v686, 20
    %v729 = vpop.permute.xlu0 %728
    %730 = vrot.lane.b32.xlu0 %v687, 20
    %v731 = vpop.permute.xlu0 %730
    %732 = vrot.lane.b32.xlu0 %v688, 20
    %v733 = vpop.permute.xlu0 %732
    %734 = vrot.lane.b32.xlu0 %v689, 20
    %v735 = vpop.permute.xlu0 %734
    %736 = vrot.lane.b32.xlu0 %v690, 20
    %v737 = vpop.permute.xlu0 %736
    %738 = vrot.lane.b32.xlu0 %v691, 20
    %v739 = vpop.permute.xlu0 %738
    %vm756 = vcmask 326816
    %757 = vst.msk [vmem:[#allocation3] sm:$0xff] %vm756, %v709
    %758 = vst.msk [vmem:[#allocation3 + $0x20] sm:$0xff] %vm756, %v711
    %759 = vst.msk [vmem:[#allocation3 + $0x40] sm:$0xff] %vm756, %v713
    %760 = vst.msk [vmem:[#allocation3 + $0x60] sm:$0xff] %vm756, %v715
    %761 = vst.msk [vmem:[#allocation3 + $0x80] sm:$0xff] %vm756, %v717
    %762 = vst.msk [vmem:[#allocation3 + $0xa0] sm:$0xff] %vm756, %v719
    %763 = vst.msk [vmem:[#allocation3 + $0xc0] sm:$0xff] %vm756, %v721
    %764 = vst.msk [vmem:[#allocation3 + $0xe0] sm:$0xff] %vm756, %v723
    %765 = vst.msk [vmem:[#allocation3 + $0x100] sm:$0xff] %vm756, %v725
    %766 = vst.msk [vmem:[#allocation3 + $0x120] sm:$0xff] %vm756, %v727
    %767 = vst.msk [vmem:[#allocation3 + $0x140] sm:$0xff] %vm756, %v729
    %768 = vst.msk [vmem:[#allocation3 + $0x160] sm:$0xff] %vm756, %v731
    %769 = vst.msk [vmem:[#allocation3 + $0x180] sm:$0xff] %vm756, %v733
    %770 = vst.msk [vmem:[#allocation3 + $0x1a0] sm:$0xff] %vm756, %v735
    %771 = vst.msk [vmem:[#allocation3 + $0x1c0] sm:$0xff] %vm756, %v737
    %772 = vst.msk [vmem:[#allocation3 + $0x1e0] sm:$0xff] %vm756, %v739
    %v773 = vld [vmem:[#allocation2 + $0x2] sm:$0xff]
    %v774 = vld [vmem:[#allocation2 + $0x12] sm:$0xff]
    %v775 = vld [vmem:[#allocation2 + $0x22] sm:$0xff]
    %v776 = vld [vmem:[#allocation2 + $0x32] sm:$0xff]
    %v777 = vld [vmem:[#allocation2 + $0x42] sm:$0xff]
    %v778 = vld [vmem:[#allocation2 + $0x52] sm:$0xff]
    %v779 = vld [vmem:[#allocation2 + $0x62] sm:$0xff]
    %v780 = vld [vmem:[#allocation2 + $0x72] sm:$0xff]
    %v781 = vld [vmem:[#allocation2 + $0xc2] sm:$0xff]
    %v782 = vld [vmem:[#allocation2 + $0xd2] sm:$0xff]
    %v783 = vld [vmem:[#allocation2 + $0xe2] sm:$0xff]
    %v784 = vld [vmem:[#allocation2 + $0xf2] sm:$0xff]
    %v785 = vld [vmem:[#allocation2 + $0x102] sm:$0xff]
    %v786 = vld [vmem:[#allocation2 + $0x112] sm:$0xff]
    %v787 = vld [vmem:[#allocation2 + $0x122] sm:$0xff]
    %v788 = vld [vmem:[#allocation2 + $0x132] sm:$0xff]
    %805 = vrot.lane.b32.xlu0 %v773, 40
    %v806 = vpop.permute.xlu0 %805
    %807 = vrot.lane.b32.xlu0 %v774, 40
    %v808 = vpop.permute.xlu0 %807
    %809 = vrot.lane.b32.xlu0 %v775, 40
    %v810 = vpop.permute.xlu0 %809
    %811 = vrot.lane.b32.xlu0 %v776, 40
    %v812 = vpop.permute.xlu0 %811
    %813 = vrot.lane.b32.xlu0 %v777, 40
    %v814 = vpop.permute.xlu0 %813
    %815 = vrot.lane.b32.xlu0 %v778, 40
    %v816 = vpop.permute.xlu0 %815
    %817 = vrot.lane.b32.xlu0 %v779, 40
    %v818 = vpop.permute.xlu0 %817
    %819 = vrot.lane.b32.xlu0 %v780, 40
    %v820 = vpop.permute.xlu0 %819
    %821 = vrot.lane.b32.xlu0 %v781, 40
    %v822 = vpop.permute.xlu0 %821
    %823 = vrot.lane.b32.xlu0 %v782, 40
    %v824 = vpop.permute.xlu0 %823
    %825 = vrot.lane.b32.xlu0 %v783, 40
    %v826 = vpop.permute.xlu0 %825
    %827 = vrot.lane.b32.xlu0 %v784, 40
    %v828 = vpop.permute.xlu0 %827
    %829 = vrot.lane.b32.xlu0 %v785, 40
    %v830 = vpop.permute.xlu0 %829
    %831 = vrot.lane.b32.xlu0 %v786, 40
    %v832 = vpop.permute.xlu0 %831
    %833 = vrot.lane.b32.xlu0 %v787, 40
    %v834 = vpop.permute.xlu0 %833
    %835 = vrot.lane.b32.xlu0 %v788, 40
    %v836 = vpop.permute.xlu0 %835
    %vm853 = vcmask 490816
    %854 = vst.msk [vmem:[#allocation3] sm:$0xff] %vm853, %v806
    %855 = vst.msk [vmem:[#allocation3 + $0x20] sm:$0xff] %vm853, %v808
    %856 = vst.msk [vmem:[#allocation3 + $0x40] sm:$0xff] %vm853, %v810
    %857 = vst.msk [vmem:[#allocation3 + $0x60] sm:$0xff] %vm853, %v812
    %858 = vst.msk [vmem:[#allocation3 + $0x80] sm:$0xff] %vm853, %v814
    %859 = vst.msk [vmem:[#allocation3 + $0xa0] sm:$0xff] %vm853, %v816
    %860 = vst.msk [vmem:[#allocation3 + $0xc0] sm:$0xff] %vm853, %v818
    %861 = vst.msk [vmem:[#allocation3 + $0xe0] sm:$0xff] %vm853, %v820
    %862 = vst.msk [vmem:[#allocation3 + $0x100] sm:$0xff] %vm853, %v822
    %863 = vst.msk [vmem:[#allocation3 + $0x120] sm:$0xff] %vm853, %v824
    %864 = vst.msk [vmem:[#allocation3 + $0x140] sm:$0xff] %vm853, %v826
    %865 = vst.msk [vmem:[#allocation3 + $0x160] sm:$0xff] %vm853, %v828
    %866 = vst.msk [vmem:[#allocation3 + $0x180] sm:$0xff] %vm853, %v830
    %867 = vst.msk [vmem:[#allocation3 + $0x1a0] sm:$0xff] %vm853, %v832
    %868 = vst.msk [vmem:[#allocation3 + $0x1c0] sm:$0xff] %vm853, %v834
    %869 = vst.msk [vmem:[#allocation3 + $0x1e0] sm:$0xff] %vm853, %v836
    %v870 = vld [vmem:[#allocation2 + $0x3] sm:$0xff]
    %v871 = vld [vmem:[#allocation2 + $0x13] sm:$0xff]
    %v872 = vld [vmem:[#allocation2 + $0x23] sm:$0xff]
    %v873 = vld [vmem:[#allocation2 + $0x33] sm:$0xff]
    %v874 = vld [vmem:[#allocation2 + $0x43] sm:$0xff]
    %v875 = vld [vmem:[#allocation2 + $0x53] sm:$0xff]
    %v876 = vld [vmem:[#allocation2 + $0x63] sm:$0xff]
    %v877 = vld [vmem:[#allocation2 + $0x73] sm:$0xff]
    %v878 = vld [vmem:[#allocation2 + $0xc3] sm:$0xff]
    %v879 = vld [vmem:[#allocation2 + $0xd3] sm:$0xff]
    %v880 = vld [vmem:[#allocation2 + $0xe3] sm:$0xff]
    %v881 = vld [vmem:[#allocation2 + $0xf3] sm:$0xff]
    %v882 = vld [vmem:[#allocation2 + $0x103] sm:$0xff]
    %v883 = vld [vmem:[#allocation2 + $0x113] sm:$0xff]
    %v884 = vld [vmem:[#allocation2 + $0x123] sm:$0xff]
    %v885 = vld [vmem:[#allocation2 + $0x133] sm:$0xff]
    %902 = vrot.lane.b32.xlu0 %v870, 60
    %v903 = vpop.permute.xlu0 %902
    %904 = vrot.lane.b32.xlu0 %v871, 60
    %v905 = vpop.permute.xlu0 %904
    %906 = vrot.lane.b32.xlu0 %v872, 60
    %v907 = vpop.permute.xlu0 %906
    %908 = vrot.lane.b32.xlu0 %v873, 60
    %v909 = vpop.permute.xlu0 %908
    %910 = vrot.lane.b32.xlu0 %v874, 60
    %v911 = vpop.permute.xlu0 %910
    %912 = vrot.lane.b32.xlu0 %v875, 60
    %v913 = vpop.permute.xlu0 %912
    %914 = vrot.lane.b32.xlu0 %v876, 60
    %v915 = vpop.permute.xlu0 %914
    %916 = vrot.lane.b32.xlu0 %v877, 60
    %v917 = vpop.permute.xlu0 %916
    %918 = vrot.lane.b32.xlu0 %v878, 60
    %v919 = vpop.permute.xlu0 %918
    %920 = vrot.lane.b32.xlu0 %v879, 60
    %v921 = vpop.permute.xlu0 %920
    %922 = vrot.lane.b32.xlu0 %v880, 60
    %v923 = vpop.permute.xlu0 %922
    %924 = vrot.lane.b32.xlu0 %v881, 60
    %v925 = vpop.permute.xlu0 %924
    %926 = vrot.lane.b32.xlu0 %v882, 60
    %v927 = vpop.permute.xlu0 %926
    %928 = vrot.lane.b32.xlu0 %v883, 60
    %v929 = vpop.permute.xlu0 %928
    %930 = vrot.lane.b32.xlu0 %v884, 60
    %v931 = vpop.permute.xlu0 %930
    %932 = vrot.lane.b32.xlu0 %v885, 60
    %v933 = vpop.permute.xlu0 %932
    %vm950 = vcmask 654816
    %951 = vst.msk [vmem:[#allocation3] sm:$0xff] %vm950, %v903
    %952 = vst.msk [vmem:[#allocation3 + $0x20] sm:$0xff] %vm950, %v905
    %953 = vst.msk [vmem:[#allocation3 + $0x40] sm:$0xff] %vm950, %v907
    %954 = vst.msk [vmem:[#allocation3 + $0x60] sm:$0xff] %vm950, %v909
    %955 = vst.msk [vmem:[#allocation3 + $0x80] sm:$0xff] %vm950, %v911
    %956 = vst.msk [vmem:[#allocation3 + $0xa0] sm:$0xff] %vm950, %v913
    %957 = vst.msk [vmem:[#allocation3 + $0xc0] sm:$0xff] %vm950, %v915
    %958 = vst.msk [vmem:[#allocation3 + $0xe0] sm:$0xff] %vm950, %v917
    %959 = vst.msk [vmem:[#allocation3 + $0x100] sm:$0xff] %vm950, %v919
    %960 = vst.msk [vmem:[#allocation3 + $0x120] sm:$0xff] %vm950, %v921
    %961 = vst.msk [vmem:[#allocation3 + $0x140] sm:$0xff] %vm950, %v923
    %962 = vst.msk [vmem:[#allocation3 + $0x160] sm:$0xff] %vm950, %v925
    %963 = vst.msk [vmem:[#allocation3 + $0x180] sm:$0xff] %vm950, %v927
    %964 = vst.msk [vmem:[#allocation3 + $0x1a0] sm:$0xff] %vm950, %v929
    %965 = vst.msk [vmem:[#allocation3 + $0x1c0] sm:$0xff] %vm950, %v931
    %966 = vst.msk [vmem:[#allocation3 + $0x1e0] sm:$0xff] %vm950, %v933
    %v967 = vld [vmem:[#allocation2 + $0x4] sm:$0xff]
    %v968 = vld [vmem:[#allocation2 + $0x14] sm:$0xff]
    %v969 = vld [vmem:[#allocation2 + $0x24] sm:$0xff]
    %v970 = vld [vmem:[#allocation2 + $0x34] sm:$0xff]
    %v971 = vld [vmem:[#allocation2 + $0x44] sm:$0xff]
    %v972 = vld [vmem:[#allocation2 + $0x54] sm:$0xff]
    %v973 = vld [vmem:[#allocation2 + $0x64] sm:$0xff]
    %v974 = vld [vmem:[#allocation2 + $0x74] sm:$0xff]
    %v975 = vld [vmem:[#allocation2 + $0xc4] sm:$0xff]
    %v976 = vld [vmem:[#allocation2 + $0xd4] sm:$0xff]
    %v977 = vld [vmem:[#allocation2 + $0xe4] sm:$0xff]
    %v978 = vld [vmem:[#allocation2 + $0xf4] sm:$0xff]
    %v979 = vld [vmem:[#allocation2 + $0x104] sm:$0xff]
    %v980 = vld [vmem:[#allocation2 + $0x114] sm:$0xff]
    %v981 = vld [vmem:[#allocation2 + $0x124] sm:$0xff]
    %v982 = vld [vmem:[#allocation2 + $0x134] sm:$0xff]
    %999 = vrot.lane.b32.xlu0 %v967, 80
    %v1000 = vpop.permute.xlu0 %999
    %1001 = vrot.lane.b32.xlu0 %v968, 80
    %v1002 = vpop.permute.xlu0 %1001
    %1003 = vrot.lane.b32.xlu0 %v969, 80
    %v1004 = vpop.permute.xlu0 %1003
    %1005 = vrot.lane.b32.xlu0 %v970, 80
    %v1006 = vpop.permute.xlu0 %1005
    %1007 = vrot.lane.b32.xlu0 %v971, 80
    %v1008 = vpop.permute.xlu0 %1007
    %1009 = vrot.lane.b32.xlu0 %v972, 80
    %v1010 = vpop.permute.xlu0 %1009
    %1011 = vrot.lane.b32.xlu0 %v973, 80
    %v1012 = vpop.permute.xlu0 %1011
    %1013 = vrot.lane.b32.xlu0 %v974, 80
    %v1014 = vpop.permute.xlu0 %1013
    %1015 = vrot.lane.b32.xlu0 %v975, 80
    %v1016 = vpop.permute.xlu0 %1015
    %1017 = vrot.lane.b32.xlu0 %v976, 80
    %v1018 = vpop.permute.xlu0 %1017
    %1019 = vrot.lane.b32.xlu0 %v977, 80
    %v1020 = vpop.permute.xlu0 %1019
    %1021 = vrot.lane.b32.xlu0 %v978, 80
    %v1022 = vpop.permute.xlu0 %1021
    %1023 = vrot.lane.b32.xlu0 %v979, 80
    %v1024 = vpop.permute.xlu0 %1023
    %1025 = vrot.lane.b32.xlu0 %v980, 80
    %v1026 = vpop.permute.xlu0 %1025
    %1027 = vrot.lane.b32.xlu0 %v981, 80
    %v1028 = vpop.permute.xlu0 %1027
    %1029 = vrot.lane.b32.xlu0 %v982, 80
    %v1030 = vpop.permute.xlu0 %1029
    %vm1047 = vcmask 818816
    %1048 = vst.msk [vmem:[#allocation3] sm:$0xff] %vm1047, %v1000
    %1049 = vst.msk [vmem:[#allocation3 + $0x20] sm:$0xff] %vm1047, %v1002
    %1050 = vst.msk [vmem:[#allocation3 + $0x40] sm:$0xff] %vm1047, %v1004
    %1051 = vst.msk [vmem:[#allocation3 + $0x60] sm:$0xff] %vm1047, %v1006
    %1052 = vst.msk [vmem:[#allocation3 + $0x80] sm:$0xff] %vm1047, %v1008
    %1053 = vst.msk [vmem:[#allocation3 + $0xa0] sm:$0xff] %vm1047, %v1010
    %1054 = vst.msk [vmem:[#allocation3 + $0xc0] sm:$0xff] %vm1047, %v1012
    %1055 = vst.msk [vmem:[#allocation3 + $0xe0] sm:$0xff] %vm1047, %v1014
    %1056 = vst.msk [vmem:[#allocation3 + $0x100] sm:$0xff] %vm1047, %v1016
    %1057 = vst.msk [vmem:[#allocation3 + $0x120] sm:$0xff] %vm1047, %v1018
    %1058 = vst.msk [vmem:[#allocation3 + $0x140] sm:$0xff] %vm1047, %v1020
    %1059 = vst.msk [vmem:[#allocation3 + $0x160] sm:$0xff] %vm1047, %v1022
    %1060 = vst.msk [vmem:[#allocation3 + $0x180] sm:$0xff] %vm1047, %v1024
    %1061 = vst.msk [vmem:[#allocation3 + $0x1a0] sm:$0xff] %vm1047, %v1026
    %1062 = vst.msk [vmem:[#allocation3 + $0x1c0] sm:$0xff] %vm1047, %v1028
    %1063 = vst.msk [vmem:[#allocation3 + $0x1e0] sm:$0xff] %vm1047, %v1030
    %s1064 = scalar_lea.vmem [#allocation2], 16
    %v1065 = vld [vmem:[%s1064] sm:$0xff]
    %v1066 = vld [vmem:[%s1064 + $0x10] sm:$0xff]
    %v1067 = vld [vmem:[%s1064 + $0x20] sm:$0xff]
    %v1068 = vld [vmem:[%s1064 + $0x30] sm:$0xff]
    %v1069 = vld [vmem:[%s1064 + $0x40] sm:$0xff]
    %v1070 = vld [vmem:[%s1064 + $0x50] sm:$0xff]
    %v1071 = vld [vmem:[%s1064 + $0x60] sm:$0xff]
    %v1072 = vld [vmem:[%s1064 + $0x70] sm:$0xff]
    %v1073 = vld [vmem:[%s1064 + $0xc0] sm:$0xff]
    %v1074 = vld [vmem:[%s1064 + $0xd0] sm:$0xff]
    %v1075 = vld [vmem:[%s1064 + $0xe0] sm:$0xff]
    %v1076 = vld [vmem:[%s1064 + $0xf0] sm:$0xff]
    %v1077 = vld [vmem:[%s1064 + $0x100] sm:$0xff]
    %v1078 = vld [vmem:[%s1064 + $0x110] sm:$0xff]
    %v1079 = vld [vmem:[%s1064 + $0x120] sm:$0xff]
    %v1080 = vld [vmem:[%s1064 + $0x130] sm:$0xff]
    %1097 = vrot.lane.b32.xlu0 %v1065, 100
    %v1098 = vpop.permute.xlu0 %1097
    %1099 = vrot.lane.b32.xlu0 %v1066, 100
    %v1100 = vpop.permute.xlu0 %1099
    %1101 = vrot.lane.b32.xlu0 %v1067, 100
    %v1102 = vpop.permute.xlu0 %1101
    %1103 = vrot.lane.b32.xlu0 %v1068, 100
    %v1104 = vpop.permute.xlu0 %1103
    %1105 = vrot.lane.b32.xlu0 %v1069, 100
    %v1106 = vpop.permute.xlu0 %1105
    %1107 = vrot.lane.b32.xlu0 %v1070, 100
    %v1108 = vpop.permute.xlu0 %1107
    %1109 = vrot.lane.b32.xlu0 %v1071, 100
    %v1110 = vpop.permute.xlu0 %1109
    %1111 = vrot.lane.b32.xlu0 %v1072, 100
    %v1112 = vpop.permute.xlu0 %1111
    %1113 = vrot.lane.b32.xlu0 %v1073, 100
    %v1114 = vpop.permute.xlu0 %1113
    %1115 = vrot.lane.b32.xlu0 %v1074, 100
    %v1116 = vpop.permute.xlu0 %1115
    %1117 = vrot.lane.b32.xlu0 %v1075, 100
    %v1118 = vpop.permute.xlu0 %1117
    %1119 = vrot.lane.b32.xlu0 %v1076, 100
    %v1120 = vpop.permute.xlu0 %1119
    %1121 = vrot.lane.b32.xlu0 %v1077, 100
    %v1122 = vpop.permute.xlu0 %1121
    %1123 = vrot.lane.b32.xlu0 %v1078, 100
    %v1124 = vpop.permute.xlu0 %1123
    %1125 = vrot.lane.b32.xlu0 %v1079, 100
    %v1126 = vpop.permute.xlu0 %1125
    %1127 = vrot.lane.b32.xlu0 %v1080, 100
    %v1128 = vpop.permute.xlu0 %1127
    %vm1145 = vcmask 982816
    %1146 = vst.msk [vmem:[#allocation3] sm:$0xff] %vm1145, %v1098
    %1147 = vst.msk [vmem:[#allocation3 + $0x20] sm:$0xff] %vm1145, %v1100
    %1148 = vst.msk [vmem:[#allocation3 + $0x40] sm:$0xff] %vm1145, %v1102
    %1149 = vst.msk [vmem:[#allocation3 + $0x60] sm:$0xff] %vm1145, %v1104
    %1150 = vst.msk [vmem:[#allocation3 + $0x80] sm:$0xff] %vm1145, %v1106
    %1151 = vst.msk [vmem:[#allocation3 + $0xa0] sm:$0xff] %vm1145, %v1108
    %1152 = vst.msk [vmem:[#allocation3 + $0xc0] sm:$0xff] %vm1145, %v1110
    %1153 = vst.msk [vmem:[#allocation3 + $0xe0] sm:$0xff] %vm1145, %v1112
    %1154 = vst.msk [vmem:[#allocation3 + $0x100] sm:$0xff] %vm1145, %v1114
    %1155 = vst.msk [vmem:[#allocation3 + $0x120] sm:$0xff] %vm1145, %v1116
    %1156 = vst.msk [vmem:[#allocation3 + $0x140] sm:$0xff] %vm1145, %v1118
    %1157 = vst.msk [vmem:[#allocation3 + $0x160] sm:$0xff] %vm1145, %v1120
    %1158 = vst.msk [vmem:[#allocation3 + $0x180] sm:$0xff] %vm1145, %v1122
    %1159 = vst.msk [vmem:[#allocation3 + $0x1a0] sm:$0xff] %vm1145, %v1124
    %1160 = vst.msk [vmem:[#allocation3 + $0x1c0] sm:$0xff] %vm1145, %v1126
    %1161 = vst.msk [vmem:[#allocation3 + $0x1e0] sm:$0xff] %vm1145, %v1128
    %v1162 = vld [vmem:[%s1064 + $0x1] sm:$0xff]
    %v1163 = vld [vmem:[%s1064 + $0x11] sm:$0xff]
    %v1164 = vld [vmem:[%s1064 + $0x21] sm:$0xff]
    %v1165 = vld [vmem:[%s1064 + $0x31] sm:$0xff]
    %v1166 = vld [vmem:[%s1064 + $0x41] sm:$0xff]
    %v1167 = vld [vmem:[%s1064 + $0x51] sm:$0xff]
    %v1168 = vld [vmem:[%s1064 + $0x61] sm:$0xff]
    %v1169 = vld [vmem:[%s1064 + $0x71] sm:$0xff]
    %v1170 = vld [vmem:[%s1064 + $0xc1] sm:$0xff]
    %v1171 = vld [vmem:[%s1064 + $0xd1] sm:$0xff]
    %v1172 = vld [vmem:[%s1064 + $0xe1] sm:$0xff]
    %v1173 = vld [vmem:[%s1064 + $0xf1] sm:$0xff]
    %v1174 = vld [vmem:[%s1064 + $0x101] sm:$0xff]
    %v1175 = vld [vmem:[%s1064 + $0x111] sm:$0xff]
    %v1176 = vld [vmem:[%s1064 + $0x121] sm:$0xff]
    %v1177 = vld [vmem:[%s1064 + $0x131] sm:$0xff]
    %1194 = vrot.lane.b32.xlu0 %v1162, 120
    %v1195 = vpop.permute.xlu0 %1194
    %1196 = vrot.lane.b32.xlu0 %v1163, 120
    %v1197 = vpop.permute.xlu0 %1196
    %1198 = vrot.lane.b32.xlu0 %v1164, 120
    %v1199 = vpop.permute.xlu0 %1198
    %1200 = vrot.lane.b32.xlu0 %v1165, 120
    %v1201 = vpop.permute.xlu0 %1200
    %1202 = vrot.lane.b32.xlu0 %v1166, 120
    %v1203 = vpop.permute.xlu0 %1202
    %1204 = vrot.lane.b32.xlu0 %v1167, 120
    %v1205 = vpop.permute.xlu0 %1204
    %1206 = vrot.lane.b32.xlu0 %v1168, 120
    %v1207 = vpop.permute.xlu0 %1206
    %1208 = vrot.lane.b32.xlu0 %v1169, 120
    %v1209 = vpop.permute.xlu0 %1208
    %1210 = vrot.lane.b32.xlu0 %v1170, 120
    %v1211 = vpop.permute.xlu0 %1210
    %1212 = vrot.lane.b32.xlu0 %v1171, 120
    %v1213 = vpop.permute.xlu0 %1212
    %1214 = vrot.lane.b32.xlu0 %v1172, 120
    %v1215 = vpop.permute.xlu0 %1214
    %1216 = vrot.lane.b32.xlu0 %v1173, 120
    %v1217 = vpop.permute.xlu0 %1216
    %1218 = vrot.lane.b32.xlu0 %v1174, 120
    %v1219 = vpop.permute.xlu0 %1218
    %1220 = vrot.lane.b32.xlu0 %v1175, 120
    %v1221 = vpop.permute.xlu0 %1220
    %1222 = vrot.lane.b32.xlu0 %v1176, 120
    %v1223 = vpop.permute.xlu0 %1222
    %1224 = vrot.lane.b32.xlu0 %v1177, 120
    %v1225 = vpop.permute.xlu0 %1224
    %vm1242 = vcmask 1048512
    %1243 = vst.msk [vmem:[#allocation3] sm:$0xff] %vm1242, %v1195
    %vm1244 = vcmask 97280
    %1245 = vst.msk [vmem:[#allocation3 + $0x8] sm:$0xff] %vm1244, %v1195
    %1246 = vst.msk [vmem:[#allocation3 + $0x20] sm:$0xff] %vm1242, %v1197
    %1247 = vst.msk [vmem:[#allocation3 + $0x28] sm:$0xff] %vm1244, %v1197
    %1248 = vst.msk [vmem:[#allocation3 + $0x40] sm:$0xff] %vm1242, %v1199
    %1249 = vst.msk [vmem:[#allocation3 + $0x48] sm:$0xff] %vm1244, %v1199
    %1250 = vst.msk [vmem:[#allocation3 + $0x60] sm:$0xff] %vm1242, %v1201
    %1251 = vst.msk [vmem:[#allocation3 + $0x68] sm:$0xff] %vm1244, %v1201
    %1252 = vst.msk [vmem:[#allocation3 + $0x80] sm:$0xff] %vm1242, %v1203
    %1253 = vst.msk [vmem:[#allocation3 + $0x88] sm:$0xff] %vm1244, %v1203
    %1254 = vst.msk [vmem:[#allocation3 + $0xa0] sm:$0xff] %vm1242, %v1205
    %1255 = vst.msk [vmem:[#allocation3 + $0xa8] sm:$0xff] %vm1244, %v1205
    %1256 = vst.msk [vmem:[#allocation3 + $0xc0] sm:$0xff] %vm1242, %v1207
    %1257 = vst.msk [vmem:[#allocation3 + $0xc8] sm:$0xff] %vm1244, %v1207
    %1258 = vst.msk [vmem:[#allocation3 + $0xe0] sm:$0xff] %vm1242, %v1209
    %1259 = vst.msk [vmem:[#allocation3 + $0xe8] sm:$0xff] %vm1244, %v1209
    %1260 = vst.msk [vmem:[#allocation3 + $0x100] sm:$0xff] %vm1242, %v1211
    %1261 = vst.msk [vmem:[#allocation3 + $0x108] sm:$0xff] %vm1244, %v1211
    %1262 = vst.msk [vmem:[#allocation3 + $0x120] sm:$0xff] %vm1242, %v1213
    %1263 = vst.msk [vmem:[#allocation3 + $0x128] sm:$0xff] %vm1244, %v1213
    %1264 = vst.msk [vmem:[#allocation3 + $0x140] sm:$0xff] %vm1242, %v1215
    %1265 = vst.msk [vmem:[#allocation3 + $0x148] sm:$0xff] %vm1244, %v1215
    %1266 = vst.msk [vmem:[#allocation3 + $0x160] sm:$0xff] %vm1242, %v1217
    %1267 = vst.msk [vmem:[#allocation3 + $0x168] sm:$0xff] %vm1244, %v1217
    %1268 = vst.msk [vmem:[#allocation3 + $0x180] sm:$0xff] %vm1242, %v1219
    %1269 = vst.msk [vmem:[#allocation3 + $0x188] sm:$0xff] %vm1244, %v1219
    %1270 = vst.msk [vmem:[#allocation3 + $0x1a0] sm:$0xff] %vm1242, %v1221
    %1271 = vst.msk [vmem:[#allocation3 + $0x1a8] sm:$0xff] %vm1244, %v1221
    %1272 = vst.msk [vmem:[#allocation3 + $0x1c0] sm:$0xff] %vm1242, %v1223
    %1273 = vst.msk [vmem:[#allocation3 + $0x1c8] sm:$0xff] %vm1244, %v1223
    %1274 = vst.msk [vmem:[#allocation3 + $0x1e0] sm:$0xff] %vm1242, %v1225
    %1275 = vst.msk [vmem:[#allocation3 + $0x1e8] sm:$0xff] %vm1244, %v1225
    %v1276 = vld [vmem:[%s1064 + $0x2] sm:$0xff]
    %v1277 = vld [vmem:[%s1064 + $0x12] sm:$0xff]
    %v1278 = vld [vmem:[%s1064 + $0x22] sm:$0xff]
    %v1279 = vld [vmem:[%s1064 + $0x32] sm:$0xff]
    %v1280 = vld [vmem:[%s1064 + $0x42] sm:$0xff]
    %v1281 = vld [vmem:[%s1064 + $0x52] sm:$0xff]
    %v1282 = vld [vmem:[%s1064 + $0x62] sm:$0xff]
    %v1283 = vld [vmem:[%s1064 + $0x72] sm:$0xff]
    %v1284 = vld [vmem:[%s1064 + $0xc2] sm:$0xff]
    %v1285 = vld [vmem:[%s1064 + $0xd2] sm:$0xff]
    %v1286 = vld [vmem:[%s1064 + $0xe2] sm:$0xff]
    %v1287 = vld [vmem:[%s1064 + $0xf2] sm:$0xff]
    %v1288 = vld [vmem:[%s1064 + $0x102] sm:$0xff]
    %v1289 = vld [vmem:[%s1064 + $0x112] sm:$0xff]
    %v1290 = vld [vmem:[%s1064 + $0x122] sm:$0xff]
    %v1291 = vld [vmem:[%s1064 + $0x132] sm:$0xff]
    %1308 = vrot.lane.b32.xlu0 %v1276, 12
    %v1309 = vpop.permute.xlu0 %1308
    %1310 = vrot.lane.b32.xlu0 %v1277, 12
    %v1311 = vpop.permute.xlu0 %1310
    %1312 = vrot.lane.b32.xlu0 %v1278, 12
    %v1313 = vpop.permute.xlu0 %1312
    %1314 = vrot.lane.b32.xlu0 %v1279, 12
    %v1315 = vpop.permute.xlu0 %1314
    %1316 = vrot.lane.b32.xlu0 %v1280, 12
    %v1317 = vpop.permute.xlu0 %1316
    %1318 = vrot.lane.b32.xlu0 %v1281, 12
    %v1319 = vpop.permute.xlu0 %1318
    %1320 = vrot.lane.b32.xlu0 %v1282, 12
    %v1321 = vpop.permute.xlu0 %1320
    %1322 = vrot.lane.b32.xlu0 %v1283, 12
    %v1323 = vpop.permute.xlu0 %1322
    %1324 = vrot.lane.b32.xlu0 %v1284, 12
    %v1325 = vpop.permute.xlu0 %1324
    %1326 = vrot.lane.b32.xlu0 %v1285, 12
    %v1327 = vpop.permute.xlu0 %1326
    %1328 = vrot.lane.b32.xlu0 %v1286, 12
    %v1329 = vpop.permute.xlu0 %1328
    %1330 = vrot.lane.b32.xlu0 %v1287, 12
    %v1331 = vpop.permute.xlu0 %1330
    %1332 = vrot.lane.b32.xlu0 %v1288, 12
    %v1333 = vpop.permute.xlu0 %1332
    %1334 = vrot.lane.b32.xlu0 %v1289, 12
    %v1335 = vpop.permute.xlu0 %1334
    %1336 = vrot.lane.b32.xlu0 %v1290, 12
    %v1337 = vpop.permute.xlu0 %1336
    %1338 = vrot.lane.b32.xlu0 %v1291, 12
    %v1339 = vpop.permute.xlu0 %1338
    %vm1356 = vcmask 261216
    %1357 = vst.msk [vmem:[#allocation3 + $0x8] sm:$0xff] %vm1356, %v1309
    %1358 = vst.msk [vmem:[#allocation3 + $0x28] sm:$0xff] %vm1356, %v1311
    %1359 = vst.msk [vmem:[#allocation3 + $0x48] sm:$0xff] %vm1356, %v1313
    %1360 = vst.msk [vmem:[#allocation3 + $0x68] sm:$0xff] %vm1356, %v1315
    %1361 = vst.msk [vmem:[#allocation3 + $0x88] sm:$0xff] %vm1356, %v1317
    %1362 = vst.msk [vmem:[#allocation3 + $0xa8] sm:$0xff] %vm1356, %v1319
    %1363 = vst.msk [vmem:[#allocation3 + $0xc8] sm:$0xff] %vm1356, %v1321
    %1364 = vst.msk [vmem:[#allocation3 + $0xe8] sm:$0xff] %vm1356, %v1323
    %1365 = vst.msk [vmem:[#allocation3 + $0x108] sm:$0xff] %vm1356, %v1325
    %1366 = vst.msk [vmem:[#allocation3 + $0x128] sm:$0xff] %vm1356, %v1327
    %1367 = vst.msk [vmem:[#allocation3 + $0x148] sm:$0xff] %vm1356, %v1329
    %1368 = vst.msk [vmem:[#allocation3 + $0x168] sm:$0xff] %vm1356, %v1331
    %1369 = vst.msk [vmem:[#allocation3 + $0x188] sm:$0xff] %vm1356, %v1333
    %1370 = vst.msk [vmem:[#allocation3 + $0x1a8] sm:$0xff] %vm1356, %v1335
    %1371 = vst.msk [vmem:[#allocation3 + $0x1c8] sm:$0xff] %vm1356, %v1337
    %1372 = vst.msk [vmem:[#allocation3 + $0x1e8] sm:$0xff] %vm1356, %v1339
    %v1373 = vld [vmem:[%s1064 + $0x3] sm:$0xff]
    %v1374 = vld [vmem:[%s1064 + $0x13] sm:$0xff]
    %v1375 = vld [vmem:[%s1064 + $0x23] sm:$0xff]
    %v1376 = vld [vmem:[%s1064 + $0x33] sm:$0xff]
    %v1377 = vld [vmem:[%s1064 + $0x43] sm:$0xff]
    %v1378 = vld [vmem:[%s1064 + $0x53] sm:$0xff]
    %v1379 = vld [vmem:[%s1064 + $0x63] sm:$0xff]
    %v1380 = vld [vmem:[%s1064 + $0x73] sm:$0xff]
    %v1381 = vld [vmem:[%s1064 + $0xc3] sm:$0xff]
    %v1382 = vld [vmem:[%s1064 + $0xd3] sm:$0xff]
    %v1383 = vld [vmem:[%s1064 + $0xe3] sm:$0xff]
    %v1384 = vld [vmem:[%s1064 + $0xf3] sm:$0xff]
    %v1385 = vld [vmem:[%s1064 + $0x103] sm:$0xff]
    %v1386 = vld [vmem:[%s1064 + $0x113] sm:$0xff]
    %v1387 = vld [vmem:[%s1064 + $0x123] sm:$0xff]
    %v1388 = vld [vmem:[%s1064 + $0x133] sm:$0xff]
    %1405 = vrot.lane.b32.xlu0 %v1373, 32
    %v1406 = vpop.permute.xlu0 %1405
    %1407 = vrot.lane.b32.xlu0 %v1374, 32
    %v1408 = vpop.permute.xlu0 %1407
    %1409 = vrot.lane.b32.xlu0 %v1375, 32
    %v1410 = vpop.permute.xlu0 %1409
    %1411 = vrot.lane.b32.xlu0 %v1376, 32
    %v1412 = vpop.permute.xlu0 %1411
    %1413 = vrot.lane.b32.xlu0 %v1377, 32
    %v1414 = vpop.permute.xlu0 %1413
    %1415 = vrot.lane.b32.xlu0 %v1378, 32
    %v1416 = vpop.permute.xlu0 %1415
    %1417 = vrot.lane.b32.xlu0 %v1379, 32
    %v1418 = vpop.permute.xlu0 %1417
    %1419 = vrot.lane.b32.xlu0 %v1380, 32
    %v1420 = vpop.permute.xlu0 %1419
    %1421 = vrot.lane.b32.xlu0 %v1381, 32
    %v1422 = vpop.permute.xlu0 %1421
    %1423 = vrot.lane.b32.xlu0 %v1382, 32
    %v1424 = vpop.permute.xlu0 %1423
    %1425 = vrot.lane.b32.xlu0 %v1383, 32
    %v1426 = vpop.permute.xlu0 %1425
    %1427 = vrot.lane.b32.xlu0 %v1384, 32
    %v1428 = vpop.permute.xlu0 %1427
    %1429 = vrot.lane.b32.xlu0 %v1385, 32
    %v1430 = vpop.permute.xlu0 %1429
    %1431 = vrot.lane.b32.xlu0 %v1386, 32
    %v1432 = vpop.permute.xlu0 %1431
    %1433 = vrot.lane.b32.xlu0 %v1387, 32
    %v1434 = vpop.permute.xlu0 %1433
    %1435 = vrot.lane.b32.xlu0 %v1388, 32
    %v1436 = vpop.permute.xlu0 %1435
    %vm1453 = vcmask 425216
    %1454 = vst.msk [vmem:[#allocation3 + $0x8] sm:$0xff] %vm1453, %v1406
    %1455 = vst.msk [vmem:[#allocation3 + $0x28] sm:$0xff] %vm1453, %v1408
    %1456 = vst.msk [vmem:[#allocation3 + $0x48] sm:$0xff] %vm1453, %v1410
    %1457 = vst.msk [vmem:[#allocation3 + $0x68] sm:$0xff] %vm1453, %v1412
    %1458 = vst.msk [vmem:[#allocation3 + $0x88] sm:$0xff] %vm1453, %v1414
    %1459 = vst.msk [vmem:[#allocation3 + $0xa8] sm:$0xff] %vm1453, %v1416
    %1460 = vst.msk [vmem:[#allocation3 + $0xc8] sm:$0xff] %vm1453, %v1418
    %1461 = vst.msk [vmem:[#allocation3 + $0xe8] sm:$0xff] %vm1453, %v1420
    %1462 = vst.msk [vmem:[#allocation3 + $0x108] sm:$0xff] %vm1453, %v1422
    %1463 = vst.msk [vmem:[#allocation3 + $0x128] sm:$0xff] %vm1453, %v1424
    %1464 = vst.msk [vmem:[#allocation3 + $0x148] sm:$0xff] %vm1453, %v1426
    %1465 = vst.msk [vmem:[#allocation3 + $0x168] sm:$0xff] %vm1453, %v1428
    %1466 = vst.msk [vmem:[#allocation3 + $0x188] sm:$0xff] %vm1453, %v1430
    %1467 = vst.msk [vmem:[#allocation3 + $0x1a8] sm:$0xff] %vm1453, %v1432
    %1468 = vst.msk [vmem:[#allocation3 + $0x1c8] sm:$0xff] %vm1453, %v1434
    %1469 = vst.msk [vmem:[#allocation3 + $0x1e8] sm:$0xff] %vm1453, %v1436
    %v1470 = vld [vmem:[%s1064 + $0x4] sm:$0xff]
    %v1471 = vld [vmem:[%s1064 + $0x14] sm:$0xff]
    %v1472 = vld [vmem:[%s1064 + $0x24] sm:$0xff]
    %v1473 = vld [vmem:[%s1064 + $0x34] sm:$0xff]
    %v1474 = vld [vmem:[%s1064 + $0x44] sm:$0xff]
    %v1475 = vld [vmem:[%s1064 + $0x54] sm:$0xff]
    %v1476 = vld [vmem:[%s1064 + $0x64] sm:$0xff]
    %v1477 = vld [vmem:[%s1064 + $0x74] sm:$0xff]
    %v1478 = vld [vmem:[%s1064 + $0xc4] sm:$0xff]
    %v1479 = vld [vmem:[%s1064 + $0xd4] sm:$0xff]
    %v1480 = vld [vmem:[%s1064 + $0xe4] sm:$0xff]
    %v1481 = vld [vmem:[%s1064 + $0xf4] sm:$0xff]
    %v1482 = vld [vmem:[%s1064 + $0x104] sm:$0xff]
    %v1483 = vld [vmem:[%s1064 + $0x114] sm:$0xff]
    %v1484 = vld [vmem:[%s1064 + $0x124] sm:$0xff]
    %v1485 = vld [vmem:[%s1064 + $0x134] sm:$0xff]
    %1502 = vrot.lane.b32.xlu0 %v1470, 52
    %v1503 = vpop.permute.xlu0 %1502
    %1504 = vrot.lane.b32.xlu0 %v1471, 52
    %v1505 = vpop.permute.xlu0 %1504
    %1506 = vrot.lane.b32.xlu0 %v1472, 52
    %v1507 = vpop.permute.xlu0 %1506
    %1508 = vrot.lane.b32.xlu0 %v1473, 52
    %v1509 = vpop.permute.xlu0 %1508
    %1510 = vrot.lane.b32.xlu0 %v1474, 52
    %v1511 = vpop.permute.xlu0 %1510
    %1512 = vrot.lane.b32.xlu0 %v1475, 52
    %v1513 = vpop.permute.xlu0 %1512
    %1514 = vrot.lane.b32.xlu0 %v1476, 52
    %v1515 = vpop.permute.xlu0 %1514
    %1516 = vrot.lane.b32.xlu0 %v1477, 52
    %v1517 = vpop.permute.xlu0 %1516
    %1518 = vrot.lane.b32.xlu0 %v1478, 52
    %v1519 = vpop.permute.xlu0 %1518
    %1520 = vrot.lane.b32.xlu0 %v1479, 52
    %v1521 = vpop.permute.xlu0 %1520
    %1522 = vrot.lane.b32.xlu0 %v1480, 52
    %v1523 = vpop.permute.xlu0 %1522
    %1524 = vrot.lane.b32.xlu0 %v1481, 52
    %v1525 = vpop.permute.xlu0 %1524
    %1526 = vrot.lane.b32.xlu0 %v1482, 52
    %v1527 = vpop.permute.xlu0 %1526
    %1528 = vrot.lane.b32.xlu0 %v1483, 52
    %v1529 = vpop.permute.xlu0 %1528
    %1530 = vrot.lane.b32.xlu0 %v1484, 52
    %v1531 = vpop.permute.xlu0 %1530
    %1532 = vrot.lane.b32.xlu0 %v1485, 52
    %v1533 = vpop.permute.xlu0 %1532
    %vm1550 = vcmask 589216
    %1551 = vst.msk [vmem:[#allocation3 + $0x8] sm:$0xff] %vm1550, %v1503
    %1552 = vst.msk [vmem:[#allocation3 + $0x28] sm:$0xff] %vm1550, %v1505
    %1553 = vst.msk [vmem:[#allocation3 + $0x48] sm:$0xff] %vm1550, %v1507
    %1554 = vst.msk [vmem:[#allocation3 + $0x68] sm:$0xff] %vm1550, %v1509
    %1555 = vst.msk [vmem:[#allocation3 + $0x88] sm:$0xff] %vm1550, %v1511
    %1556 = vst.msk [vmem:[#allocation3 + $0xa8] sm:$0xff] %vm1550, %v1513
    %1557 = vst.msk [vmem:[#allocation3 + $0xc8] sm:$0xff] %vm1550, %v1515
    %1558 = vst.msk [vmem:[#allocation3 + $0xe8] sm:$0xff] %vm1550, %v1517
    %1559 = vst.msk [vmem:[#allocation3 + $0x108] sm:$0xff] %vm1550, %v1519
    %1560 = vst.msk [vmem:[#allocation3 + $0x128] sm:$0xff] %vm1550, %v1521
    %1561 = vst.msk [vmem:[#allocation3 + $0x148] sm:$0xff] %vm1550, %v1523
    %1562 = vst.msk [vmem:[#allocation3 + $0x168] sm:$0xff] %vm1550, %v1525
    %1563 = vst.msk [vmem:[#allocation3 + $0x188] sm:$0xff] %vm1550, %v1527
    %1564 = vst.msk [vmem:[#allocation3 + $0x1a8] sm:$0xff] %vm1550, %v1529
    %1565 = vst.msk [vmem:[#allocation3 + $0x1c8] sm:$0xff] %vm1550, %v1531
    %1566 = vst.msk [vmem:[#allocation3 + $0x1e8] sm:$0xff] %vm1550, %v1533
    %s1567 = scalar_lea.vmem [#allocation2], 32
    %v1568 = vld [vmem:[%s1567] sm:$0xff]
    %v1569 = vld [vmem:[%s1567 + $0x10] sm:$0xff]
    %v1570 = vld [vmem:[%s1567 + $0x20] sm:$0xff]
    %v1571 = vld [vmem:[%s1567 + $0x30] sm:$0xff]
    %v1572 = vld [vmem:[%s1567 + $0x40] sm:$0xff]
    %v1573 = vld [vmem:[%s1567 + $0x50] sm:$0xff]
    %v1574 = vld [vmem:[%s1567 + $0x60] sm:$0xff]
    %v1575 = vld [vmem:[%s1567 + $0x70] sm:$0xff]
    %v1576 = vld [vmem:[%s1567 + $0xc0] sm:$0xff]
    %v1577 = vld [vmem:[%s1567 + $0xd0] sm:$0xff]
    %v1578 = vld [vmem:[%s1567 + $0xe0] sm:$0xff]
    %v1579 = vld [vmem:[%s1567 + $0xf0] sm:$0xff]
    %v1580 = vld [vmem:[%s1567 + $0x100] sm:$0xff]
    %v1581 = vld [vmem:[%s1567 + $0x110] sm:$0xff]
    %v1582 = vld [vmem:[%s1567 + $0x120] sm:$0xff]
    %v1583 = vld [vmem:[%s1567 + $0x130] sm:$0xff]
    %1600 = vrot.lane.b32.xlu0 %v1568, 72
    %v1601 = vpop.permute.xlu0 %1600
    %1602 = vrot.lane.b32.xlu0 %v1569, 72
    %v1603 = vpop.permute.xlu0 %1602
    %1604 = vrot.lane.b32.xlu0 %v1570, 72
    %v1605 = vpop.permute.xlu0 %1604
    %1606 = vrot.lane.b32.xlu0 %v1571, 72
    %v1607 = vpop.permute.xlu0 %1606
    %1608 = vrot.lane.b32.xlu0 %v1572, 72
    %v1609 = vpop.permute.xlu0 %1608
    %1610 = vrot.lane.b32.xlu0 %v1573, 72
    %v1611 = vpop.permute.xlu0 %1610
    %1612 = vrot.lane.b32.xlu0 %v1574, 72
    %v1613 = vpop.permute.xlu0 %1612
    %1614 = vrot.lane.b32.xlu0 %v1575, 72
    %v1615 = vpop.permute.xlu0 %1614
    %1616 = vrot.lane.b32.xlu0 %v1576, 72
    %v1617 = vpop.permute.xlu0 %1616
    %1618 = vrot.lane.b32.xlu0 %v1577, 72
    %v1619 = vpop.permute.xlu0 %1618
    %1620 = vrot.lane.b32.xlu0 %v1578, 72
    %v1621 = vpop.permute.xlu0 %1620
    %1622 = vrot.lane.b32.xlu0 %v1579, 72
    %v1623 = vpop.permute.xlu0 %1622
    %1624 = vrot.lane.b32.xlu0 %v1580, 72
    %v1625 = vpop.permute.xlu0 %1624
    %1626 = vrot.lane.b32.xlu0 %v1581, 72
    %v1627 = vpop.permute.xlu0 %1626
    %1628 = vrot.lane.b32.xlu0 %v1582, 72
    %v1629 = vpop.permute.xlu0 %1628
    %1630 = vrot.lane.b32.xlu0 %v1583, 72
    %v1631 = vpop.permute.xlu0 %1630
    %vm1648 = vcmask 753216
    %1649 = vst.msk [vmem:[#allocation3 + $0x8] sm:$0xff] %vm1648, %v1601
    %1650 = vst.msk [vmem:[#allocation3 + $0x28] sm:$0xff] %vm1648, %v1603
    %1651 = vst.msk [vmem:[#allocation3 + $0x48] sm:$0xff] %vm1648, %v1605
    %1652 = vst.msk [vmem:[#allocation3 + $0x68] sm:$0xff] %vm1648, %v1607
    %1653 = vst.msk [vmem:[#allocation3 + $0x88] sm:$0xff] %vm1648, %v1609
    %1654 = vst.msk [vmem:[#allocation3 + $0xa8] sm:$0xff] %vm1648, %v1611
    %1655 = vst.msk [vmem:[#allocation3 + $0xc8] sm:$0xff] %vm1648, %v1613
    %1656 = vst.msk [vmem:[#allocation3 + $0xe8] sm:$0xff] %vm1648, %v1615
    %1657 = vst.msk [vmem:[#allocation3 + $0x108] sm:$0xff] %vm1648, %v1617
    %1658 = vst.msk [vmem:[#allocation3 + $0x128] sm:$0xff] %vm1648, %v1619
    %1659 = vst.msk [vmem:[#allocation3 + $0x148] sm:$0xff] %vm1648, %v1621
    %1660 = vst.msk [vmem:[#allocation3 + $0x168] sm:$0xff] %vm1648, %v1623
    %1661 = vst.msk [vmem:[#allocation3 + $0x188] sm:$0xff] %vm1648, %v1625
    %1662 = vst.msk [vmem:[#allocation3 + $0x1a8] sm:$0xff] %vm1648, %v1627
    %1663 = vst.msk [vmem:[#allocation3 + $0x1c8] sm:$0xff] %vm1648, %v1629
    %1664 = vst.msk [vmem:[#allocation3 + $0x1e8] sm:$0xff] %vm1648, %v1631
    %v1665 = vld [vmem:[%s1567 + $0x1] sm:$0xff]
    %v1666 = vld [vmem:[%s1567 + $0x11] sm:$0xff]
    %v1667 = vld [vmem:[%s1567 + $0x21] sm:$0xff]
    %v1668 = vld [vmem:[%s1567 + $0x31] sm:$0xff]
    %v1669 = vld [vmem:[%s1567 + $0x41] sm:$0xff]
    %v1670 = vld [vmem:[%s1567 + $0x51] sm:$0xff]
    %v1671 = vld [vmem:[%s1567 + $0x61] sm:$0xff]
    %v1672 = vld [vmem:[%s1567 + $0x71] sm:$0xff]
    %v1673 = vld [vmem:[%s1567 + $0xc1] sm:$0xff]
    %v1674 = vld [vmem:[%s1567 + $0xd1] sm:$0xff]
    %v1675 = vld [vmem:[%s1567 + $0xe1] sm:$0xff]
    %v1676 = vld [vmem:[%s1567 + $0xf1] sm:$0xff]
    %v1677 = vld [vmem:[%s1567 + $0x101] sm:$0xff]
    %v1678 = vld [vmem:[%s1567 + $0x111] sm:$0xff]
    %v1679 = vld [vmem:[%s1567 + $0x121] sm:$0xff]
    %v1680 = vld [vmem:[%s1567 + $0x131] sm:$0xff]
    %1697 = vrot.lane.b32.xlu0 %v1665, 92
    %v1698 = vpop.permute.xlu0 %1697
    %1699 = vrot.lane.b32.xlu0 %v1666, 92
    %v1700 = vpop.permute.xlu0 %1699
    %1701 = vrot.lane.b32.xlu0 %v1667, 92
    %v1702 = vpop.permute.xlu0 %1701
    %1703 = vrot.lane.b32.xlu0 %v1668, 92
    %v1704 = vpop.permute.xlu0 %1703
    %1705 = vrot.lane.b32.xlu0 %v1669, 92
    %v1706 = vpop.permute.xlu0 %1705
    %1707 = vrot.lane.b32.xlu0 %v1670, 92
    %v1708 = vpop.permute.xlu0 %1707
    %1709 = vrot.lane.b32.xlu0 %v1671, 92
    %v1710 = vpop.permute.xlu0 %1709
    %1711 = vrot.lane.b32.xlu0 %v1672, 92
    %v1712 = vpop.permute.xlu0 %1711
    %1713 = vrot.lane.b32.xlu0 %v1673, 92
    %v1714 = vpop.permute.xlu0 %1713
    %1715 = vrot.lane.b32.xlu0 %v1674, 92
    %v1716 = vpop.permute.xlu0 %1715
    %1717 = vrot.lane.b32.xlu0 %v1675, 92
    %v1718 = vpop.permute.xlu0 %1717
    %1719 = vrot.lane.b32.xlu0 %v1676, 92
    %v1720 = vpop.permute.xlu0 %1719
    %1721 = vrot.lane.b32.xlu0 %v1677, 92
    %v1722 = vpop.permute.xlu0 %1721
    %1723 = vrot.lane.b32.xlu0 %v1678, 92
    %v1724 = vpop.permute.xlu0 %1723
    %1725 = vrot.lane.b32.xlu0 %v1679, 92
    %v1726 = vpop.permute.xlu0 %1725
    %1727 = vrot.lane.b32.xlu0 %v1680, 92
    %v1728 = vpop.permute.xlu0 %1727
    %vm1745 = vcmask 917216
    %1746 = vst.msk [vmem:[#allocation3 + $0x8] sm:$0xff] %vm1745, %v1698
    %1747 = vst.msk [vmem:[#allocation3 + $0x28] sm:$0xff] %vm1745, %v1700
    %1748 = vst.msk [vmem:[#allocation3 + $0x48] sm:$0xff] %vm1745, %v1702
    %1749 = vst.msk [vmem:[#allocation3 + $0x68] sm:$0xff] %vm1745, %v1704
    %1750 = vst.msk [vmem:[#allocation3 + $0x88] sm:$0xff] %vm1745, %v1706
    %1751 = vst.msk [vmem:[#allocation3 + $0xa8] sm:$0xff] %vm1745, %v1708
    %1752 = vst.msk [vmem:[#allocation3 + $0xc8] sm:$0xff] %vm1745, %v1710
    %1753 = vst.msk [vmem:[#allocation3 + $0xe8] sm:$0xff] %vm1745, %v1712
    %1754 = vst.msk [vmem:[#allocation3 + $0x108] sm:$0xff] %vm1745, %v1714
    %1755 = vst.msk [vmem:[#allocation3 + $0x128] sm:$0xff] %vm1745, %v1716
    %1756 = vst.msk [vmem:[#allocation3 + $0x148] sm:$0xff] %vm1745, %v1718
    %1757 = vst.msk [vmem:[#allocation3 + $0x168] sm:$0xff] %vm1745, %v1720
    %1758 = vst.msk [vmem:[#allocation3 + $0x188] sm:$0xff] %vm1745, %v1722
    %1759 = vst.msk [vmem:[#allocation3 + $0x1a8] sm:$0xff] %vm1745, %v1724
    %1760 = vst.msk [vmem:[#allocation3 + $0x1c8] sm:$0xff] %vm1745, %v1726
    %1761 = vst.msk [vmem:[#allocation3 + $0x1e8] sm:$0xff] %vm1745, %v1728
    %v1762 = vld [vmem:[%s1567 + $0x2] sm:$0xff]
    %v1763 = vld [vmem:[%s1567 + $0x12] sm:$0xff]
    %v1764 = vld [vmem:[%s1567 + $0x22] sm:$0xff]
    %v1765 = vld [vmem:[%s1567 + $0x32] sm:$0xff]
    %v1766 = vld [vmem:[%s1567 + $0x42] sm:$0xff]
    %v1767 = vld [vmem:[%s1567 + $0x52] sm:$0xff]
    %v1768 = vld [vmem:[%s1567 + $0x62] sm:$0xff]
    %v1769 = vld [vmem:[%s1567 + $0x72] sm:$0xff]
    %v1770 = vld [vmem:[%s1567 + $0xc2] sm:$0xff]
    %v1771 = vld [vmem:[%s1567 + $0xd2] sm:$0xff]
    %v1772 = vld [vmem:[%s1567 + $0xe2] sm:$0xff]
    %v1773 = vld [vmem:[%s1567 + $0xf2] sm:$0xff]
    %v1774 = vld [vmem:[%s1567 + $0x102] sm:$0xff]
    %v1775 = vld [vmem:[%s1567 + $0x112] sm:$0xff]
    %v1776 = vld [vmem:[%s1567 + $0x122] sm:$0xff]
    %v1777 = vld [vmem:[%s1567 + $0x132] sm:$0xff]
    %1794 = vrot.lane.b32.xlu0 %v1762, 112
    %v1795 = vpop.permute.xlu0 %1794
    %1796 = vrot.lane.b32.xlu0 %v1763, 112
    %v1797 = vpop.permute.xlu0 %1796
    %1798 = vrot.lane.b32.xlu0 %v1764, 112
    %v1799 = vpop.permute.xlu0 %1798
    %1800 = vrot.lane.b32.xlu0 %v1765, 112
    %v1801 = vpop.permute.xlu0 %1800
    %1802 = vrot.lane.b32.xlu0 %v1766, 112
    %v1803 = vpop.permute.xlu0 %1802
    %1804 = vrot.lane.b32.xlu0 %v1767, 112
    %v1805 = vpop.permute.xlu0 %1804
    %1806 = vrot.lane.b32.xlu0 %v1768, 112
    %v1807 = vpop.permute.xlu0 %1806
    %1808 = vrot.lane.b32.xlu0 %v1769, 112
    %v1809 = vpop.permute.xlu0 %1808
    %1810 = vrot.lane.b32.xlu0 %v1770, 112
    %v1811 = vpop.permute.xlu0 %1810
    %1812 = vrot.lane.b32.xlu0 %v1771, 112
    %v1813 = vpop.permute.xlu0 %1812
    %1814 = vrot.lane.b32.xlu0 %v1772, 112
    %v1815 = vpop.permute.xlu0 %1814
    %1816 = vrot.lane.b32.xlu0 %v1773, 112
    %v1817 = vpop.permute.xlu0 %1816
    %1818 = vrot.lane.b32.xlu0 %v1774, 112
    %v1819 = vpop.permute.xlu0 %1818
    %1820 = vrot.lane.b32.xlu0 %v1775, 112
    %v1821 = vpop.permute.xlu0 %1820
    %1822 = vrot.lane.b32.xlu0 %v1776, 112
    %v1823 = vpop.permute.xlu0 %1822
    %1824 = vrot.lane.b32.xlu0 %v1777, 112
    %v1825 = vpop.permute.xlu0 %1824
    %vm1842 = vcmask 1048448
    %1843 = vst.msk [vmem:[#allocation3 + $0x8] sm:$0xff] %vm1842, %v1795
    %vm1844 = vcmask 31744
    %1845 = vst.msk [vmem:[#allocation3 + $0x10] sm:$0xff] %vm1844, %v1795
    %1846 = vst.msk [vmem:[#allocation3 + $0x28] sm:$0xff] %vm1842, %v1797
    %1847 = vst.msk [vmem:[#allocation3 + $0x30] sm:$0xff] %vm1844, %v1797
    %1848 = vst.msk [vmem:[#allocation3 + $0x48] sm:$0xff] %vm1842, %v1799
    %1849 = vst.msk [vmem:[#allocation3 + $0x50] sm:$0xff] %vm1844, %v1799
    %1850 = vst.msk [vmem:[#allocation3 + $0x68] sm:$0xff] %vm1842, %v1801
    %1851 = vst.msk [vmem:[#allocation3 + $0x70] sm:$0xff] %vm1844, %v1801
    %1852 = vst.msk [vmem:[#allocation3 + $0x88] sm:$0xff] %vm1842, %v1803
    %1853 = vst.msk [vmem:[#allocation3 + $0x90] sm:$0xff] %vm1844, %v1803
    %1854 = vst.msk [vmem:[#allocation3 + $0xa8] sm:$0xff] %vm1842, %v1805
    %1855 = vst.msk [vmem:[#allocation3 + $0xb0] sm:$0xff] %vm1844, %v1805
    %1856 = vst.msk [vmem:[#allocation3 + $0xc8] sm:$0xff] %vm1842, %v1807
    %1857 = vst.msk [vmem:[#allocation3 + $0xd0] sm:$0xff] %vm1844, %v1807
    %1858 = vst.msk [vmem:[#allocation3 + $0xe8] sm:$0xff] %vm1842, %v1809
    %1859 = vst.msk [vmem:[#allocation3 + $0xf0] sm:$0xff] %vm1844, %v1809
    %1860 = vst.msk [vmem:[#allocation3 + $0x108] sm:$0xff] %vm1842, %v1811
    %1861 = vst.msk [vmem:[#allocation3 + $0x110] sm:$0xff] %vm1844, %v1811
    %1862 = vst.msk [vmem:[#allocation3 + $0x128] sm:$0xff] %vm1842, %v1813
    %1863 = vst.msk [vmem:[#allocation3 + $0x130] sm:$0xff] %vm1844, %v1813
    %1864 = vst.msk [vmem:[#allocation3 + $0x148] sm:$0xff] %vm1842, %v1815
    %1865 = vst.msk [vmem:[#allocation3 + $0x150] sm:$0xff] %vm1844, %v1815
    %1866 = vst.msk [vmem:[#allocation3 + $0x168] sm:$0xff] %vm1842, %v1817
    %1867 = vst.msk [vmem:[#allocation3 + $0x170] sm:$0xff] %vm1844, %v1817
    %1868 = vst.msk [vmem:[#allocation3 + $0x188] sm:$0xff] %vm1842, %v1819
    %1869 = vst.msk [vmem:[#allocation3 + $0x190] sm:$0xff] %vm1844, %v1819
    %1870 = vst.msk [vmem:[#allocation3 + $0x1a8] sm:$0xff] %vm1842, %v1821
    %1871 = vst.msk [vmem:[#allocation3 + $0x1b0] sm:$0xff] %vm1844, %v1821
    %1872 = vst.msk [vmem:[#allocation3 + $0x1c8] sm:$0xff] %vm1842, %v1823
    %1873 = vst.msk [vmem:[#allocation3 + $0x1d0] sm:$0xff] %vm1844, %v1823
    %1874 = vst.msk [vmem:[#allocation3 + $0x1e8] sm:$0xff] %vm1842, %v1825
    %1875 = vst.msk [vmem:[#allocation3 + $0x1f0] sm:$0xff] %vm1844, %v1825
    %v1876 = vld [vmem:[%s1567 + $0x3] sm:$0xff]
    %v1877 = vld [vmem:[%s1567 + $0x13] sm:$0xff]
    %v1878 = vld [vmem:[%s1567 + $0x23] sm:$0xff]
    %v1879 = vld [vmem:[%s1567 + $0x33] sm:$0xff]
    %v1880 = vld [vmem:[%s1567 + $0x43] sm:$0xff]
    %v1881 = vld [vmem:[%s1567 + $0x53] sm:$0xff]
    %v1882 = vld [vmem:[%s1567 + $0x63] sm:$0xff]
    %v1883 = vld [vmem:[%s1567 + $0x73] sm:$0xff]
    %v1884 = vld [vmem:[%s1567 + $0xc3] sm:$0xff]
    %v1885 = vld [vmem:[%s1567 + $0xd3] sm:$0xff]
    %v1886 = vld [vmem:[%s1567 + $0xe3] sm:$0xff]
    %v1887 = vld [vmem:[%s1567 + $0xf3] sm:$0xff]
    %v1888 = vld [vmem:[%s1567 + $0x103] sm:$0xff]
    %v1889 = vld [vmem:[%s1567 + $0x113] sm:$0xff]
    %v1890 = vld [vmem:[%s1567 + $0x123] sm:$0xff]
    %v1891 = vld [vmem:[%s1567 + $0x133] sm:$0xff]
    %1908 = vrot.lane.b32.xlu0 %v1876, 4
    %v1909 = vpop.permute.xlu0 %1908
    %1910 = vrot.lane.b32.xlu0 %v1877, 4
    %v1911 = vpop.permute.xlu0 %1910
    %1912 = vrot.lane.b32.xlu0 %v1878, 4
    %v1913 = vpop.permute.xlu0 %1912
    %1914 = vrot.lane.b32.xlu0 %v1879, 4
    %v1915 = vpop.permute.xlu0 %1914
    %1916 = vrot.lane.b32.xlu0 %v1880, 4
    %v1917 = vpop.permute.xlu0 %1916
    %1918 = vrot.lane.b32.xlu0 %v1881, 4
    %v1919 = vpop.permute.xlu0 %1918
    %1920 = vrot.lane.b32.xlu0 %v1882, 4
    %v1921 = vpop.permute.xlu0 %1920
    %1922 = vrot.lane.b32.xlu0 %v1883, 4
    %v1923 = vpop.permute.xlu0 %1922
    %1924 = vrot.lane.b32.xlu0 %v1884, 4
    %v1925 = vpop.permute.xlu0 %1924
    %1926 = vrot.lane.b32.xlu0 %v1885, 4
    %v1927 = vpop.permute.xlu0 %1926
    %1928 = vrot.lane.b32.xlu0 %v1886, 4
    %v1929 = vpop.permute.xlu0 %1928
    %1930 = vrot.lane.b32.xlu0 %v1887, 4
    %v1931 = vpop.permute.xlu0 %1930
    %1932 = vrot.lane.b32.xlu0 %v1888, 4
    %v1933 = vpop.permute.xlu0 %1932
    %1934 = vrot.lane.b32.xlu0 %v1889, 4
    %v1935 = vpop.permute.xlu0 %1934
    %1936 = vrot.lane.b32.xlu0 %v1890, 4
    %v1937 = vpop.permute.xlu0 %1936
    %1938 = vrot.lane.b32.xlu0 %v1891, 4
    %v1939 = vpop.permute.xlu0 %1938
    %vm1956 = vcmask 195616
    %1957 = vst.msk [vmem:[#allocation3 + $0x10] sm:$0xff] %vm1956, %v1909
    %1958 = vst.msk [vmem:[#allocation3 + $0x30] sm:$0xff] %vm1956, %v1911
    %1959 = vst.msk [vmem:[#allocation3 + $0x50] sm:$0xff] %vm1956, %v1913
    %1960 = vst.msk [vmem:[#allocation3 + $0x70] sm:$0xff] %vm1956, %v1915
    %1961 = vst.msk [vmem:[#allocation3 + $0x90] sm:$0xff] %vm1956, %v1917
    %1962 = vst.msk [vmem:[#allocation3 + $0xb0] sm:$0xff] %vm1956, %v1919
    %1963 = vst.msk [vmem:[#allocation3 + $0xd0] sm:$0xff] %vm1956, %v1921
    %1964 = vst.msk [vmem:[#allocation3 + $0xf0] sm:$0xff] %vm1956, %v1923
    %1965 = vst.msk [vmem:[#allocation3 + $0x110] sm:$0xff] %vm1956, %v1925
    %1966 = vst.msk [vmem:[#allocation3 + $0x130] sm:$0xff] %vm1956, %v1927
    %1967 = vst.msk [vmem:[#allocation3 + $0x150] sm:$0xff] %vm1956, %v1929
    %1968 = vst.msk [vmem:[#allocation3 + $0x170] sm:$0xff] %vm1956, %v1931
    %1969 = vst.msk [vmem:[#allocation3 + $0x190] sm:$0xff] %vm1956, %v1933
    %1970 = vst.msk [vmem:[#allocation3 + $0x1b0] sm:$0xff] %vm1956, %v1935
    %1971 = vst.msk [vmem:[#allocation3 + $0x1d0] sm:$0xff] %vm1956, %v1937
    %1972 = vst.msk [vmem:[#allocation3 + $0x1f0] sm:$0xff] %vm1956, %v1939
    %v1973 = vld [vmem:[%s1567 + $0x4] sm:$0xff]
    %v1974 = vld [vmem:[%s1567 + $0x14] sm:$0xff]
    %v1975 = vld [vmem:[%s1567 + $0x24] sm:$0xff]
    %v1976 = vld [vmem:[%s1567 + $0x34] sm:$0xff]
    %v1977 = vld [vmem:[%s1567 + $0x44] sm:$0xff]
    %v1978 = vld [vmem:[%s1567 + $0x54] sm:$0xff]
    %v1979 = vld [vmem:[%s1567 + $0x64] sm:$0xff]
    %v1980 = vld [vmem:[%s1567 + $0x74] sm:$0xff]
    %v1981 = vld [vmem:[%s1567 + $0xc4] sm:$0xff]
    %v1982 = vld [vmem:[%s1567 + $0xd4] sm:$0xff]
    %v1983 = vld [vmem:[%s1567 + $0xe4] sm:$0xff]
    %v1984 = vld [vmem:[%s1567 + $0xf4] sm:$0xff]
    %v1985 = vld [vmem:[%s1567 + $0x104] sm:$0xff]
    %v1986 = vld [vmem:[%s1567 + $0x114] sm:$0xff]
    %v1987 = vld [vmem:[%s1567 + $0x124] sm:$0xff]
    %v1988 = vld [vmem:[%s1567 + $0x134] sm:$0xff]
    %2005 = vrot.lane.b32.xlu0 %v1973, 24
    %v2006 = vpop.permute.xlu0 %2005
    %2007 = vrot.lane.b32.xlu0 %v1974, 24
    %v2008 = vpop.permute.xlu0 %2007
    %2009 = vrot.lane.b32.xlu0 %v1975, 24
    %v2010 = vpop.permute.xlu0 %2009
    %2011 = vrot.lane.b32.xlu0 %v1976, 24
    %v2012 = vpop.permute.xlu0 %2011
    %2013 = vrot.lane.b32.xlu0 %v1977, 24
    %v2014 = vpop.permute.xlu0 %2013
    %2015 = vrot.lane.b32.xlu0 %v1978, 24
    %v2016 = vpop.permute.xlu0 %2015
    %2017 = vrot.lane.b32.xlu0 %v1979, 24
    %v2018 = vpop.permute.xlu0 %2017
    %2019 = vrot.lane.b32.xlu0 %v1980, 24
    %v2020 = vpop.permute.xlu0 %2019
    %2021 = vrot.lane.b32.xlu0 %v1981, 24
    %v2022 = vpop.permute.xlu0 %2021
    %2023 = vrot.lane.b32.xlu0 %v1982, 24
    %v2024 = vpop.permute.xlu0 %2023
    %2025 = vrot.lane.b32.xlu0 %v1983, 24
    %v2026 = vpop.permute.xlu0 %2025
    %2027 = vrot.lane.b32.xlu0 %v1984, 24
    %v2028 = vpop.permute.xlu0 %2027
    %2029 = vrot.lane.b32.xlu0 %v1985, 24
    %v2030 = vpop.permute.xlu0 %2029
    %2031 = vrot.lane.b32.xlu0 %v1986, 24
    %v2032 = vpop.permute.xlu0 %2031
    %2033 = vrot.lane.b32.xlu0 %v1987, 24
    %v2034 = vpop.permute.xlu0 %2033
    %2035 = vrot.lane.b32.xlu0 %v1988, 24
    %v2036 = vpop.permute.xlu0 %2035
    %vm2053 = vcmask 359616
    %2054 = vst.msk [vmem:[#allocation3 + $0x10] sm:$0xff] %vm2053, %v2006
    %2055 = vst.msk [vmem:[#allocation3 + $0x30] sm:$0xff] %vm2053, %v2008
    %2056 = vst.msk [vmem:[#allocation3 + $0x50] sm:$0xff] %vm2053, %v2010
    %2057 = vst.msk [vmem:[#allocation3 + $0x70] sm:$0xff] %vm2053, %v2012
    %2058 = vst.msk [vmem:[#allocation3 + $0x90] sm:$0xff] %vm2053, %v2014
    %2059 = vst.msk [vmem:[#allocation3 + $0xb0] sm:$0xff] %vm2053, %v2016
    %2060 = vst.msk [vmem:[#allocation3 + $0xd0] sm:$0xff] %vm2053, %v2018
    %2061 = vst.msk [vmem:[#allocation3 + $0xf0] sm:$0xff] %vm2053, %v2020
    %2062 = vst.msk [vmem:[#allocation3 + $0x110] sm:$0xff] %vm2053, %v2022
    %2063 = vst.msk [vmem:[#allocation3 + $0x130] sm:$0xff] %vm2053, %v2024
    %2064 = vst.msk [vmem:[#allocation3 + $0x150] sm:$0xff] %vm2053, %v2026
    %2065 = vst.msk [vmem:[#allocation3 + $0x170] sm:$0xff] %vm2053, %v2028
    %2066 = vst.msk [vmem:[#allocation3 + $0x190] sm:$0xff] %vm2053, %v2030
    %2067 = vst.msk [vmem:[#allocation3 + $0x1b0] sm:$0xff] %vm2053, %v2032
    %2068 = vst.msk [vmem:[#allocation3 + $0x1d0] sm:$0xff] %vm2053, %v2034
    %2069 = vst.msk [vmem:[#allocation3 + $0x1f0] sm:$0xff] %vm2053, %v2036
    %s2070 = scalar_lea.vmem [#allocation2], 48
    %v2071 = vld [vmem:[%s2070] sm:$0xff]
    %v2072 = vld [vmem:[%s2070 + $0x10] sm:$0xff]
    %v2073 = vld [vmem:[%s2070 + $0x20] sm:$0xff]
    %v2074 = vld [vmem:[%s2070 + $0x30] sm:$0xff]
    %v2075 = vld [vmem:[%s2070 + $0x40] sm:$0xff]
    %v2076 = vld [vmem:[%s2070 + $0x50] sm:$0xff]
    %v2077 = vld [vmem:[%s2070 + $0x60] sm:$0xff]
    %v2078 = vld [vmem:[%s2070 + $0x70] sm:$0xff]
    %v2079 = vld [vmem:[%s2070 + $0xc0] sm:$0xff]
    %v2080 = vld [vmem:[%s2070 + $0xd0] sm:$0xff]
    %v2081 = vld [vmem:[%s2070 + $0xe0] sm:$0xff]
    %v2082 = vld [vmem:[%s2070 + $0xf0] sm:$0xff]
    %v2083 = vld [vmem:[%s2070 + $0x100] sm:$0xff]
    %v2084 = vld [vmem:[%s2070 + $0x110] sm:$0xff]
    %v2085 = vld [vmem:[%s2070 + $0x120] sm:$0xff]
    %v2086 = vld [vmem:[%s2070 + $0x130] sm:$0xff]
    %2103 = vrot.lane.b32.xlu0 %v2071, 44
    %v2104 = vpop.permute.xlu0 %2103
    %2105 = vrot.lane.b32.xlu0 %v2072, 44
    %v2106 = vpop.permute.xlu0 %2105
    %2107 = vrot.lane.b32.xlu0 %v2073, 44
    %v2108 = vpop.permute.xlu0 %2107
    %2109 = vrot.lane.b32.xlu0 %v2074, 44
    %v2110 = vpop.permute.xlu0 %2109
    %2111 = vrot.lane.b32.xlu0 %v2075, 44
    %v2112 = vpop.permute.xlu0 %2111
    %2113 = vrot.lane.b32.xlu0 %v2076, 44
    %v2114 = vpop.permute.xlu0 %2113
    %2115 = vrot.lane.b32.xlu0 %v2077, 44
    %v2116 = vpop.permute.xlu0 %2115
    %2117 = vrot.lane.b32.xlu0 %v2078, 44
    %v2118 = vpop.permute.xlu0 %2117
    %2119 = vrot.lane.b32.xlu0 %v2079, 44
    %v2120 = vpop.permute.xlu0 %2119
    %2121 = vrot.lane.b32.xlu0 %v2080, 44
    %v2122 = vpop.permute.xlu0 %2121
    %2123 = vrot.lane.b32.xlu0 %v2081, 44
    %v2124 = vpop.permute.xlu0 %2123
    %2125 = vrot.lane.b32.xlu0 %v2082, 44
    %v2126 = vpop.permute.xlu0 %2125
    %2127 = vrot.lane.b32.xlu0 %v2083, 44
    %v2128 = vpop.permute.xlu0 %2127
    %2129 = vrot.lane.b32.xlu0 %v2084, 44
    %v2130 = vpop.permute.xlu0 %2129
    %2131 = vrot.lane.b32.xlu0 %v2085, 44
    %v2132 = vpop.permute.xlu0 %2131
    %2133 = vrot.lane.b32.xlu0 %v2086, 44
    %v2134 = vpop.permute.xlu0 %2133
    %vm2151 = vcmask 523616
    %2152 = vst.msk [vmem:[#allocation3 + $0x10] sm:$0xff] %vm2151, %v2104
    %2153 = vst.msk [vmem:[#allocation3 + $0x30] sm:$0xff] %vm2151, %v2106
    %2154 = vst.msk [vmem:[#allocation3 + $0x50] sm:$0xff] %vm2151, %v2108
    %2155 = vst.msk [vmem:[#allocation3 + $0x70] sm:$0xff] %vm2151, %v2110
    %2156 = vst.msk [vmem:[#allocation3 + $0x90] sm:$0xff] %vm2151, %v2112
    %2157 = vst.msk [vmem:[#allocation3 + $0xb0] sm:$0xff] %vm2151, %v2114
    %2158 = vst.msk [vmem:[#allocation3 + $0xd0] sm:$0xff] %vm2151, %v2116
    %2159 = vst.msk [vmem:[#allocation3 + $0xf0] sm:$0xff] %vm2151, %v2118
    %2160 = vst.msk [vmem:[#allocation3 + $0x110] sm:$0xff] %vm2151, %v2120
    %2161 = vst.msk [vmem:[#allocation3 + $0x130] sm:$0xff] %vm2151, %v2122
    %2162 = vst.msk [vmem:[#allocation3 + $0x150] sm:$0xff] %vm2151, %v2124
    %2163 = vst.msk [vmem:[#allocation3 + $0x170] sm:$0xff] %vm2151, %v2126
    %2164 = vst.msk [vmem:[#allocation3 + $0x190] sm:$0xff] %vm2151, %v2128
    %2165 = vst.msk [vmem:[#allocation3 + $0x1b0] sm:$0xff] %vm2151, %v2130
    %2166 = vst.msk [vmem:[#allocation3 + $0x1d0] sm:$0xff] %vm2151, %v2132
    %2167 = vst.msk [vmem:[#allocation3 + $0x1f0] sm:$0xff] %vm2151, %v2134
    %v2168 = vld [vmem:[%s2070 + $0x1] sm:$0xff]
    %v2169 = vld [vmem:[%s2070 + $0x11] sm:$0xff]
    %v2170 = vld [vmem:[%s2070 + $0x21] sm:$0xff]
    %v2171 = vld [vmem:[%s2070 + $0x31] sm:$0xff]
    %v2172 = vld [vmem:[%s2070 + $0x41] sm:$0xff]
    %v2173 = vld [vmem:[%s2070 + $0x51] sm:$0xff]
    %v2174 = vld [vmem:[%s2070 + $0x61] sm:$0xff]
    %v2175 = vld [vmem:[%s2070 + $0x71] sm:$0xff]
    %v2176 = vld [vmem:[%s2070 + $0xc1] sm:$0xff]
    %v2177 = vld [vmem:[%s2070 + $0xd1] sm:$0xff]
    %v2178 = vld [vmem:[%s2070 + $0xe1] sm:$0xff]
    %v2179 = vld [vmem:[%s2070 + $0xf1] sm:$0xff]
    %v2180 = vld [vmem:[%s2070 + $0x101] sm:$0xff]
    %v2181 = vld [vmem:[%s2070 + $0x111] sm:$0xff]
    %v2182 = vld [vmem:[%s2070 + $0x121] sm:$0xff]
    %v2183 = vld [vmem:[%s2070 + $0x131] sm:$0xff]
    %2200 = vrot.lane.b32.xlu0 %v2168, 64
    %v2201 = vpop.permute.xlu0 %2200
    %2202 = vrot.lane.b32.xlu0 %v2169, 64
    %v2203 = vpop.permute.xlu0 %2202
    %2204 = vrot.lane.b32.xlu0 %v2170, 64
    %v2205 = vpop.permute.xlu0 %2204
    %2206 = vrot.lane.b32.xlu0 %v2171, 64
    %v2207 = vpop.permute.xlu0 %2206
    %2208 = vrot.lane.b32.xlu0 %v2172, 64
    %v2209 = vpop.permute.xlu0 %2208
    %2210 = vrot.lane.b32.xlu0 %v2173, 64
    %v2211 = vpop.permute.xlu0 %2210
    %2212 = vrot.lane.b32.xlu0 %v2174, 64
    %v2213 = vpop.permute.xlu0 %2212
    %2214 = vrot.lane.b32.xlu0 %v2175, 64
    %v2215 = vpop.permute.xlu0 %2214
    %2216 = vrot.lane.b32.xlu0 %v2176, 64
    %v2217 = vpop.permute.xlu0 %2216
    %2218 = vrot.lane.b32.xlu0 %v2177, 64
    %v2219 = vpop.permute.xlu0 %2218
    %2220 = vrot.lane.b32.xlu0 %v2178, 64
    %v2221 = vpop.permute.xlu0 %2220
    %2222 = vrot.lane.b32.xlu0 %v2179, 64
    %v2223 = vpop.permute.xlu0 %2222
    %2224 = vrot.lane.b32.xlu0 %v2180, 64
    %v2225 = vpop.permute.xlu0 %2224
    %2226 = vrot.lane.b32.xlu0 %v2181, 64
    %v2227 = vpop.permute.xlu0 %2226
    %2228 = vrot.lane.b32.xlu0 %v2182, 64
    %v2229 = vpop.permute.xlu0 %2228
    %2230 = vrot.lane.b32.xlu0 %v2183, 64
    %v2231 = vpop.permute.xlu0 %2230
    %vm2248 = vcmask 687616
    %2249 = vst.msk [vmem:[#allocation3 + $0x10] sm:$0xff] %vm2248, %v2201
    %2250 = vst.msk [vmem:[#allocation3 + $0x30] sm:$0xff] %vm2248, %v2203
    %2251 = vst.msk [vmem:[#allocation3 + $0x50] sm:$0xff] %vm2248, %v2205
    %2252 = vst.msk [vmem:[#allocation3 + $0x70] sm:$0xff] %vm2248, %v2207
    %2253 = vst.msk [vmem:[#allocation3 + $0x90] sm:$0xff] %vm2248, %v2209
    %2254 = vst.msk [vmem:[#allocation3 + $0xb0] sm:$0xff] %vm2248, %v2211
    %2255 = vst.msk [vmem:[#allocation3 + $0xd0] sm:$0xff] %vm2248, %v2213
    %2256 = vst.msk [vmem:[#allocation3 + $0xf0] sm:$0xff] %vm2248, %v2215
    %2257 = vst.msk [vmem:[#allocation3 + $0x110] sm:$0xff] %vm2248, %v2217
    %2258 = vst.msk [vmem:[#allocation3 + $0x130] sm:$0xff] %vm2248, %v2219
    %2259 = vst.msk [vmem:[#allocation3 + $0x150] sm:$0xff] %vm2248, %v2221
    %2260 = vst.msk [vmem:[#allocation3 + $0x170] sm:$0xff] %vm2248, %v2223
    %2261 = vst.msk [vmem:[#allocation3 + $0x190] sm:$0xff] %vm2248, %v2225
    %2262 = vst.msk [vmem:[#allocation3 + $0x1b0] sm:$0xff] %vm2248, %v2227
    %2263 = vst.msk [vmem:[#allocation3 + $0x1d0] sm:$0xff] %vm2248, %v2229
    %2264 = vst.msk [vmem:[#allocation3 + $0x1f0] sm:$0xff] %vm2248, %v2231
    %v2265 = vld [vmem:[%s2070 + $0x2] sm:$0xff]
    %v2266 = vld [vmem:[%s2070 + $0x12] sm:$0xff]
    %v2267 = vld [vmem:[%s2070 + $0x22] sm:$0xff]
    %v2268 = vld [vmem:[%s2070 + $0x32] sm:$0xff]
    %v2269 = vld [vmem:[%s2070 + $0x42] sm:$0xff]
    %v2270 = vld [vmem:[%s2070 + $0x52] sm:$0xff]
    %v2271 = vld [vmem:[%s2070 + $0x62] sm:$0xff]
    %v2272 = vld [vmem:[%s2070 + $0x72] sm:$0xff]
    %v2273 = vld [vmem:[%s2070 + $0xc2] sm:$0xff]
    %v2274 = vld [vmem:[%s2070 + $0xd2] sm:$0xff]
    %v2275 = vld [vmem:[%s2070 + $0xe2] sm:$0xff]
    %v2276 = vld [vmem:[%s2070 + $0xf2] sm:$0xff]
    %v2277 = vld [vmem:[%s2070 + $0x102] sm:$0xff]
    %v2278 = vld [vmem:[%s2070 + $0x112] sm:$0xff]
    %v2279 = vld [vmem:[%s2070 + $0x122] sm:$0xff]
    %v2280 = vld [vmem:[%s2070 + $0x132] sm:$0xff]
    %2297 = vrot.lane.b32.xlu0 %v2265, 84
    %v2298 = vpop.permute.xlu0 %2297
    %2299 = vrot.lane.b32.xlu0 %v2266, 84
    %v2300 = vpop.permute.xlu0 %2299
    %2301 = vrot.lane.b32.xlu0 %v2267, 84
    %v2302 = vpop.permute.xlu0 %2301
    %2303 = vrot.lane.b32.xlu0 %v2268, 84
    %v2304 = vpop.permute.xlu0 %2303
    %2305 = vrot.lane.b32.xlu0 %v2269, 84
    %v2306 = vpop.permute.xlu0 %2305
    %2307 = vrot.lane.b32.xlu0 %v2270, 84
    %v2308 = vpop.permute.xlu0 %2307
    %2309 = vrot.lane.b32.xlu0 %v2271, 84
    %v2310 = vpop.permute.xlu0 %2309
    %2311 = vrot.lane.b32.xlu0 %v2272, 84
    %v2312 = vpop.permute.xlu0 %2311
    %2313 = vrot.lane.b32.xlu0 %v2273, 84
    %v2314 = vpop.permute.xlu0 %2313
    %2315 = vrot.lane.b32.xlu0 %v2274, 84
    %v2316 = vpop.permute.xlu0 %2315
    %2317 = vrot.lane.b32.xlu0 %v2275, 84
    %v2318 = vpop.permute.xlu0 %2317
    %2319 = vrot.lane.b32.xlu0 %v2276, 84
    %v2320 = vpop.permute.xlu0 %2319
    %2321 = vrot.lane.b32.xlu0 %v2277, 84
    %v2322 = vpop.permute.xlu0 %2321
    %2323 = vrot.lane.b32.xlu0 %v2278, 84
    %v2324 = vpop.permute.xlu0 %2323
    %2325 = vrot.lane.b32.xlu0 %v2279, 84
    %v2326 = vpop.permute.xlu0 %2325
    %2327 = vrot.lane.b32.xlu0 %v2280, 84
    %v2328 = vpop.permute.xlu0 %2327
    %vm2345 = vcmask 851616
    %2346 = vst.msk [vmem:[#allocation3 + $0x10] sm:$0xff] %vm2345, %v2298
    %2347 = vst.msk [vmem:[#allocation3 + $0x30] sm:$0xff] %vm2345, %v2300
    %2348 = vst.msk [vmem:[#allocation3 + $0x50] sm:$0xff] %vm2345, %v2302
    %2349 = vst.msk [vmem:[#allocation3 + $0x70] sm:$0xff] %vm2345, %v2304
    %2350 = vst.msk [vmem:[#allocation3 + $0x90] sm:$0xff] %vm2345, %v2306
    %2351 = vst.msk [vmem:[#allocation3 + $0xb0] sm:$0xff] %vm2345, %v2308
    %2352 = vst.msk [vmem:[#allocation3 + $0xd0] sm:$0xff] %vm2345, %v2310
    %2353 = vst.msk [vmem:[#allocation3 + $0xf0] sm:$0xff] %vm2345, %v2312
    %2354 = vst.msk [vmem:[#allocation3 + $0x110] sm:$0xff] %vm2345, %v2314
    %2355 = vst.msk [vmem:[#allocation3 + $0x130] sm:$0xff] %vm2345, %v2316
    %2356 = vst.msk [vmem:[#allocation3 + $0x150] sm:$0xff] %vm2345, %v2318
    %2357 = vst.msk [vmem:[#allocation3 + $0x170] sm:$0xff] %vm2345, %v2320
    %2358 = vst.msk [vmem:[#allocation3 + $0x190] sm:$0xff] %vm2345, %v2322
    %2359 = vst.msk [vmem:[#allocation3 + $0x1b0] sm:$0xff] %vm2345, %v2324
    %2360 = vst.msk [vmem:[#allocation3 + $0x1d0] sm:$0xff] %vm2345, %v2326
    %2361 = vst.msk [vmem:[#allocation3 + $0x1f0] sm:$0xff] %vm2345, %v2328
    %v2362 = vld [vmem:[%s2070 + $0x3] sm:$0xff]
    %v2363 = vld [vmem:[%s2070 + $0x13] sm:$0xff]
    %v2364 = vld [vmem:[%s2070 + $0x23] sm:$0xff]
    %v2365 = vld [vmem:[%s2070 + $0x33] sm:$0xff]
    %v2366 = vld [vmem:[%s2070 + $0x43] sm:$0xff]
    %v2367 = vld [vmem:[%s2070 + $0x53] sm:$0xff]
    %v2368 = vld [vmem:[%s2070 + $0x63] sm:$0xff]
    %v2369 = vld [vmem:[%s2070 + $0x73] sm:$0xff]
    %v2370 = vld [vmem:[%s2070 + $0xc3] sm:$0xff]
    %v2371 = vld [vmem:[%s2070 + $0xd3] sm:$0xff]
    %v2372 = vld [vmem:[%s2070 + $0xe3] sm:$0xff]
    %v2373 = vld [vmem:[%s2070 + $0xf3] sm:$0xff]
    %v2374 = vld [vmem:[%s2070 + $0x103] sm:$0xff]
    %v2375 = vld [vmem:[%s2070 + $0x113] sm:$0xff]
    %v2376 = vld [vmem:[%s2070 + $0x123] sm:$0xff]
    %v2377 = vld [vmem:[%s2070 + $0x133] sm:$0xff]
    %2394 = vrot.lane.b32.xlu0 %v2362, 104
    %v2395 = vpop.permute.xlu0 %2394
    %2396 = vrot.lane.b32.xlu0 %v2363, 104
    %v2397 = vpop.permute.xlu0 %2396
    %2398 = vrot.lane.b32.xlu0 %v2364, 104
    %v2399 = vpop.permute.xlu0 %2398
    %2400 = vrot.lane.b32.xlu0 %v2365, 104
    %v2401 = vpop.permute.xlu0 %2400
    %2402 = vrot.lane.b32.xlu0 %v2366, 104
    %v2403 = vpop.permute.xlu0 %2402
    %2404 = vrot.lane.b32.xlu0 %v2367, 104
    %v2405 = vpop.permute.xlu0 %2404
    %2406 = vrot.lane.b32.xlu0 %v2368, 104
    %v2407 = vpop.permute.xlu0 %2406
    %2408 = vrot.lane.b32.xlu0 %v2369, 104
    %v2409 = vpop.permute.xlu0 %2408
    %2410 = vrot.lane.b32.xlu0 %v2370, 104
    %v2411 = vpop.permute.xlu0 %2410
    %2412 = vrot.lane.b32.xlu0 %v2371, 104
    %v2413 = vpop.permute.xlu0 %2412
    %2414 = vrot.lane.b32.xlu0 %v2372, 104
    %v2415 = vpop.permute.xlu0 %2414
    %2416 = vrot.lane.b32.xlu0 %v2373, 104
    %v2417 = vpop.permute.xlu0 %2416
    %2418 = vrot.lane.b32.xlu0 %v2374, 104
    %v2419 = vpop.permute.xlu0 %2418
    %2420 = vrot.lane.b32.xlu0 %v2375, 104
    %v2421 = vpop.permute.xlu0 %2420
    %2422 = vrot.lane.b32.xlu0 %v2376, 104
    %v2423 = vpop.permute.xlu0 %2422
    %2424 = vrot.lane.b32.xlu0 %v2377, 104
    %v2425 = vpop.permute.xlu0 %2424
    %vm2442 = vcmask 1015616
    %2443 = vst.msk [vmem:[#allocation3 + $0x10] sm:$0xff] %vm2442, %v2395
    %2444 = vst.msk [vmem:[#allocation3 + $0x30] sm:$0xff] %vm2442, %v2397
    %2445 = vst.msk [vmem:[#allocation3 + $0x50] sm:$0xff] %vm2442, %v2399
    %2446 = vst.msk [vmem:[#allocation3 + $0x70] sm:$0xff] %vm2442, %v2401
    %2447 = vst.msk [vmem:[#allocation3 + $0x90] sm:$0xff] %vm2442, %v2403
    %2448 = vst.msk [vmem:[#allocation3 + $0xb0] sm:$0xff] %vm2442, %v2405
    %2449 = vst.msk [vmem:[#allocation3 + $0xd0] sm:$0xff] %vm2442, %v2407
    %2450 = vst.msk [vmem:[#allocation3 + $0xf0] sm:$0xff] %vm2442, %v2409
    %2451 = vst.msk [vmem:[#allocation3 + $0x110] sm:$0xff] %vm2442, %v2411
    %2452 = vst.msk [vmem:[#allocation3 + $0x130] sm:$0xff] %vm2442, %v2413
    %2453 = vst.msk [vmem:[#allocation3 + $0x150] sm:$0xff] %vm2442, %v2415
    %2454 = vst.msk [vmem:[#allocation3 + $0x170] sm:$0xff] %vm2442, %v2417
    %2455 = vst.msk [vmem:[#allocation3 + $0x190] sm:$0xff] %vm2442, %v2419
    %2456 = vst.msk [vmem:[#allocation3 + $0x1b0] sm:$0xff] %vm2442, %v2421
    %2457 = vst.msk [vmem:[#allocation3 + $0x1d0] sm:$0xff] %vm2442, %v2423
    %2458 = vst.msk [vmem:[#allocation3 + $0x1f0] sm:$0xff] %vm2442, %v2425
    %v2459 = vld [vmem:[%s2070 + $0x4] sm:$0xff]
    %v2460 = vld [vmem:[%s2070 + $0x14] sm:$0xff]
    %v2461 = vld [vmem:[%s2070 + $0x24] sm:$0xff]
    %v2462 = vld [vmem:[%s2070 + $0x34] sm:$0xff]
    %v2463 = vld [vmem:[%s2070 + $0x44] sm:$0xff]
    %v2464 = vld [vmem:[%s2070 + $0x54] sm:$0xff]
    %v2465 = vld [vmem:[%s2070 + $0x64] sm:$0xff]
    %v2466 = vld [vmem:[%s2070 + $0x74] sm:$0xff]
    %v2467 = vld [vmem:[%s2070 + $0xc4] sm:$0xff]
    %v2468 = vld [vmem:[%s2070 + $0xd4] sm:$0xff]
    %v2469 = vld [vmem:[%s2070 + $0xe4] sm:$0xff]
    %v2470 = vld [vmem:[%s2070 + $0xf4] sm:$0xff]
    %v2471 = vld [vmem:[%s2070 + $0x104] sm:$0xff]
    %v2472 = vld [vmem:[%s2070 + $0x114] sm:$0xff]
    %v2473 = vld [vmem:[%s2070 + $0x124] sm:$0xff]
    %v2474 = vld [vmem:[%s2070 + $0x134] sm:$0xff]
    %2491 = vrot.lane.b32.xlu0 %v2459, 124
    %v2492 = vpop.permute.xlu0 %2491
    %2493 = vrot.lane.b32.xlu0 %v2460, 124
    %v2494 = vpop.permute.xlu0 %2493
    %2495 = vrot.lane.b32.xlu0 %v2461, 124
    %v2496 = vpop.permute.xlu0 %2495
    %2497 = vrot.lane.b32.xlu0 %v2462, 124
    %v2498 = vpop.permute.xlu0 %2497
    %2499 = vrot.lane.b32.xlu0 %v2463, 124
    %v2500 = vpop.permute.xlu0 %2499
    %2501 = vrot.lane.b32.xlu0 %v2464, 124
    %v2502 = vpop.permute.xlu0 %2501
    %2503 = vrot.lane.b32.xlu0 %v2465, 124
    %v2504 = vpop.permute.xlu0 %2503
    %2505 = vrot.lane.b32.xlu0 %v2466, 124
    %v2506 = vpop.permute.xlu0 %2505
    %2507 = vrot.lane.b32.xlu0 %v2467, 124
    %v2508 = vpop.permute.xlu0 %2507
    %2509 = vrot.lane.b32.xlu0 %v2468, 124
    %v2510 = vpop.permute.xlu0 %2509
    %2511 = vrot.lane.b32.xlu0 %v2469, 124
    %v2512 = vpop.permute.xlu0 %2511
    %2513 = vrot.lane.b32.xlu0 %v2470, 124
    %v2514 = vpop.permute.xlu0 %2513
    %2515 = vrot.lane.b32.xlu0 %v2471, 124
    %v2516 = vpop.permute.xlu0 %2515
    %2517 = vrot.lane.b32.xlu0 %v2472, 124
    %v2518 = vpop.permute.xlu0 %2517
    %2519 = vrot.lane.b32.xlu0 %v2473, 124
    %v2520 = vpop.permute.xlu0 %2519
    %2521 = vrot.lane.b32.xlu0 %v2474, 124
    %v2522 = vpop.permute.xlu0 %2521
    %vm2539 = vcmask 1048544
    %2540 = vst.msk [vmem:[#allocation3 + $0x10] sm:$0xff] %vm2539, %v2492
    %vm2541 = vcmask 130048
    %2542 = vst.msk [vmem:[#allocation3 + $0x18] sm:$0xff] %vm2541, %v2492
    %2543 = vst.msk [vmem:[#allocation3 + $0x30] sm:$0xff] %vm2539, %v2494
    %2544 = vst.msk [vmem:[#allocation3 + $0x38] sm:$0xff] %vm2541, %v2494
    %2545 = vst.msk [vmem:[#allocation3 + $0x50] sm:$0xff] %vm2539, %v2496
    %2546 = vst.msk [vmem:[#allocation3 + $0x58] sm:$0xff] %vm2541, %v2496
    %2547 = vst.msk [vmem:[#allocation3 + $0x70] sm:$0xff] %vm2539, %v2498
    %2548 = vst.msk [vmem:[#allocation3 + $0x78] sm:$0xff] %vm2541, %v2498
    %2549 = vst.msk [vmem:[#allocation3 + $0x90] sm:$0xff] %vm2539, %v2500
    %2550 = vst.msk [vmem:[#allocation3 + $0x98] sm:$0xff] %vm2541, %v2500
    %2551 = vst.msk [vmem:[#allocation3 + $0xb0] sm:$0xff] %vm2539, %v2502
    %2552 = vst.msk [vmem:[#allocation3 + $0xb8] sm:$0xff] %vm2541, %v2502
    %2553 = vst.msk [vmem:[#allocation3 + $0xd0] sm:$0xff] %vm2539, %v2504
    %2554 = vst.msk [vmem:[#allocation3 + $0xd8] sm:$0xff] %vm2541, %v2504
    %2555 = vst.msk [vmem:[#allocation3 + $0xf0] sm:$0xff] %vm2539, %v2506
    %2556 = vst.msk [vmem:[#allocation3 + $0xf8] sm:$0xff] %vm2541, %v2506
    %2557 = vst.msk [vmem:[#allocation3 + $0x110] sm:$0xff] %vm2539, %v2508
    %2558 = vst.msk [vmem:[#allocation3 + $0x118] sm:$0xff] %vm2541, %v2508
    %2559 = vst.msk [vmem:[#allocation3 + $0x130] sm:$0xff] %vm2539, %v2510
    %2560 = vst.msk [vmem:[#allocation3 + $0x138] sm:$0xff] %vm2541, %v2510
    %2561 = vst.msk [vmem:[#allocation3 + $0x150] sm:$0xff] %vm2539, %v2512
    %2562 = vst.msk [vmem:[#allocation3 + $0x158] sm:$0xff] %vm2541, %v2512
    %2563 = vst.msk [vmem:[#allocation3 + $0x170] sm:$0xff] %vm2539, %v2514
    %2564 = vst.msk [vmem:[#allocation3 + $0x178] sm:$0xff] %vm2541, %v2514
    %2565 = vst.msk [vmem:[#allocation3 + $0x190] sm:$0xff] %vm2539, %v2516
    %2566 = vst.msk [vmem:[#allocation3 + $0x198] sm:$0xff] %vm2541, %v2516
    %2567 = vst.msk [vmem:[#allocation3 + $0x1b0] sm:$0xff] %vm2539, %v2518
    %2568 = vst.msk [vmem:[#allocation3 + $0x1b8] sm:$0xff] %vm2541, %v2518
    %2569 = vst.msk [vmem:[#allocation3 + $0x1d0] sm:$0xff] %vm2539, %v2520
    %2570 = vst.msk [vmem:[#allocation3 + $0x1d8] sm:$0xff] %vm2541, %v2520
    %2571 = vst.msk [vmem:[#allocation3 + $0x1f0] sm:$0xff] %vm2539, %v2522
    %2572 = vst.msk [vmem:[#allocation3 + $0x1f8] sm:$0xff] %vm2541, %v2522
    %s2573 = scalar_lea.vmem [#allocation2], 64
    %v2574 = vld [vmem:[%s2573] sm:$0xff]
    %v2575 = vld [vmem:[%s2573 + $0x10] sm:$0xff]
    %v2576 = vld [vmem:[%s2573 + $0x20] sm:$0xff]
    %v2577 = vld [vmem:[%s2573 + $0x30] sm:$0xff]
    %v2578 = vld [vmem:[%s2573 + $0x40] sm:$0xff]
    %v2579 = vld [vmem:[%s2573 + $0x50] sm:$0xff]
    %v2580 = vld [vmem:[%s2573 + $0x60] sm:$0xff]
    %v2581 = vld [vmem:[%s2573 + $0x70] sm:$0xff]
    %v2582 = vld [vmem:[%s2573 + $0xc0] sm:$0xff]
    %v2583 = vld [vmem:[%s2573 + $0xd0] sm:$0xff]
    %v2584 = vld [vmem:[%s2573 + $0xe0] sm:$0xff]
    %v2585 = vld [vmem:[%s2573 + $0xf0] sm:$0xff]
    %v2586 = vld [vmem:[%s2573 + $0x100] sm:$0xff]
    %v2587 = vld [vmem:[%s2573 + $0x110] sm:$0xff]
    %v2588 = vld [vmem:[%s2573 + $0x120] sm:$0xff]
    %v2589 = vld [vmem:[%s2573 + $0x130] sm:$0xff]
    %2606 = vrot.lane.b32.xlu0 %v2574, 16
    %v2607 = vpop.permute.xlu0 %2606
    %2608 = vrot.lane.b32.xlu0 %v2575, 16
    %v2609 = vpop.permute.xlu0 %2608
    %2610 = vrot.lane.b32.xlu0 %v2576, 16
    %v2611 = vpop.permute.xlu0 %2610
    %2612 = vrot.lane.b32.xlu0 %v2577, 16
    %v2613 = vpop.permute.xlu0 %2612
    %2614 = vrot.lane.b32.xlu0 %v2578, 16
    %v2615 = vpop.permute.xlu0 %2614
    %2616 = vrot.lane.b32.xlu0 %v2579, 16
    %v2617 = vpop.permute.xlu0 %2616
    %2618 = vrot.lane.b32.xlu0 %v2580, 16
    %v2619 = vpop.permute.xlu0 %2618
    %2620 = vrot.lane.b32.xlu0 %v2581, 16
    %v2621 = vpop.permute.xlu0 %2620
    %2622 = vrot.lane.b32.xlu0 %v2582, 16
    %v2623 = vpop.permute.xlu0 %2622
    %2624 = vrot.lane.b32.xlu0 %v2583, 16
    %v2625 = vpop.permute.xlu0 %2624
    %2626 = vrot.lane.b32.xlu0 %v2584, 16
    %v2627 = vpop.permute.xlu0 %2626
    %2628 = vrot.lane.b32.xlu0 %v2585, 16
    %v2629 = vpop.permute.xlu0 %2628
    %2630 = vrot.lane.b32.xlu0 %v2586, 16
    %v2631 = vpop.permute.xlu0 %2630
    %2632 = vrot.lane.b32.xlu0 %v2587, 16
    %v2633 = vpop.permute.xlu0 %2632
    %2634 = vrot.lane.b32.xlu0 %v2588, 16
    %v2635 = vpop.permute.xlu0 %2634
    %2636 = vrot.lane.b32.xlu0 %v2589, 16
    %v2637 = vpop.permute.xlu0 %2636
    %vm2654 = vcmask 294016
    %2655 = vst.msk [vmem:[#allocation3 + $0x18] sm:$0xff] %vm2654, %v2607
    %2656 = vst.msk [vmem:[#allocation3 + $0x38] sm:$0xff] %vm2654, %v2609
    %2657 = vst.msk [vmem:[#allocation3 + $0x58] sm:$0xff] %vm2654, %v2611
    %2658 = vst.msk [vmem:[#allocation3 + $0x78] sm:$0xff] %vm2654, %v2613
    %2659 = vst.msk [vmem:[#allocation3 + $0x98] sm:$0xff] %vm2654, %v2615
    %2660 = vst.msk [vmem:[#allocation3 + $0xb8] sm:$0xff] %vm2654, %v2617
    %2661 = vst.msk [vmem:[#allocation3 + $0xd8] sm:$0xff] %vm2654, %v2619
    %2662 = vst.msk [vmem:[#allocation3 + $0xf8] sm:$0xff] %vm2654, %v2621
    %2663 = vst.msk [vmem:[#allocation3 + $0x118] sm:$0xff] %vm2654, %v2623
    %2664 = vst.msk [vmem:[#allocation3 + $0x138] sm:$0xff] %vm2654, %v2625
    %2665 = vst.msk [vmem:[#allocation3 + $0x158] sm:$0xff] %vm2654, %v2627
    %2666 = vst.msk [vmem:[#allocation3 + $0x178] sm:$0xff] %vm2654, %v2629
    %2667 = vst.msk [vmem:[#allocation3 + $0x198] sm:$0xff] %vm2654, %v2631
    %2668 = vst.msk [vmem:[#allocation3 + $0x1b8] sm:$0xff] %vm2654, %v2633
    %2669 = vst.msk [vmem:[#allocation3 + $0x1d8] sm:$0xff] %vm2654, %v2635
    %2670 = vst.msk [vmem:[#allocation3 + $0x1f8] sm:$0xff] %vm2654, %v2637
    %v2671 = vld [vmem:[%s2573 + $0x1] sm:$0xff]
    %v2672 = vld [vmem:[%s2573 + $0x11] sm:$0xff]
    %v2673 = vld [vmem:[%s2573 + $0x21] sm:$0xff]
    %v2674 = vld [vmem:[%s2573 + $0x31] sm:$0xff]
    %v2675 = vld [vmem:[%s2573 + $0x41] sm:$0xff]
    %v2676 = vld [vmem:[%s2573 + $0x51] sm:$0xff]
    %v2677 = vld [vmem:[%s2573 + $0x61] sm:$0xff]
    %v2678 = vld [vmem:[%s2573 + $0x71] sm:$0xff]
    %v2679 = vld [vmem:[%s2573 + $0xc1] sm:$0xff]
    %v2680 = vld [vmem:[%s2573 + $0xd1] sm:$0xff]
    %v2681 = vld [vmem:[%s2573 + $0xe1] sm:$0xff]
    %v2682 = vld [vmem:[%s2573 + $0xf1] sm:$0xff]
    %v2683 = vld [vmem:[%s2573 + $0x101] sm:$0xff]
    %v2684 = vld [vmem:[%s2573 + $0x111] sm:$0xff]
    %v2685 = vld [vmem:[%s2573 + $0x121] sm:$0xff]
    %v2686 = vld [vmem:[%s2573 + $0x131] sm:$0xff]
    %2703 = vrot.lane.b32.xlu0 %v2671, 36
    %v2704 = vpop.permute.xlu0 %2703
    %2705 = vrot.lane.b32.xlu0 %v2672, 36
    %v2706 = vpop.permute.xlu0 %2705
    %2707 = vrot.lane.b32.xlu0 %v2673, 36
    %v2708 = vpop.permute.xlu0 %2707
    %2709 = vrot.lane.b32.xlu0 %v2674, 36
    %v2710 = vpop.permute.xlu0 %2709
    %2711 = vrot.lane.b32.xlu0 %v2675, 36
    %v2712 = vpop.permute.xlu0 %2711
    %2713 = vrot.lane.b32.xlu0 %v2676, 36
    %v2714 = vpop.permute.xlu0 %2713
    %2715 = vrot.lane.b32.xlu0 %v2677, 36
    %v2716 = vpop.permute.xlu0 %2715
    %2717 = vrot.lane.b32.xlu0 %v2678, 36
    %v2718 = vpop.permute.xlu0 %2717
    %2719 = vrot.lane.b32.xlu0 %v2679, 36
    %v2720 = vpop.permute.xlu0 %2719
    %2721 = vrot.lane.b32.xlu0 %v2680, 36
    %v2722 = vpop.permute.xlu0 %2721
    %2723 = vrot.lane.b32.xlu0 %v2681, 36
    %v2724 = vpop.permute.xlu0 %2723
    %2725 = vrot.lane.b32.xlu0 %v2682, 36
    %v2726 = vpop.permute.xlu0 %2725
    %2727 = vrot.lane.b32.xlu0 %v2683, 36
    %v2728 = vpop.permute.xlu0 %2727
    %2729 = vrot.lane.b32.xlu0 %v2684, 36
    %v2730 = vpop.permute.xlu0 %2729
    %2731 = vrot.lane.b32.xlu0 %v2685, 36
    %v2732 = vpop.permute.xlu0 %2731
    %2733 = vrot.lane.b32.xlu0 %v2686, 36
    %v2734 = vpop.permute.xlu0 %2733
    %vm2751 = vcmask 458016
    %2752 = vst.msk [vmem:[#allocation3 + $0x18] sm:$0xff] %vm2751, %v2704
    %2753 = vst.msk [vmem:[#allocation3 + $0x38] sm:$0xff] %vm2751, %v2706
    %2754 = vst.msk [vmem:[#allocation3 + $0x58] sm:$0xff] %vm2751, %v2708
    %2755 = vst.msk [vmem:[#allocation3 + $0x78] sm:$0xff] %vm2751, %v2710
    %2756 = vst.msk [vmem:[#allocation3 + $0x98] sm:$0xff] %vm2751, %v2712
    %2757 = vst.msk [vmem:[#allocation3 + $0xb8] sm:$0xff] %vm2751, %v2714
    %2758 = vst.msk [vmem:[#allocation3 + $0xd8] sm:$0xff] %vm2751, %v2716
    %2759 = vst.msk [vmem:[#allocation3 + $0xf8] sm:$0xff] %vm2751, %v2718
    %2760 = vst.msk [vmem:[#allocation3 + $0x118] sm:$0xff] %vm2751, %v2720
    %2761 = vst.msk [vmem:[#allocation3 + $0x138] sm:$0xff] %vm2751, %v2722
    %2762 = vst.msk [vmem:[#allocation3 + $0x158] sm:$0xff] %vm2751, %v2724
    %2763 = vst.msk [vmem:[#allocation3 + $0x178] sm:$0xff] %vm2751, %v2726
    %2764 = vst.msk [vmem:[#allocation3 + $0x198] sm:$0xff] %vm2751, %v2728
    %2765 = vst.msk [vmem:[#allocation3 + $0x1b8] sm:$0xff] %vm2751, %v2730
    %2766 = vst.msk [vmem:[#allocation3 + $0x1d8] sm:$0xff] %vm2751, %v2732
    %2767 = vst.msk [vmem:[#allocation3 + $0x1f8] sm:$0xff] %vm2751, %v2734
    %v2768 = vld [vmem:[%s2573 + $0x2] sm:$0xff]
    %v2769 = vld [vmem:[%s2573 + $0x12] sm:$0xff]
    %v2770 = vld [vmem:[%s2573 + $0x22] sm:$0xff]
    %v2771 = vld [vmem:[%s2573 + $0x32] sm:$0xff]
    %v2772 = vld [vmem:[%s2573 + $0x42] sm:$0xff]
    %v2773 = vld [vmem:[%s2573 + $0x52] sm:$0xff]
    %v2774 = vld [vmem:[%s2573 + $0x62] sm:$0xff]
    %v2775 = vld [vmem:[%s2573 + $0x72] sm:$0xff]
    %v2776 = vld [vmem:[%s2573 + $0xc2] sm:$0xff]
    %v2777 = vld [vmem:[%s2573 + $0xd2] sm:$0xff]
    %v2778 = vld [vmem:[%s2573 + $0xe2] sm:$0xff]
    %v2779 = vld [vmem:[%s2573 + $0xf2] sm:$0xff]
    %v2780 = vld [vmem:[%s2573 + $0x102] sm:$0xff]
    %v2781 = vld [vmem:[%s2573 + $0x112] sm:$0xff]
    %v2782 = vld [vmem:[%s2573 + $0x122] sm:$0xff]
    %v2783 = vld [vmem:[%s2573 + $0x132] sm:$0xff]
    %2800 = vrot.lane.b32.xlu0 %v2768, 56
    %v2801 = vpop.permute.xlu0 %2800
    %2802 = vrot.lane.b32.xlu0 %v2769, 56
    %v2803 = vpop.permute.xlu0 %2802
    %2804 = vrot.lane.b32.xlu0 %v2770, 56
    %v2805 = vpop.permute.xlu0 %2804
    %2806 = vrot.lane.b32.xlu0 %v2771, 56
    %v2807 = vpop.permute.xlu0 %2806
    %2808 = vrot.lane.b32.xlu0 %v2772, 56
    %v2809 = vpop.permute.xlu0 %2808
    %2810 = vrot.lane.b32.xlu0 %v2773, 56
    %v2811 = vpop.permute.xlu0 %2810
    %2812 = vrot.lane.b32.xlu0 %v2774, 56
    %v2813 = vpop.permute.xlu0 %2812
    %2814 = vrot.lane.b32.xlu0 %v2775, 56
    %v2815 = vpop.permute.xlu0 %2814
    %2816 = vrot.lane.b32.xlu0 %v2776, 56
    %v2817 = vpop.permute.xlu0 %2816
    %2818 = vrot.lane.b32.xlu0 %v2777, 56
    %v2819 = vpop.permute.xlu0 %2818
    %2820 = vrot.lane.b32.xlu0 %v2778, 56
    %v2821 = vpop.permute.xlu0 %2820
    %2822 = vrot.lane.b32.xlu0 %v2779, 56
    %v2823 = vpop.permute.xlu0 %2822
    %2824 = vrot.lane.b32.xlu0 %v2780, 56
    %v2825 = vpop.permute.xlu0 %2824
    %2826 = vrot.lane.b32.xlu0 %v2781, 56
    %v2827 = vpop.permute.xlu0 %2826
    %2828 = vrot.lane.b32.xlu0 %v2782, 56
    %v2829 = vpop.permute.xlu0 %2828
    %2830 = vrot.lane.b32.xlu0 %v2783, 56
    %v2831 = vpop.permute.xlu0 %2830
    %vm2848 = vcmask 622016
    %2849 = vst.msk [vmem:[#allocation3 + $0x18] sm:$0xff] %vm2848, %v2801
    %2850 = vst.msk [vmem:[#allocation3 + $0x38] sm:$0xff] %vm2848, %v2803
    %2851 = vst.msk [vmem:[#allocation3 + $0x58] sm:$0xff] %vm2848, %v2805
    %2852 = vst.msk [vmem:[#allocation3 + $0x78] sm:$0xff] %vm2848, %v2807
    %2853 = vst.msk [vmem:[#allocation3 + $0x98] sm:$0xff] %vm2848, %v2809
    %2854 = vst.msk [vmem:[#allocation3 + $0xb8] sm:$0xff] %vm2848, %v2811
    %2855 = vst.msk [vmem:[#allocation3 + $0xd8] sm:$0xff] %vm2848, %v2813
    %2856 = vst.msk [vmem:[#allocation3 + $0xf8] sm:$0xff] %vm2848, %v2815
    %2857 = vst.msk [vmem:[#allocation3 + $0x118] sm:$0xff] %vm2848, %v2817
    %2858 = vst.msk [vmem:[#allocation3 + $0x138] sm:$0xff] %vm2848, %v2819
    %2859 = vst.msk [vmem:[#allocation3 + $0x158] sm:$0xff] %vm2848, %v2821
    %2860 = vst.msk [vmem:[#allocation3 + $0x178] sm:$0xff] %vm2848, %v2823
    %2861 = vst.msk [vmem:[#allocation3 + $0x198] sm:$0xff] %vm2848, %v2825
    %2862 = vst.msk [vmem:[#allocation3 + $0x1b8] sm:$0xff] %vm2848, %v2827
    %2863 = vst.msk [vmem:[#allocation3 + $0x1d8] sm:$0xff] %vm2848, %v2829
    %2864 = vst.msk [vmem:[#allocation3 + $0x1f8] sm:$0xff] %vm2848, %v2831
    %v2865 = vld [vmem:[%s2573 + $0x3] sm:$0xff]
    %v2866 = vld [vmem:[%s2573 + $0x13] sm:$0xff]
    %v2867 = vld [vmem:[%s2573 + $0x23] sm:$0xff]
    %v2868 = vld [vmem:[%s2573 + $0x33] sm:$0xff]
    %v2869 = vld [vmem:[%s2573 + $0x43] sm:$0xff]
    %v2870 = vld [vmem:[%s2573 + $0x53] sm:$0xff]
    %v2871 = vld [vmem:[%s2573 + $0x63] sm:$0xff]
    %v2872 = vld [vmem:[%s2573 + $0x73] sm:$0xff]
    %v2873 = vld [vmem:[%s2573 + $0xc3] sm:$0xff]
    %v2874 = vld [vmem:[%s2573 + $0xd3] sm:$0xff]
    %v2875 = vld [vmem:[%s2573 + $0xe3] sm:$0xff]
    %v2876 = vld [vmem:[%s2573 + $0xf3] sm:$0xff]
    %v2877 = vld [vmem:[%s2573 + $0x103] sm:$0xff]
    %v2878 = vld [vmem:[%s2573 + $0x113] sm:$0xff]
    %v2879 = vld [vmem:[%s2573 + $0x123] sm:$0xff]
    %v2880 = vld [vmem:[%s2573 + $0x133] sm:$0xff]
    %2897 = vrot.lane.b32.xlu0 %v2865, 76
    %v2898 = vpop.permute.xlu0 %2897
    %2899 = vrot.lane.b32.xlu0 %v2866, 76
    %v2900 = vpop.permute.xlu0 %2899
    %2901 = vrot.lane.b32.xlu0 %v2867, 76
    %v2902 = vpop.permute.xlu0 %2901
    %2903 = vrot.lane.b32.xlu0 %v2868, 76
    %v2904 = vpop.permute.xlu0 %2903
    %2905 = vrot.lane.b32.xlu0 %v2869, 76
    %v2906 = vpop.permute.xlu0 %2905
    %2907 = vrot.lane.b32.xlu0 %v2870, 76
    %v2908 = vpop.permute.xlu0 %2907
    %2909 = vrot.lane.b32.xlu0 %v2871, 76
    %v2910 = vpop.permute.xlu0 %2909
    %2911 = vrot.lane.b32.xlu0 %v2872, 76
    %v2912 = vpop.permute.xlu0 %2911
    %2913 = vrot.lane.b32.xlu0 %v2873, 76
    %v2914 = vpop.permute.xlu0 %2913
    %2915 = vrot.lane.b32.xlu0 %v2874, 76
    %v2916 = vpop.permute.xlu0 %2915
    %2917 = vrot.lane.b32.xlu0 %v2875, 76
    %v2918 = vpop.permute.xlu0 %2917
    %2919 = vrot.lane.b32.xlu0 %v2876, 76
    %v2920 = vpop.permute.xlu0 %2919
    %2921 = vrot.lane.b32.xlu0 %v2877, 76
    %v2922 = vpop.permute.xlu0 %2921
    %2923 = vrot.lane.b32.xlu0 %v2878, 76
    %v2924 = vpop.permute.xlu0 %2923
    %2925 = vrot.lane.b32.xlu0 %v2879, 76
    %v2926 = vpop.permute.xlu0 %2925
    %2927 = vrot.lane.b32.xlu0 %v2880, 76
    %v2928 = vpop.permute.xlu0 %2927
    %vm2945 = vcmask 786016
    %2946 = vst.msk [vmem:[#allocation3 + $0x18] sm:$0xff] %vm2945, %v2898
    %2947 = vst.msk [vmem:[#allocation3 + $0x38] sm:$0xff] %vm2945, %v2900
    %2948 = vst.msk [vmem:[#allocation3 + $0x58] sm:$0xff] %vm2945, %v2902
    %2949 = vst.msk [vmem:[#allocation3 + $0x78] sm:$0xff] %vm2945, %v2904
    %2950 = vst.msk [vmem:[#allocation3 + $0x98] sm:$0xff] %vm2945, %v2906
    %2951 = vst.msk [vmem:[#allocation3 + $0xb8] sm:$0xff] %vm2945, %v2908
    %2952 = vst.msk [vmem:[#allocation3 + $0xd8] sm:$0xff] %vm2945, %v2910
    %2953 = vst.msk [vmem:[#allocation3 + $0xf8] sm:$0xff] %vm2945, %v2912
    %2954 = vst.msk [vmem:[#allocation3 + $0x118] sm:$0xff] %vm2945, %v2914
    %2955 = vst.msk [vmem:[#allocation3 + $0x138] sm:$0xff] %vm2945, %v2916
    %2956 = vst.msk [vmem:[#allocation3 + $0x158] sm:$0xff] %vm2945, %v2918
    %2957 = vst.msk [vmem:[#allocation3 + $0x178] sm:$0xff] %vm2945, %v2920
    %2958 = vst.msk [vmem:[#allocation3 + $0x198] sm:$0xff] %vm2945, %v2922
    %2959 = vst.msk [vmem:[#allocation3 + $0x1b8] sm:$0xff] %vm2945, %v2924
    %2960 = vst.msk [vmem:[#allocation3 + $0x1d8] sm:$0xff] %vm2945, %v2926
    %2961 = vst.msk [vmem:[#allocation3 + $0x1f8] sm:$0xff] %vm2945, %v2928
    %v2962 = vld [vmem:[%s2573 + $0x4] sm:$0xff]
    %v2963 = vld [vmem:[%s2573 + $0x14] sm:$0xff]
    %v2964 = vld [vmem:[%s2573 + $0x24] sm:$0xff]
    %v2965 = vld [vmem:[%s2573 + $0x34] sm:$0xff]
    %v2966 = vld [vmem:[%s2573 + $0x44] sm:$0xff]
    %v2967 = vld [vmem:[%s2573 + $0x54] sm:$0xff]
    %v2968 = vld [vmem:[%s2573 + $0x64] sm:$0xff]
    %v2969 = vld [vmem:[%s2573 + $0x74] sm:$0xff]
    %v2970 = vld [vmem:[%s2573 + $0xc4] sm:$0xff]
    %v2971 = vld [vmem:[%s2573 + $0xd4] sm:$0xff]
    %v2972 = vld [vmem:[%s2573 + $0xe4] sm:$0xff]
    %v2973 = vld [vmem:[%s2573 + $0xf4] sm:$0xff]
    %v2974 = vld [vmem:[%s2573 + $0x104] sm:$0xff]
    %v2975 = vld [vmem:[%s2573 + $0x114] sm:$0xff]
    %v2976 = vld [vmem:[%s2573 + $0x124] sm:$0xff]
    %v2977 = vld [vmem:[%s2573 + $0x134] sm:$0xff]
    %2994 = vrot.lane.b32.xlu0 %v2962, 96
    %v2995 = vpop.permute.xlu0 %2994
    %2996 = vrot.lane.b32.xlu0 %v2963, 96
    %v2997 = vpop.permute.xlu0 %2996
    %2998 = vrot.lane.b32.xlu0 %v2964, 96
    %v2999 = vpop.permute.xlu0 %2998
    %3000 = vrot.lane.b32.xlu0 %v2965, 96
    %v3001 = vpop.permute.xlu0 %3000
    %3002 = vrot.lane.b32.xlu0 %v2966, 96
    %v3003 = vpop.permute.xlu0 %3002
    %3004 = vrot.lane.b32.xlu0 %v2967, 96
    %v3005 = vpop.permute.xlu0 %3004
    %3006 = vrot.lane.b32.xlu0 %v2968, 96
    %v3007 = vpop.permute.xlu0 %3006
    %3008 = vrot.lane.b32.xlu0 %v2969, 96
    %v3009 = vpop.permute.xlu0 %3008
    %3010 = vrot.lane.b32.xlu0 %v2970, 96
    %v3011 = vpop.permute.xlu0 %3010
    %3012 = vrot.lane.b32.xlu0 %v2971, 96
    %v3013 = vpop.permute.xlu0 %3012
    %3014 = vrot.lane.b32.xlu0 %v2972, 96
    %v3015 = vpop.permute.xlu0 %3014
    %3016 = vrot.lane.b32.xlu0 %v2973, 96
    %v3017 = vpop.permute.xlu0 %3016
    %3018 = vrot.lane.b32.xlu0 %v2974, 96
    %v3019 = vpop.permute.xlu0 %3018
    %3020 = vrot.lane.b32.xlu0 %v2975, 96
    %v3021 = vpop.permute.xlu0 %3020
    %3022 = vrot.lane.b32.xlu0 %v2976, 96
    %v3023 = vpop.permute.xlu0 %3022
    %3024 = vrot.lane.b32.xlu0 %v2977, 96
    %v3025 = vpop.permute.xlu0 %3024
    %vm3042 = vcmask 950016
    %3043 = vst.msk [vmem:[#allocation3 + $0x18] sm:$0xff] %vm3042, %v2995
    %3044 = vst.msk [vmem:[#allocation3 + $0x38] sm:$0xff] %vm3042, %v2997
    %3045 = vst.msk [vmem:[#allocation3 + $0x58] sm:$0xff] %vm3042, %v2999
    %3046 = vst.msk [vmem:[#allocation3 + $0x78] sm:$0xff] %vm3042, %v3001
    %3047 = vst.msk [vmem:[#allocation3 + $0x98] sm:$0xff] %vm3042, %v3003
    %3048 = vst.msk [vmem:[#allocation3 + $0xb8] sm:$0xff] %vm3042, %v3005
    %3049 = vst.msk [vmem:[#allocation3 + $0xd8] sm:$0xff] %vm3042, %v3007
    %3050 = vst.msk [vmem:[#allocation3 + $0xf8] sm:$0xff] %vm3042, %v3009
    %3051 = vst.msk [vmem:[#allocation3 + $0x118] sm:$0xff] %vm3042, %v3011
    %3052 = vst.msk [vmem:[#allocation3 + $0x138] sm:$0xff] %vm3042, %v3013
    %3053 = vst.msk [vmem:[#allocation3 + $0x158] sm:$0xff] %vm3042, %v3015
    %3054 = vst.msk [vmem:[#allocation3 + $0x178] sm:$0xff] %vm3042, %v3017
    %3055 = vst.msk [vmem:[#allocation3 + $0x198] sm:$0xff] %vm3042, %v3019
    %3056 = vst.msk [vmem:[#allocation3 + $0x1b8] sm:$0xff] %vm3042, %v3021
    %3057 = vst.msk [vmem:[#allocation3 + $0x1d8] sm:$0xff] %vm3042, %v3023
    %3058 = vst.msk [vmem:[#allocation3 + $0x1f8] sm:$0xff] %vm3042, %v3025
    %v3059 = vld [vmem:[#allocation3] sm:$0xff]
    %v3060 = vld [vmem:[#allocation3 + $0x8] sm:$0xff]
    %v3061 = vld [vmem:[#allocation3 + $0x10] sm:$0xff]
    %v3062 = vld [vmem:[#allocation3 + $0x18] sm:$0xff]
    %v3063 = vld [vmem:[#allocation3 + $0x20] sm:$0xff]
    %v3064 = vld [vmem:[#allocation3 + $0x28] sm:$0xff]
    %v3065 = vld [vmem:[#allocation3 + $0x30] sm:$0xff]
    %v3066 = vld [vmem:[#allocation3 + $0x38] sm:$0xff]
    %v3067 = vld [vmem:[#allocation3 + $0x40] sm:$0xff]
    %v3068 = vld [vmem:[#allocation3 + $0x48] sm:$0xff]
    %v3069 = vld [vmem:[#allocation3 + $0x50] sm:$0xff]
    %v3070 = vld [vmem:[#allocation3 + $0x58] sm:$0xff]
    %v3071 = vld [vmem:[#allocation3 + $0x60] sm:$0xff]
    %v3072 = vld [vmem:[#allocation3 + $0x68] sm:$0xff]
    %v3073 = vld [vmem:[#allocation3 + $0x70] sm:$0xff]
    %v3074 = vld [vmem:[#allocation3 + $0x78] sm:$0xff]
    %v3075 = vld [vmem:[#allocation3 + $0x80] sm:$0xff]
    %v3076 = vld [vmem:[#allocation3 + $0x88] sm:$0xff]
    %v3077 = vld [vmem:[#allocation3 + $0x90] sm:$0xff]
    %v3078 = vld [vmem:[#allocation3 + $0x98] sm:$0xff]
    %v3079 = vld [vmem:[#allocation3 + $0xa0] sm:$0xff]
    %v3080 = vld [vmem:[#allocation3 + $0xa8] sm:$0xff]
    %v3081 = vld [vmem:[#allocation3 + $0xb0] sm:$0xff]
    %v3082 = vld [vmem:[#allocation3 + $0xb8] sm:$0xff]
    %v3083 = vld [vmem:[#allocation3 + $0xc0] sm:$0xff]
    %v3084 = vld [vmem:[#allocation3 + $0xc8] sm:$0xff]
    %v3085 = vld [vmem:[#allocation3 + $0xd0] sm:$0xff]
    %v3086 = vld [vmem:[#allocation3 + $0xd8] sm:$0xff]
    %v3087 = vld [vmem:[#allocation3 + $0xe0] sm:$0xff]
    %v3088 = vld [vmem:[#allocation3 + $0xe8] sm:$0xff]
    %v3089 = vld [vmem:[#allocation3 + $0xf0] sm:$0xff]
    %v3090 = vld [vmem:[#allocation3 + $0xf8] sm:$0xff]
    %v3091 = vld [vmem:[#allocation3 + $0x100] sm:$0xff]
    %v3092 = vld [vmem:[#allocation3 + $0x108] sm:$0xff]
    %v3093 = vld [vmem:[#allocation3 + $0x110] sm:$0xff]
    %v3094 = vld [vmem:[#allocation3 + $0x118] sm:$0xff]
    %v3095 = vld [vmem:[#allocation3 + $0x120] sm:$0xff]
    %v3096 = vld [vmem:[#allocation3 + $0x128] sm:$0xff]
    %v3097 = vld [vmem:[#allocation3 + $0x130] sm:$0xff]
    %v3098 = vld [vmem:[#allocation3 + $0x138] sm:$0xff]
    %v3099 = vld [vmem:[#allocation3 + $0x140] sm:$0xff]
    %v3100 = vld [vmem:[#allocation3 + $0x148] sm:$0xff]
    %v3101 = vld [vmem:[#allocation3 + $0x150] sm:$0xff]
    %v3102 = vld [vmem:[#allocation3 + $0x158] sm:$0xff]
    %v3103 = vld [vmem:[#allocation3 + $0x160] sm:$0xff]
    %v3104 = vld [vmem:[#allocation3 + $0x168] sm:$0xff]
    %v3105 = vld [vmem:[#allocation3 + $0x170] sm:$0xff]
    %v3106 = vld [vmem:[#allocation3 + $0x178] sm:$0xff]
    %v3107 = vld [vmem:[#allocation3 + $0x180] sm:$0xff]
    %v3108 = vld [vmem:[#allocation3 + $0x188] sm:$0xff]
    %v3109 = vld [vmem:[#allocation3 + $0x190] sm:$0xff]
    %v3110 = vld [vmem:[#allocation3 + $0x198] sm:$0xff]
    %v3111 = vld [vmem:[#allocation3 + $0x1a0] sm:$0xff]
    %v3112 = vld [vmem:[#allocation3 + $0x1a8] sm:$0xff]
    %v3113 = vld [vmem:[#allocation3 + $0x1b0] sm:$0xff]
    %v3114 = vld [vmem:[#allocation3 + $0x1b8] sm:$0xff]
    %v3115 = vld [vmem:[#allocation3 + $0x1c0] sm:$0xff]
    %v3116 = vld [vmem:[#allocation3 + $0x1c8] sm:$0xff]
    %v3117 = vld [vmem:[#allocation3 + $0x1d0] sm:$0xff]
    %v3118 = vld [vmem:[#allocation3 + $0x1d8] sm:$0xff]
    %v3119 = vld [vmem:[#allocation3 + $0x1e0] sm:$0xff]
    %v3120 = vld [vmem:[#allocation3 + $0x1e8] sm:$0xff]
    %v3121 = vld [vmem:[#allocation3 + $0x1f0] sm:$0xff]
    %v3122 = vld [vmem:[#allocation3 + $0x1f8] sm:$0xff]
    %v3123 = vld [vmem:[%s3] sm:$0xff]
    %v3124 = vld [vmem:[%s3 + $0x8] sm:$0xff]
    %v3125 = vld [vmem:[%s3 + $0x10] sm:$0xff]
    %v3126 = vld [vmem:[%s3 + $0x18] sm:$0xff]
    %v3127 = vld [vmem:[%s3 + $0x20] sm:$0xff]
    %v3128 = vld [vmem:[%s3 + $0x28] sm:$0xff]
    %v3129 = vld [vmem:[%s3 + $0x30] sm:$0xff]
    %v3130 = vld [vmem:[%s3 + $0x38] sm:$0xff]
    %v3131 = vld [vmem:[%s3 + $0x40] sm:$0xff]
    %v3132 = vld [vmem:[%s3 + $0x48] sm:$0xff]
    %v3133 = vld [vmem:[%s3 + $0x50] sm:$0xff]
    %v3134 = vld [vmem:[%s3 + $0x58] sm:$0xff]
    %v3135 = vld [vmem:[%s3 + $0x60] sm:$0xff]
    %v3136 = vld [vmem:[%s3 + $0x68] sm:$0xff]
    %v3137 = vld [vmem:[%s3 + $0x70] sm:$0xff]
    %v3138 = vld [vmem:[%s3 + $0x78] sm:$0xff]
    %v3139 = vld [vmem:[%s3 + $0x80] sm:$0xff]
    %v3140 = vld [vmem:[%s3 + $0x88] sm:$0xff]
    %v3141 = vld [vmem:[%s3 + $0x90] sm:$0xff]
    %v3142 = vld [vmem:[%s3 + $0x98] sm:$0xff]
    %v3143 = vld [vmem:[%s3 + $0xa0] sm:$0xff]
    %v3144 = vld [vmem:[%s3 + $0xa8] sm:$0xff]
    %v3145 = vld [vmem:[%s3 + $0xb0] sm:$0xff]
    %v3146 = vld [vmem:[%s3 + $0xb8] sm:$0xff]
    %v3147 = vld [vmem:[%s3 + $0xc0] sm:$0xff]
    %v3148 = vld [vmem:[%s3 + $0xc8] sm:$0xff]
    %v3149 = vld [vmem:[%s3 + $0xd0] sm:$0xff]
    %v3150 = vld [vmem:[%s3 + $0xd8] sm:$0xff]
    %v3151 = vld [vmem:[%s3 + $0xe0] sm:$0xff]
    %v3152 = vld [vmem:[%s3 + $0xe8] sm:$0xff]
    %v3153 = vld [vmem:[%s3 + $0xf0] sm:$0xff]
    %v3154 = vld [vmem:[%s3 + $0xf8] sm:$0xff]
    %v3155 = vld [vmem:[%s3 + $0x100] sm:$0xff]
    %v3156 = vld [vmem:[%s3 + $0x108] sm:$0xff]
    %v3157 = vld [vmem:[%s3 + $0x110] sm:$0xff]
    %v3158 = vld [vmem:[%s3 + $0x118] sm:$0xff]
    %v3159 = vld [vmem:[%s3 + $0x120] sm:$0xff]
    %v3160 = vld [vmem:[%s3 + $0x128] sm:$0xff]
    %v3161 = vld [vmem:[%s3 + $0x130] sm:$0xff]
    %v3162 = vld [vmem:[%s3 + $0x138] sm:$0xff]
    %v3163 = vld [vmem:[%s3 + $0x140] sm:$0xff]
    %v3164 = vld [vmem:[%s3 + $0x148] sm:$0xff]
    %v3165 = vld [vmem:[%s3 + $0x150] sm:$0xff]
    %v3166 = vld [vmem:[%s3 + $0x158] sm:$0xff]
    %v3167 = vld [vmem:[%s3 + $0x160] sm:$0xff]
    %v3168 = vld [vmem:[%s3 + $0x168] sm:$0xff]
    %v3169 = vld [vmem:[%s3 + $0x170] sm:$0xff]
    %v3170 = vld [vmem:[%s3 + $0x178] sm:$0xff]
    %v3171 = vld [vmem:[%s3 + $0x180] sm:$0xff]
    %v3172 = vld [vmem:[%s3 + $0x188] sm:$0xff]
    %v3173 = vld [vmem:[%s3 + $0x190] sm:$0xff]
    %v3174 = vld [vmem:[%s3 + $0x198] sm:$0xff]
    %v3175 = vld [vmem:[%s3 + $0x1a0] sm:$0xff]
    %v3176 = vld [vmem:[%s3 + $0x1a8] sm:$0xff]
    %v3177 = vld [vmem:[%s3 + $0x1b0] sm:$0xff]
    %v3178 = vld [vmem:[%s3 + $0x1b8] sm:$0xff]
    %v3179 = vld [vmem:[%s3 + $0x1c0] sm:$0xff]
    %v3180 = vld [vmem:[%s3 + $0x1c8] sm:$0xff]
    %v3181 = vld [vmem:[%s3 + $0x1d0] sm:$0xff]
    %v3182 = vld [vmem:[%s3 + $0x1d8] sm:$0xff]
    %v3183 = vld [vmem:[%s3 + $0x1e0] sm:$0xff]
    %v3184 = vld [vmem:[%s3 + $0x1e8] sm:$0xff]
    %v3185 = vld [vmem:[%s3 + $0x1f0] sm:$0xf]
    %v3186 = vld [vmem:[%s4] sm:$0x1]
    %v3188 = vlaneseq
    %v3189 = vshrl.u32 %v3188, 7
    %v3190 = vsub.s32 0, %v3189
    %v3191 = vrot.slane %v3186, %v3190
    %vm3193 = vcmask 949248
    %v3195 = vsel %vm3193, %v3062, 0
    %v3198 = vsel %vm3193, %v3066, 0
    %v3201 = vsel %vm3193, %v3070, 0
    %v3204 = vsel %vm3193, %v3074, 0
    %v3207 = vsel %vm3193, %v3078, 0
    %v3210 = vsel %vm3193, %v3082, 0
    %v3213 = vsel %vm3193, %v3086, 0
    %v3216 = vsel %vm3193, %v3090, 0
    %v3219 = vsel %vm3193, %v3094, 0
    %v3222 = vsel %vm3193, %v3098, 0
    %v3225 = vsel %vm3193, %v3102, 0
    %v3228 = vsel %vm3193, %v3106, 0
    %v3231 = vsel %vm3193, %v3110, 0
    %v3234 = vsel %vm3193, %v3114, 0
    %v3237 = vsel %vm3193, %v3118, 0
    %v3240 = vsel %vm3193, %v3122, 0
    %vm3242 = vcmask 1043456
    %v3244 = vsel %vm3242, %v3185, 0
    %3246 = vmatprep.subr.mxu0 0.0
    %3247 = vmatpush1.msra.mxu0 %v3123
    %3248 = vmatprep.subr.mxu0 0.0
    %3249 = vmatpush1.msra.mxu0 %v3124
    %3250 = vmatprep.subr.mxu0 0.0
    %3251 = vmatpush1.msra.mxu0 %v3125
    %3252 = vmatprep.subr.mxu0 0.0
    %3253 = vmatpush1.msra.mxu0 %v3126
    %3254 = vmatprep.subr.mxu0 0.0
    %3255 = vmatpush1.msra.mxu0 %v3127
    %3256 = vmatprep.subr.mxu0 0.0
    %3257 = vmatpush1.msra.mxu0 %v3128
    %3258 = vmatprep.subr.mxu0 0.0
    %3259 = vmatpush1.msra.mxu0 %v3129
    %3260 = vmatprep.subr.mxu0 0.0
    %3261 = vmatpush1.msra.mxu0 %v3130
    %3262 = vmatprep.subr.mxu0 0.0
    %3263 = vmatpush1.msra.mxu0 %v3131
    %3264 = vmatprep.subr.mxu0 0.0
    %3265 = vmatpush1.msra.mxu0 %v3132
    %3266 = vmatprep.subr.mxu0 0.0
    %3267 = vmatpush1.msra.mxu0 %v3133
    %3268 = vmatprep.subr.mxu0 0.0
    %3269 = vmatpush1.msra.mxu0 %v3134
    %3270 = vmatprep.subr.mxu0 0.0
    %3271 = vmatpush1.msra.mxu0 %v3135
    %3272 = vmatprep.subr.mxu0 0.0
    %3273 = vmatpush1.msra.mxu0 %v3136
    %3274 = vmatprep.subr.mxu0 0.0
    %3275 = vmatpush1.msra.mxu0 %v3137
    %3276 = vmatprep.subr.mxu0 0.0
    %3277 = vmatpush1.msra.mxu0 %v3138
    %3278 = vmatprep.subr.mxu0 0.0
    %3279 = vmatpush1.msra.mxu0 %v3139
    %3280 = vmatprep.subr.mxu0 0.0
    %3281 = vmatpush1.msra.mxu0 %v3140
    %3282 = vmatprep.subr.mxu0 0.0
    %3283 = vmatpush1.msra.mxu0 %v3141
    %3284 = vmatprep.subr.mxu0 0.0
    %3285 = vmatpush1.msra.mxu0 %v3142
    %3286 = vmatprep.subr.mxu0 0.0
    %3287 = vmatpush1.msra.mxu0 %v3143
    %3288 = vmatprep.subr.mxu0 0.0
    %3289 = vmatpush1.msra.mxu0 %v3144
    %3290 = vmatprep.subr.mxu0 0.0
    %3291 = vmatpush1.msra.mxu0 %v3145
    %3292 = vmatprep.subr.mxu0 0.0
    %3293 = vmatpush1.msra.mxu0 %v3146
    %3294 = vmatprep.subr.mxu0 0.0
    %3295 = vmatpush1.msra.mxu0 %v3147
    %3296 = vmatprep.subr.mxu0 0.0
    %3297 = vmatpush1.msra.mxu0 %v3148
    %3298 = vmatprep.subr.mxu0 0.0
    %3299 = vmatpush1.msra.mxu0 %v3149
    %3300 = vmatprep.subr.mxu0 0.0
    %3301 = vmatpush1.msra.mxu0 %v3150
    %3302 = vmatprep.subr.mxu0 0.0
    %3303 = vmatpush1.msra.mxu0 %v3151
    %3304 = vmatprep.subr.mxu0 0.0
    %3305 = vmatpush1.msra.mxu0 %v3152
    %3306 = vmatprep.subr.mxu0 0.0
    %3307 = vmatpush1.msra.mxu0 %v3153
    %3308 = vmatprep.subr.mxu0 0.0
    %3309 = vmatpush1.msra.mxu0 %v3154
    %3310 = vmatprep.mubr.f32.mxu0 %v3060
    %3311 = vmatmul.mubr.f32.gmra.mrb[0].mxu0 %v3059
    %v3312 = vpop.f32.mrb[0].mxu0
    %v3313 = vadd.f32 %v3191, %v3312
    %v3314 = vpop.f32.mrb[0].mxu0
    %3315 = vmatprep.mubr.f32.mxu0 %v3064
    %3316 = vmatmul.mubr.f32.gmra.mrb[0].mxu0 %v3063
    %v3317 = vpop.f32.mrb[0].mxu0
    %v3318 = vadd.f32 %v3191, %v3317
    %v3319 = vpop.f32.mrb[0].mxu0
    %3320 = vmatprep.mubr.f32.mxu0 %v3068
    %3321 = vmatmul.mubr.f32.gmra.mrb[0].mxu0 %v3067
    %v3322 = vpop.f32.mrb[0].mxu0
    %v3323 = vadd.f32 %v3191, %v3322
    %v3324 = vpop.f32.mrb[0].mxu0
    %3325 = vmatprep.mubr.f32.mxu0 %v3072
    %3326 = vmatmul.mubr.f32.gmra.mrb[0].mxu0 %v3071
    %v3327 = vpop.f32.mrb[0].mxu0
    %v3328 = vadd.f32 %v3191, %v3327
    %v3329 = vpop.f32.mrb[0].mxu0
    %3330 = vmatprep.mubr.f32.mxu0 %v3076
    %3331 = vmatmul.mubr.f32.gmra.mrb[0].mxu0 %v3075
    %v3332 = vpop.f32.mrb[0].mxu0
    %v3333 = vadd.f32 %v3191, %v3332
    %v3334 = vpop.f32.mrb[0].mxu0
    %3335 = vmatprep.mubr.f32.mxu0 %v3080
    %3336 = vmatmul.mubr.f32.gmra.mrb[0].mxu0 %v3079
    %v3337 = vpop.f32.mrb[0].mxu0
    %v3338 = vadd.f32 %v3191, %v3337
    %v3339 = vpop.f32.mrb[0].mxu0
    %3340 = vmatprep.mubr.f32.mxu0 %v3084
    %3341 = vmatmul.mubr.f32.gmra.mrb[0].mxu0 %v3083
    %v3342 = vpop.f32.mrb[0].mxu0
    %v3343 = vadd.f32 %v3191, %v3342
    %v3344 = vpop.f32.mrb[0].mxu0
    %3345 = vmatprep.mubr.f32.mxu0 %v3088
    %3346 = vmatmul.mubr.f32.gmra.mrb[0].mxu0 %v3087
    %v3347 = vpop.f32.mrb[0].mxu0
    %v3348 = vadd.f32 %v3191, %v3347
    %v3349 = vpop.f32.mrb[0].mxu0
    %3350 = vmatprep.mubr.f32.mxu0 %v3092
    %3351 = vmatmul.mubr.f32.gmra.mrb[0].mxu0 %v3091
    %v3352 = vpop.f32.mrb[0].mxu0
    %v3353 = vadd.f32 %v3191, %v3352
    %v3354 = vpop.f32.mrb[0].mxu0
    %3355 = vmatprep.mubr.f32.mxu0 %v3096
    %3356 = vmatmul.mubr.f32.gmra.mrb[0].mxu0 %v3095
    %v3357 = vpop.f32.mrb[0].mxu0
    %v3358 = vadd.f32 %v3191, %v3357
    %v3359 = vpop.f32.mrb[0].mxu0
    %3360 = vmatprep.mubr.f32.mxu0 %v3100
    %3361 = vmatmul.mubr.f32.gmra.mrb[0].mxu0 %v3099
    %v3362 = vpop.f32.mrb[0].mxu0
    %v3363 = vadd.f32 %v3191, %v3362
    %v3364 = vpop.f32.mrb[0].mxu0
    %3365 = vmatprep.mubr.f32.mxu0 %v3104
    %3366 = vmatmul.mubr.f32.gmra.mrb[0].mxu0 %v3103
    %v3367 = vpop.f32.mrb[0].mxu0
    %v3368 = vadd.f32 %v3191, %v3367
    %v3369 = vpop.f32.mrb[0].mxu0
    %3370 = vmatprep.mubr.f32.mxu0 %v3108
    %3371 = vmatmul.mubr.f32.gmra.mrb[0].mxu0 %v3107
    %v3372 = vpop.f32.mrb[0].mxu0
    %v3373 = vadd.f32 %v3191, %v3372
    %v3374 = vpop.f32.mrb[0].mxu0
    %3375 = vmatprep.mubr.f32.mxu0 %v3112
    %3376 = vmatmul.mubr.f32.gmra.mrb[0].mxu0 %v3111
    %v3377 = vpop.f32.mrb[0].mxu0
    %v3378 = vadd.f32 %v3191, %v3377
    %v3379 = vpop.f32.mrb[0].mxu0
    %3380 = vmatprep.mubr.f32.mxu0 %v3116
    %3381 = vmatmul.mubr.f32.gmra.mrb[0].mxu0 %v3115
    %v3382 = vpop.f32.mrb[0].mxu0
    %v3383 = vadd.f32 %v3191, %v3382
    %v3384 = vpop.f32.mrb[0].mxu0
    %3385 = vmatprep.mubr.f32.mxu0 %v3120
    %3386 = vmatmul.mubr.f32.gmra.mrb[0].mxu0 %v3119
    %v3387 = vpop.f32.mrb[0].mxu0
    %v3388 = vadd.f32 %v3191, %v3387
    %v3389 = vpop.f32.mrb[0].mxu0
    %3390 = vdwg.mxu0
    %3391 = vmatprep.subr.mxu0 0.0
    %3392 = vmatpush1.msra.mxu0 %v3155
    %3393 = vmatprep.subr.mxu0 0.0
    %3394 = vmatpush1.msra.mxu0 %v3156
    %3395 = vmatprep.subr.mxu0 0.0
    %3396 = vmatpush1.msra.mxu0 %v3157
    %3397 = vmatprep.subr.mxu0 0.0
    %3398 = vmatpush1.msra.mxu0 %v3158
    %3399 = vmatprep.subr.mxu0 0.0
    %3400 = vmatpush1.msra.mxu0 %v3159
    %3401 = vmatprep.subr.mxu0 0.0
    %3402 = vmatpush1.msra.mxu0 %v3160
    %3403 = vmatprep.subr.mxu0 0.0
    %3404 = vmatpush1.msra.mxu0 %v3161
    %3405 = vmatprep.subr.mxu0 0.0
    %3406 = vmatpush1.msra.mxu0 %v3162
    %3407 = vmatprep.subr.mxu0 0.0
    %3408 = vmatpush1.msra.mxu0 %v3163
    %3409 = vmatprep.subr.mxu0 0.0
    %3410 = vmatpush1.msra.mxu0 %v3164
    %3411 = vmatprep.subr.mxu0 0.0
    %3412 = vmatpush1.msra.mxu0 %v3165
    %3413 = vmatprep.subr.mxu0 0.0
    %3414 = vmatpush1.msra.mxu0 %v3166
    %3415 = vmatprep.subr.mxu0 0.0
    %3416 = vmatpush1.msra.mxu0 %v3167
    %3417 = vmatprep.subr.mxu0 0.0
    %3418 = vmatpush1.msra.mxu0 %v3168
    %3419 = vmatprep.subr.mxu0 0.0
    %3420 = vmatpush1.msra.mxu0 %v3169
    %3421 = vmatprep.subr.mxu0 0.0
    %3422 = vmatpush1.msra.mxu0 %v3170
    %3423 = vmatprep.subr.mxu0 0.0
    %3424 = vmatpush1.msra.mxu0 %v3171
    %3425 = vmatprep.subr.mxu0 0.0
    %3426 = vmatpush1.msra.mxu0 %v3172
    %3427 = vmatprep.subr.mxu0 0.0
    %3428 = vmatpush1.msra.mxu0 %v3173
    %3429 = vmatprep.subr.mxu0 0.0
    %3430 = vmatpush1.msra.mxu0 %v3174
    %3431 = vmatprep.subr.mxu0 0.0
    %3432 = vmatpush1.msra.mxu0 %v3175
    %3433 = vmatprep.subr.mxu0 0.0
    %3434 = vmatpush1.msra.mxu0 %v3176
    %3435 = vmatprep.subr.mxu0 0.0
    %3436 = vmatpush1.msra.mxu0 %v3177
    %3437 = vmatprep.subr.mxu0 0.0
    %3438 = vmatpush1.msra.mxu0 %v3178
    %3439 = vmatprep.subr.mxu0 0.0
    %3440 = vmatpush1.msra.mxu0 %v3179
    %3441 = vmatprep.subr.mxu0 0.0
    %3442 = vmatpush1.msra.mxu0 %v3180
    %3443 = vmatprep.subr.mxu0 0.0
    %3444 = vmatpush1.msra.mxu0 %v3181
    %3445 = vmatprep.subr.mxu0 0.0
    %3446 = vmatpush1.msra.mxu0 %v3182
    %3447 = vmatprep.subr.mxu0 0.0
    %3448 = vmatpush1.msra.mxu0 %v3183
    %3449 = vmatprep.subr.mxu0 0.0
    %3450 = vmatpush1.msra.mxu0 %v3184
    %3451 = vmatprep.subr.mxu0 0.0
    %3452 = vmatpush1.msra.mxu0 %v3244
    %3453 = vmatprep.subr.mxu0 0.0
    %3454 = vmatpush1.msra.mxu0 0.0
    %3455 = vmatprep.mubr.f32.mxu0 %v3195
    %3456 = vmatmul.mubr.f32.gmra.mrb[0].mxu0 %v3061
    %v3457 = vpop.f32.mrb[0].mxu0
    %v3458 = vadd.f32 %v3313, %v3457
    %v3459 = vpop.f32.mrb[0].mxu0
    %3460 = vmatprep.mubr.f32.mxu0 %v3198
    %3461 = vmatmul.mubr.f32.gmra.mrb[0].mxu0 %v3065
    %v3462 = vpop.f32.mrb[0].mxu0
    %v3463 = vadd.f32 %v3318, %v3462
    %v3464 = vpop.f32.mrb[0].mxu0
    %3465 = vmatprep.mubr.f32.mxu0 %v3201
    %3466 = vmatmul.mubr.f32.gmra.mrb[0].mxu0 %v3069
    %v3467 = vpop.f32.mrb[0].mxu0
    %v3468 = vadd.f32 %v3323, %v3467
    %v3469 = vpop.f32.mrb[0].mxu0
    %3470 = vmatprep.mubr.f32.mxu0 %v3204
    %3471 = vmatmul.mubr.f32.gmra.mrb[0].mxu0 %v3073
    %v3472 = vpop.f32.mrb[0].mxu0
    %v3473 = vadd.f32 %v3328, %v3472
    %v3474 = vpop.f32.mrb[0].mxu0
    %3475 = vmatprep.mubr.f32.mxu0 %v3207
    %3476 = vmatmul.mubr.f32.gmra.mrb[0].mxu0 %v3077
    %v3477 = vpop.f32.mrb[0].mxu0
    %v3478 = vadd.f32 %v3333, %v3477
    %v3479 = vpop.f32.mrb[0].mxu0
    %3480 = vmatprep.mubr.f32.mxu0 %v3210
    %3481 = vmatmul.mubr.f32.gmra.mrb[0].mxu0 %v3081
    %v3482 = vpop.f32.mrb[0].mxu0
    %v3483 = vadd.f32 %v3338, %v3482
    %v3484 = vpop.f32.mrb[0].mxu0
    %3485 = vmatprep.mubr.f32.mxu0 %v3213
    %3486 = vmatmul.mubr.f32.gmra.mrb[0].mxu0 %v3085
    %v3487 = vpop.f32.mrb[0].mxu0
    %v3488 = vadd.f32 %v3343, %v3487
    %v3489 = vpop.f32.mrb[0].mxu0
    %3490 = vmatprep.mubr.f32.mxu0 %v3216
    %3491 = vmatmul.mubr.f32.gmra.mrb[0].mxu0 %v3089
    %v3492 = vpop.f32.mrb[0].mxu0
    %v3493 = vadd.f32 %v3348, %v3492
    %v3494 = vpop.f32.mrb[0].mxu0
    %3495 = vmatprep.mubr.f32.mxu0 %v3219
    %3496 = vmatmul.mubr.f32.gmra.mrb[0].mxu0 %v3093
    %v3497 = vpop.f32.mrb[0].mxu0
    %v3498 = vadd.f32 %v3353, %v3497
    %v3499 = vpop.f32.mrb[0].mxu0
    %3500 = vmatprep.mubr.f32.mxu0 %v3222
    %3501 = vmatmul.mubr.f32.gmra.mrb[0].mxu0 %v3097
    %v3502 = vpop.f32.mrb[0].mxu0
    %v3503 = vadd.f32 %v3358, %v3502
    %v3504 = vpop.f32.mrb[0].mxu0
    %3505 = vmatprep.mubr.f32.mxu0 %v3225
    %3506 = vmatmul.mubr.f32.gmra.mrb[0].mxu0 %v3101
    %v3507 = vpop.f32.mrb[0].mxu0
    %v3508 = vadd.f32 %v3363, %v3507
    %v3509 = vpop.f32.mrb[0].mxu0
    %3510 = vmatprep.mubr.f32.mxu0 %v3228
    %3511 = vmatmul.mubr.f32.gmra.mrb[0].mxu0 %v3105
    %v3512 = vpop.f32.mrb[0].mxu0
    %v3513 = vadd.f32 %v3368, %v3512
    %v3514 = vpop.f32.mrb[0].mxu0
    %3515 = vmatprep.mubr.f32.mxu0 %v3231
    %3516 = vmatmul.mubr.f32.gmra.mrb[0].mxu0 %v3109
    %v3517 = vpop.f32.mrb[0].mxu0
    %v3518 = vadd.f32 %v3373, %v3517
    %v3519 = vpop.f32.mrb[0].mxu0
    %3520 = vmatprep.mubr.f32.mxu0 %v3234
    %3521 = vmatmul.mubr.f32.gmra.mrb[0].mxu0 %v3113
    %v3522 = vpop.f32.mrb[0].mxu0
    %v3523 = vadd.f32 %v3378, %v3522
    %v3524 = vpop.f32.mrb[0].mxu0
    %3525 = vmatprep.mubr.f32.mxu0 %v3237
    %3526 = vmatmul.mubr.f32.gmra.mrb[0].mxu0 %v3117
    %v3527 = vpop.f32.mrb[0].mxu0
    %v3528 = vadd.f32 %v3383, %v3527
    %v3529 = vpop.f32.mrb[0].mxu0
    %3530 = vmatprep.mubr.f32.mxu0 %v3240
    %3531 = vmatmul.mubr.f32.gmra.mrb[0].mxu0 %v3121
    %v3532 = vpop.f32.mrb[0].mxu0
    %v3533 = vadd.f32 %v3388, %v3532
    %v3534 = vpop.f32.mrb[0].mxu0
    %3535 = vdwg.mxu0
    %v3536 = vmax.f32 %v3458, 0.0
    %v3537 = vmax.f32 %v3463, 0.0
    %v3538 = vmax.f32 %v3468, 0.0
    %v3539 = vmax.f32 %v3473, 0.0
    %v3540 = vmax.f32 %v3478, 0.0
    %v3541 = vmax.f32 %v3483, 0.0
    %v3542 = vmax.f32 %v3488, 0.0
    %v3543 = vmax.f32 %v3493, 0.0
    %v3544 = vmax.f32 %v3498, 0.0
    %v3545 = vmax.f32 %v3503, 0.0
    %v3546 = vmax.f32 %v3508, 0.0
    %v3547 = vmax.f32 %v3513, 0.0
    %v3548 = vmax.f32 %v3518, 0.0
    %v3549 = vmax.f32 %v3523, 0.0
    %v3550 = vmax.f32 %v3528, 0.0
    %v3551 = vmax.f32 %v3533, 0.0
    %3552 = vst.msk [vmem:[#allocation4] sm:$0xff] %vm594, %v3536
    %3553 = vst.msk [vmem:[#allocation4 + $0x8] sm:$0xff] %vm594, %v3537
    %3554 = vst.msk [vmem:[#allocation4 + $0x10] sm:$0xff] %vm594, %v3538
    %3555 = vst.msk [vmem:[#allocation4 + $0x18] sm:$0xff] %vm594, %v3539
    %3556 = vst.msk [vmem:[#allocation4 + $0x20] sm:$0xff] %vm594, %v3540
    %3557 = vst.msk [vmem:[#allocation4 + $0x28] sm:$0xff] %vm594, %v3541
    %3558 = vst.msk [vmem:[#allocation4 + $0x30] sm:$0xff] %vm594, %v3542
    %3559 = vst.msk [vmem:[#allocation4 + $0x38] sm:$0xff] %vm594, %v3543
    %3560 = vst.msk [vmem:[#allocation4 + $0x40] sm:$0xff] %vm594, %v3544
    %3561 = vst.msk [vmem:[#allocation4 + $0x48] sm:$0xff] %vm594, %v3545
    %3562 = vst.msk [vmem:[#allocation4 + $0x50] sm:$0xff] %vm594, %v3546
    %3563 = vst.msk [vmem:[#allocation4 + $0x58] sm:$0xff] %vm594, %v3547
    %3564 = vst.msk [vmem:[#allocation4 + $0x60] sm:$0xff] %vm594, %v3548
    %3565 = vst.msk [vmem:[#allocation4 + $0x68] sm:$0xff] %vm594, %v3549
    %3566 = vst.msk [vmem:[#allocation4 + $0x70] sm:$0xff] %vm594, %v3550
    %3567 = vst.msk [vmem:[#allocation4 + $0x78] sm:$0xff] %vm594, %v3551
    // Predicated region
    $region22: #{model_forward.1} parent=1 // pred_check
      _
    $region23: #{model_forward.1} parent=1 // pred_check_branch
      %3569 = sbr.rel (0) target = $region25
    $region24: #{model_forward.1} parent=1 // pred_region
      %s3571 = ssub.s32 2048, 2048
      %3572 = vsyncadd [#allocation5], %s3571
      %s3573 = sshll.u32 [#allocation4], 4
      %s3574 = int_to_ptr.vmem [resolvable:$true] %s3573
      %3579 = dma.vmem_to_hbm [thread:$0]  %s3574, 2048, %s5, [#allocation5], 128, 128, 8
    $region25: #{model_forward.1} parent=1 // pred_fallthru
      _
    // Predicated region
    $region26: #{model_forward.1} parent=1 // pred_check
      _
    $region27: #{model_forward.1} parent=1 // pred_check_branch
      %3581 = sbr.rel (0) target = $region29
    $region28: #{model_forward.1} parent=1 // pred_region
      %3582 = dma.done [#allocation5], 2048
    $region29: #{model_forward.1} parent=1 // pred_fallthru
      _
    %3583 = vsyncpa [#allocation5], 1

</llo_original>
